<compile_context>
chip_gen: v5e
topology: v5e:2x2
jax: 0.10.0
libtpu: 0.0.40
codegen_flags: <defaults>
</compile_context>

<pallas_src>
import functools

import jax
import jax.numpy as jnp
from jax.experimental import pallas as pl
from jax.experimental.pallas import tpu as pltpu

# Original layer dims: encoder 784->128->64->32->16, decoder 16->32->64->128->784.
DIMS = [28 * 28, 128, 64, 32, 16, 32, 64, 128, 28 * 28]
NUM_LAYERS = len(DIMS) - 1           # 8 linear layers in the PyTorch module
RELU_LAYERS = (0, 1, 2, 4, 5, 6)     # ReLU after these; none after 3; Sigmoid after 7

PADDED_IO = 896                      # 7 * 128: lane-dense padding of 784


def _round_up(n, m):
    return ((n + m - 1) // m) * m


def _autoencoder_kernel(x_ref, *refs):
    """Fused MLP autoencoder forward (7 fused linear layers).

    refs = (w1, b1, ..., w7, b7, out_ref).  x / weights are bf16 (MXU
    operands), biases f32; accumulation stays f32 via preferred_element_type.
    ReLU after every fused layer except the last; sigmoid after the last.
    """
    out_ref = refs[-1]
    param_refs = refs[:-1]
    n_layers = len(param_refs) // 2

    h_mxu = x_ref[...]                       # bf16 activations fed to the MXU
    h = None
    for layer in range(n_layers):
        w = param_refs[2 * layer][...]       # bf16 (fan_in, fan_out)
        b = param_refs[2 * layer + 1][...]   # f32  (1, fan_out)
        h = jnp.dot(h_mxu, w, preferred_element_type=jnp.float32) + b
        if layer < n_layers - 1:
            h = jnp.maximum(h, 0.0)          # ReLU on the VPU
            h_mxu = h.astype(jnp.bfloat16)   # cast only right before next dot
        else:
            # sigmoid(h) == 0.5 * tanh(0.5 * h) + 0.5 -> ONE EUP transcendental
            # per element (vs exp + reciprocal); VALU stays free in the epilogue.
            h = 0.5 * jnp.tanh(0.5 * h) + 0.5
    out_ref[...] = h.astype(out_ref.dtype)   # bf16 writeback (halves HBM stores)


def init_params(key):
    """PyTorch-default-style init: U(-1/sqrt(fan_in), +1/sqrt(fan_in))."""
    params = []
    for layer in range(NUM_LAYERS):
        fan_in, fan_out = DIMS[layer], DIMS[layer + 1]
        key, kw, kb = jax.random.split(key, 3)
        bound = 1.0 / jnp.sqrt(fan_in)
        w = jax.random.uniform(kw, (fan_in, fan_out), jnp.float32, -bound, bound)
        b = jax.random.uniform(kb, (1, fan_out), jnp.float32, -bound, bound)
        params.append((w, b))
    return params


def _fold_and_pad_params(params):
    """Fold layers 3 & 4 into one 32->32 linear (f32), pad first/last layers to
    the lane-dense 896 width, cast weights to bf16 (biases stay f32)."""
    (w4, b4), (w5, b5) = params[3], params[4]
    w_fold = w4 @ w5                     # (32, 32)  exact fold: no activation between
    b_fold = b4 @ w5 + b5                # (1, 32)
    layers = list(params[:3]) + [(w_fold, b_fold)] + list(params[5:])

    flat = []
    n = len(layers)
    for i, (w, b) in enumerate(layers):
        if i == 0:
            # Zero-pad W1 rows so padded input features contribute nothing.
            w = jnp.pad(w, ((0, PADDED_IO - DIMS[0]), (0, 0)))
        if i == n - 1:
            # Zero-pad last W cols / b so the output slab is lane-dense.
            w = jnp.pad(w, ((0, 0), (0, PADDED_IO - DIMS[-1])))
            b = jnp.pad(b, ((0, 0), (0, PADDED_IO - DIMS[-1])))
        flat.append(w.astype(jnp.bfloat16))   # MXU operand
        flat.append(b.astype(jnp.float32))    # f32 bias add
    return flat


@functools.partial(jax.jit, static_argnames=("batch_tile", "return_padded"))
def autoencoder_forward(x, params, *, batch_tile=256, return_padded=False):
    B, D = x.shape
    assert D == DIMS[0]

    # Even number (>=2) of FULL grid steps: shards across both v7x TensorCores
    # via dimension_semantics=("parallel",); costs only one extra ~0.35us step
    # on single-TC v5e/v6e.  bt is a multiple of 8; batch is zero-padded to
    # bt * num_steps so there is never a partial edge block.
    num_steps = max(2, -(-B // max(int(batch_tile), 8)))
    num_steps += num_steps % 2
    bt = _round_up(-(-B // num_steps), 8)
    b_pad = bt * num_steps

    # Single pad+cast producer (batch pad + 784->896 lane pad + bf16 cast).
    # allow_input_fusion below lets XLA fuse it into the pallas_call input
    # instead of materializing x_p as a separate HBM pass.
    x_p = jnp.pad(x, ((0, b_pad - B), (0, PADDED_IO - D))).astype(jnp.bfloat16)

    flat_params = _fold_and_pad_params(params)

    in_specs = [pl.BlockSpec((bt, PADDED_IO), lambda i: (i, 0))]
    for p in flat_params:
        # Constant index_map: block never changes across the grid, so Pallas
        # keeps the small weights/biases resident in VMEM (no per-step DMA).
        in_specs.append(pl.BlockSpec(p.shape, lambda i: (0, 0)))
    out_spec = pl.BlockSpec((bt, PADDED_IO), lambda i: (i, 0))

    # VMEM budget: double-buffered bf16 in/out tiles + resident params + f32
    # intermediates + slack; clamp to [32 MiB, 64 MiB] (safe on v5e/v6e/v7x).
    act_bytes = bt * PADDED_IO * 2
    param_bytes = sum(int(p.size) * p.dtype.itemsize for p in flat_params)
    vmem_estimate = 4 * act_bytes + 2 * param_bytes + 4 * bt * PADDED_IO * 4 + (4 << 20)
    vmem_limit_bytes = int(min(64 << 20, max(32 << 20, vmem_estimate)))

    out_padded = pl.pallas_call(
        _autoencoder_kernel,
        out_shape=jax.ShapeDtypeStruct((b_pad, PADDED_IO), jnp.bfloat16),
        grid_spec=pltpu.PrefetchScalarGridSpec(
            num_scalar_prefetch=0,
            grid=(num_steps,),
            in_specs=in_specs,
            out_specs=out_spec,
        ),
        compiler_params=pltpu.CompilerParams(
            dimension_semantics=("parallel",),                 # batch axis -> both TCs (v7x)
            allow_input_fusion=[True] + [False] * len(flat_params),
            vmem_limit_bytes=vmem_limit_bytes,
        ),
    )(x_p, *flat_params)

    if return_padded:
        # Fast path: caller fuses the [:B, :784] slice into its own consumer
        # (columns 784..895 and rows >= B are padding -> must be ignored).
        return out_padded
    return out_padded[:B, : DIMS[-1]]


def autoencoder_ref(x, params):
    """Pure-JAX f32 reference (exact PyTorch-module semantics)."""
    h = x
    for layer, (w, b) in enumerate(params):
        h = h @ w + b
        if layer in RELU_LAYERS:
            h = jnp.maximum(h, 0.0)
        elif layer == NUM_LAYERS - 1:
            h = jax.nn.sigmoid(h)
    return h


if __name__ == "__main__":
    key = jax.random.PRNGKey(0)
    key, kp, kx = jax.random.split(key, 3)
    params = init_params(kp)

    # Case 1: divisible batch.  B=256 with batch_tile=128 -> 2 full grid steps.
    B = 256
    x = jax.random.uniform(kx, (B, 28 * 28), jnp.float32)
    out = jax.block_until_ready(autoencoder_forward(x, params, batch_tile=128))
    ref = autoencoder_ref(x, params)
    assert out.shape == (B, 28 * 28), out.shape
    err = float(jnp.max(jnp.abs(out.astype(jnp.float32) - ref)))
    # bf16 matmul operands + bf16 output => loosened tolerance vs f32 reference.
    assert err < 3e-2, err

    # Case 2: non-divisible batch (wrapper pads rows so blocks stay full).
    B2 = 200
    x2 = jax.random.uniform(jax.random.PRNGKey(1), (B2, 28 * 28), jnp.float32)
    out2 = jax.block_until_ready(autoencoder_forward(x2, params, batch_tile=128))
    ref2 = autoencoder_ref(x2, params)
    assert out2.shape == (B2, 28 * 28), out2.shape
    err2 = float(jnp.max(jnp.abs(out2.astype(jnp.float32) - ref2)))
    assert err2 < 3e-2, err2

    print("KERNEL_OK")
</pallas_src>

<mosaic_0001>
module attributes {stable_mosaic.version = 11 : i64} {
  func.func @_autoencoder_kernel(%arg0: i32, %arg1: memref<128x896xbf16, #tpu.memory_space<vmem>>, %arg2: memref<896x128xbf16, #tpu.memory_space<vmem>>, %arg3: memref<1x128xf32, #tpu.memory_space<vmem>>, %arg4: memref<128x64xbf16, #tpu.memory_space<vmem>>, %arg5: memref<1x64xf32, #tpu.memory_space<vmem>>, %arg6: memref<64x32xbf16, #tpu.memory_space<vmem>>, %arg7: memref<1x32xf32, #tpu.memory_space<vmem>>, %arg8: memref<32x32xbf16, #tpu.memory_space<vmem>>, %arg9: memref<1x32xf32, #tpu.memory_space<vmem>>, %arg10: memref<32x64xbf16, #tpu.memory_space<vmem>>, %arg11: memref<1x64xf32, #tpu.memory_space<vmem>>, %arg12: memref<64x128xbf16, #tpu.memory_space<vmem>>, %arg13: memref<1x128xf32, #tpu.memory_space<vmem>>, %arg14: memref<128x896xbf16, #tpu.memory_space<vmem>>, %arg15: memref<1x896xf32, #tpu.memory_space<vmem>>, %arg16: memref<128x896xbf16, #tpu.memory_space<vmem>>) attributes {dimension_semantics = [#tpu.dimension_semantics<parallel>], iteration_bounds = array<i64: 2>, scalar_prefetch = 0 : i64, scratch_operands = 0 : i64, tpu.core_type = #tpu.core_type<tc>, window_params = [{transform_indices = @transform_0, window_bounds = array<i64: 128, 896>}, {pipeline_mode = #tpu.pipeline_mode<synchronous>, transform_indices = @transform_1, window_bounds = array<i64: 896, 128>}, {pipeline_mode = #tpu.pipeline_mode<synchronous>, transform_indices = @transform_2, window_bounds = array<i64: 1, 128>}, {pipeline_mode = #tpu.pipeline_mode<synchronous>, transform_indices = @transform_3, window_bounds = array<i64: 128, 64>}, {pipeline_mode = #tpu.pipeline_mode<synchronous>, transform_indices = @transform_4, window_bounds = array<i64: 1, 64>}, {pipeline_mode = #tpu.pipeline_mode<synchronous>, transform_indices = @transform_5, window_bounds = array<i64: 64, 32>}, {pipeline_mode = #tpu.pipeline_mode<synchronous>, transform_indices = @transform_6, window_bounds = array<i64: 1, 32>}, {pipeline_mode = #tpu.pipeline_mode<synchronous>, transform_indices = @transform_7, window_bounds = array<i64: 32, 32>}, {pipeline_mode = #tpu.pipeline_mode<synchronous>, transform_indices = @transform_8, window_bounds = array<i64: 1, 32>}, {pipeline_mode = #tpu.pipeline_mode<synchronous>, transform_indices = @transform_9, window_bounds = array<i64: 32, 64>}, {pipeline_mode = #tpu.pipeline_mode<synchronous>, transform_indices = @transform_10, window_bounds = array<i64: 1, 64>}, {pipeline_mode = #tpu.pipeline_mode<synchronous>, transform_indices = @transform_11, window_bounds = array<i64: 64, 128>}, {pipeline_mode = #tpu.pipeline_mode<synchronous>, transform_indices = @transform_12, window_bounds = array<i64: 1, 128>}, {pipeline_mode = #tpu.pipeline_mode<synchronous>, transform_indices = @transform_13, window_bounds = array<i64: 128, 896>}, {pipeline_mode = #tpu.pipeline_mode<synchronous>, transform_indices = @transform_14, window_bounds = array<i64: 1, 896>}, {transform_indices = @transform_15, window_bounds = array<i64: 128, 896>}]} {
    %c0 = arith.constant 0 : index
    %c0_0 = arith.constant 0 : index
    %0 = vector.load %arg1[%c0, %c0_0] : memref<128x896xbf16, #tpu.memory_space<vmem>>, vector<128x896xbf16>
    %c0_1 = arith.constant 0 : index
    %c0_2 = arith.constant 0 : index
    %1 = vector.load %arg2[%c0_1, %c0_2] : memref<896x128xbf16, #tpu.memory_space<vmem>>, vector<896x128xbf16>
    %c0_3 = arith.constant 0 : index
    %c0_4 = arith.constant 0 : index
    %2 = vector.load %arg3[%c0_3, %c0_4] : memref<1x128xf32, #tpu.memory_space<vmem>>, vector<1x128xf32>
    %cst = arith.constant dense<0.000000e+00> : vector<128x128xf32>
    %3 = tpu.matmul %0, %1, %cst {dimension_numbers = #tpu.dot_dimension_numbers<[1], [0], [0], [1], [0, 0, 1, 1], [], []>} : vector<128x896xbf16>, vector<896x128xbf16>, vector<128x128xf32> -> vector<128x128xf32>
    %4 = vector.broadcast %2 : vector<1x128xf32> to vector<128x128xf32>
    %5 = arith.addf %3, %4 : vector<128x128xf32>
    %cst_5 = arith.constant 0.000000e+00 : f32
    %6 = vector.broadcast %cst_5 : f32 to vector<128x128xf32>
    %7 = arith.maximumf %5, %6 : vector<128x128xf32>
    %8 = arith.truncf %7 : vector<128x128xf32> to vector<128x128xbf16>
    %c0_6 = arith.constant 0 : index
    %c0_7 = arith.constant 0 : index
    %9 = vector.load %arg4[%c0_6, %c0_7] : memref<128x64xbf16, #tpu.memory_space<vmem>>, vector<128x64xbf16>
    %c0_8 = arith.constant 0 : index
    %c0_9 = arith.constant 0 : index
    %10 = vector.load %arg5[%c0_8, %c0_9] : memref<1x64xf32, #tpu.memory_space<vmem>>, vector<1x64xf32>
    %cst_10 = arith.constant dense<0.000000e+00> : vector<128x64xf32>
    %11 = tpu.matmul %8, %9, %cst_10 {dimension_numbers = #tpu.dot_dimension_numbers<[1], [0], [0], [1], [0, 0, 1, 1], [], []>} : vector<128x128xbf16>, vector<128x64xbf16>, vector<128x64xf32> -> vector<128x64xf32>
    %12 = vector.broadcast %10 : vector<1x64xf32> to vector<128x64xf32>
    %13 = arith.addf %11, %12 : vector<128x64xf32>
    %cst_11 = arith.constant 0.000000e+00 : f32
    %14 = vector.broadcast %cst_11 : f32 to vector<128x64xf32>
    %15 = arith.maximumf %13, %14 : vector<128x64xf32>
    %16 = arith.truncf %15 : vector<128x64xf32> to vector<128x64xbf16>
    %c0_12 = arith.constant 0 : index
    %c0_13 = arith.constant 0 : index
    %17 = vector.load %arg6[%c0_12, %c0_13] : memref<64x32xbf16, #tpu.memory_space<vmem>>, vector<64x32xbf16>
    %c0_14 = arith.constant 0 : index
    %c0_15 = arith.constant 0 : index
    %18 = vector.load %arg7[%c0_14, %c0_15] : memref<1x32xf32, #tpu.memory_space<vmem>>, vector<1x32xf32>
    %cst_16 = arith.constant dense<0.000000e+00> : vector<128x32xf32>
    %19 = tpu.matmul %16, %17, %cst_16 {dimension_numbers = #tpu.dot_dimension_numbers<[1], [0], [0], [1], [0, 0, 1, 1], [], []>} : vector<128x64xbf16>, vector<64x32xbf16>, vector<128x32xf32> -> vector<128x32xf32>
    %20 = vector.broadcast %18 : vector<1x32xf32> to vector<128x32xf32>
    %21 = arith.addf %19, %20 : vector<128x32xf32>
    %cst_17 = arith.constant 0.000000e+00 : f32
    %22 = vector.broadcast %cst_17 : f32 to vector<128x32xf32>
    %23 = arith.maximumf %21, %22 : vector<128x32xf32>
    %24 = arith.truncf %23 : vector<128x32xf32> to vector<128x32xbf16>
    %c0_18 = arith.constant 0 : index
    %c0_19 = arith.constant 0 : index
    %25 = vector.load %arg8[%c0_18, %c0_19] : memref<32x32xbf16, #tpu.memory_space<vmem>>, vector<32x32xbf16>
    %c0_20 = arith.constant 0 : index
    %c0_21 = arith.constant 0 : index
    %26 = vector.load %arg9[%c0_20, %c0_21] : memref<1x32xf32, #tpu.memory_space<vmem>>, vector<1x32xf32>
    %cst_22 = arith.constant dense<0.000000e+00> : vector<128x32xf32>
    %27 = tpu.matmul %24, %25, %cst_22 {dimension_numbers = #tpu.dot_dimension_numbers<[1], [0], [0], [1], [0, 0, 1, 1], [], []>} : vector<128x32xbf16>, vector<32x32xbf16>, vector<128x32xf32> -> vector<128x32xf32>
    %28 = vector.broadcast %26 : vector<1x32xf32> to vector<128x32xf32>
    %29 = arith.addf %27, %28 : vector<128x32xf32>
    %cst_23 = arith.constant 0.000000e+00 : f32
    %30 = vector.broadcast %cst_23 : f32 to vector<128x32xf32>
    %31 = arith.maximumf %29, %30 : vector<128x32xf32>
    %32 = arith.truncf %31 : vector<128x32xf32> to vector<128x32xbf16>
    %c0_24 = arith.constant 0 : index
    %c0_25 = arith.constant 0 : index
    %33 = vector.load %arg10[%c0_24, %c0_25] : memref<32x64xbf16, #tpu.memory_space<vmem>>, vector<32x64xbf16>
    %c0_26 = arith.constant 0 : index
    %c0_27 = arith.constant 0 : index
    %34 = vector.load %arg11[%c0_26, %c0_27] : memref<1x64xf32, #tpu.memory_space<vmem>>, vector<1x64xf32>
    %cst_28 = arith.constant dense<0.000000e+00> : vector<128x64xf32>
    %35 = tpu.matmul %32, %33, %cst_28 {dimension_numbers = #tpu.dot_dimension_numbers<[1], [0], [0], [1], [0, 0, 1, 1], [], []>} : vector<128x32xbf16>, vector<32x64xbf16>, vector<128x64xf32> -> vector<128x64xf32>
    %36 = vector.broadcast %34 : vector<1x64xf32> to vector<128x64xf32>
    %37 = arith.addf %35, %36 : vector<128x64xf32>
    %cst_29 = arith.constant 0.000000e+00 : f32
    %38 = vector.broadcast %cst_29 : f32 to vector<128x64xf32>
    %39 = arith.maximumf %37, %38 : vector<128x64xf32>
    %40 = arith.truncf %39 : vector<128x64xf32> to vector<128x64xbf16>
    %c0_30 = arith.constant 0 : index
    %c0_31 = arith.constant 0 : index
    %41 = vector.load %arg12[%c0_30, %c0_31] : memref<64x128xbf16, #tpu.memory_space<vmem>>, vector<64x128xbf16>
    %c0_32 = arith.constant 0 : index
    %c0_33 = arith.constant 0 : index
    %42 = vector.load %arg13[%c0_32, %c0_33] : memref<1x128xf32, #tpu.memory_space<vmem>>, vector<1x128xf32>
    %cst_34 = arith.constant dense<0.000000e+00> : vector<128x128xf32>
    %43 = tpu.matmul %40, %41, %cst_34 {dimension_numbers = #tpu.dot_dimension_numbers<[1], [0], [0], [1], [0, 0, 1, 1], [], []>} : vector<128x64xbf16>, vector<64x128xbf16>, vector<128x128xf32> -> vector<128x128xf32>
    %44 = vector.broadcast %42 : vector<1x128xf32> to vector<128x128xf32>
    %45 = arith.addf %43, %44 : vector<128x128xf32>
    %cst_35 = arith.constant 0.000000e+00 : f32
    %46 = vector.broadcast %cst_35 : f32 to vector<128x128xf32>
    %47 = arith.maximumf %45, %46 : vector<128x128xf32>
    %48 = arith.truncf %47 : vector<128x128xf32> to vector<128x128xbf16>
    %c0_36 = arith.constant 0 : index
    %c0_37 = arith.constant 0 : index
    %49 = vector.load %arg14[%c0_36, %c0_37] : memref<128x896xbf16, #tpu.memory_space<vmem>>, vector<128x896xbf16>
    %c0_38 = arith.constant 0 : index
    %c0_39 = arith.constant 0 : index
    %50 = vector.load %arg15[%c0_38, %c0_39] : memref<1x896xf32, #tpu.memory_space<vmem>>, vector<1x896xf32>
    %cst_40 = arith.constant dense<0.000000e+00> : vector<128x896xf32>
    %51 = tpu.matmul %48, %49, %cst_40 {dimension_numbers = #tpu.dot_dimension_numbers<[1], [0], [0], [1], [0, 0, 1, 1], [], []>} : vector<128x128xbf16>, vector<128x896xbf16>, vector<128x896xf32> -> vector<128x896xf32>
    %52 = vector.broadcast %50 : vector<1x896xf32> to vector<128x896xf32>
    %53 = arith.addf %51, %52 : vector<128x896xf32>
    %cst_41 = arith.constant 5.000000e-01 : f32
    %54 = vector.broadcast %cst_41 : f32 to vector<128x896xf32>
    %55 = arith.mulf %54, %53 : vector<128x896xf32>
    %56 = math.tanh %55 : vector<128x896xf32>
    %cst_42 = arith.constant 5.000000e-01 : f32
    %57 = vector.broadcast %cst_42 : f32 to vector<128x896xf32>
    %58 = arith.mulf %57, %56 : vector<128x896xf32>
    %cst_43 = arith.constant 5.000000e-01 : f32
    %59 = vector.broadcast %cst_43 : f32 to vector<128x896xf32>
    %60 = arith.addf %58, %59 : vector<128x896xf32>
    %61 = arith.truncf %60 : vector<128x896xf32> to vector<128x896xbf16>
    %c0_44 = arith.constant 0 : index
    %c0_45 = arith.constant 0 : index
    %62 = vector.load %arg16[%c0_44, %c0_45] : memref<128x896xbf16, #tpu.memory_space<vmem>>, vector<128x896xbf16>
    tpu.vector_store %arg16[%c0_44, %c0_45], %61 {strides = array<i32>} : memref<128x896xbf16, #tpu.memory_space<vmem>>, vector<128x896xbf16>,
    return
  }
  func.func @transform_0(%arg0: i32) -> (i32, i32) {
    %c0_i32 = arith.constant 0 : i32
    %c0_i32_0 = arith.constant 0 : i32
    return %arg0, %c0_i32 : i32, i32
  }
  func.func @transform_1(%arg0: i32) -> (i32, i32) {
    %c0_i32 = arith.constant 0 : i32
    %c0_i32_0 = arith.constant 0 : i32
    %c0_i32_1 = arith.constant 0 : i32
    return %c0_i32, %c0_i32_0 : i32, i32
  }
  func.func @transform_2(%arg0: i32) -> (i32, i32) {
    %c0_i32 = arith.constant 0 : i32
    %c0_i32_0 = arith.constant 0 : i32
    %c0_i32_1 = arith.constant 0 : i32
    return %c0_i32, %c0_i32_0 : i32, i32
  }
  func.func @transform_3(%arg0: i32) -> (i32, i32) {
    %c0_i32 = arith.constant 0 : i32
    %c0_i32_0 = arith.constant 0 : i32
    %c0_i32_1 = arith.constant 0 : i32
    return %c0_i32, %c0_i32_0 : i32, i32
  }
  func.func @transform_4(%arg0: i32) -> (i32, i32) {
    %c0_i32 = arith.constant 0 : i32
    %c0_i32_0 = arith.constant 0 : i32
    %c0_i32_1 = arith.constant 0 : i32
    return %c0_i32, %c0_i32_0 : i32, i32
  }
  func.func @transform_5(%arg0: i32) -> (i32, i32) {
    %c0_i32 = arith.constant 0 : i32
    %c0_i32_0 = arith.constant 0 : i32
    %c0_i32_1 = arith.constant 0 : i32
    return %c0_i32, %c0_i32_0 : i32, i32
  }
  func.func @transform_6(%arg0: i32) -> (i32, i32) {
    %c0_i32 = arith.constant 0 : i32
    %c0_i32_0 = arith.constant 0 : i32
    %c0_i32_1 = arith.constant 0 : i32
    return %c0_i32, %c0_i32_0 : i32, i32
  }
  func.func @transform_7(%arg0: i32) -> (i32, i32) {
    %c0_i32 = arith.constant 0 : i32
    %c0_i32_0 = arith.constant 0 : i32
    %c0_i32_1 = arith.constant 0 : i32
    return %c0_i32, %c0_i32_0 : i32, i32
  }
  func.func @transform_8(%arg0: i32) -> (i32, i32) {
    %c0_i32 = arith.constant 0 : i32
    %c0_i32_0 = arith.constant 0 : i32
    %c0_i32_1 = arith.constant 0 : i32
    return %c0_i32, %c0_i32_0 : i32, i32
  }
  func.func @transform_9(%arg0: i32) -> (i32, i32) {
    %c0_i32 = arith.constant 0 : i32
    %c0_i32_0 = arith.constant 0 : i32
    %c0_i32_1 = arith.constant 0 : i32
    return %c0_i32, %c0_i32_0 : i32, i32
  }
  func.func @transform_10(%arg0: i32) -> (i32, i32) {
    %c0_i32 = arith.constant 0 : i32
    %c0_i32_0 = arith.constant 0 : i32
    %c0_i32_1 = arith.constant 0 : i32
    return %c0_i32, %c0_i32_0 : i32, i32
  }
  func.func @transform_11(%arg0: i32) -> (i32, i32) {
    %c0_i32 = arith.constant 0 : i32
    %c0_i32_0 = arith.constant 0 : i32
    %c0_i32_1 = arith.constant 0 : i32
    return %c0_i32, %c0_i32_0 : i32, i32
  }
  func.func @transform_12(%arg0: i32) -> (i32, i32) {
    %c0_i32 = arith.constant 0 : i32
    %c0_i32_0 = arith.constant 0 : i32
    %c0_i32_1 = arith.constant 0 : i32
    return %c0_i32, %c0_i32_0 : i32, i32
  }
  func.func @transform_13(%arg0: i32) -> (i32, i32) {
    %c0_i32 = arith.constant 0 : i32
    %c0_i32_0 = arith.constant 0 : i32
    %c0_i32_1 = arith.constant 0 : i32
    return %c0_i32, %c0_i32_0 : i32, i32
  }
  func.func @transform_14(%arg0: i32) -> (i32, i32) {
    %c0_i32 = arith.constant 0 : i32
    %c0_i32_0 = arith.constant 0 : i32
    %c0_i32_1 = arith.constant 0 : i32
    return %c0_i32, %c0_i32_0 : i32, i32
  }
  func.func @transform_15(%arg0: i32) -> (i32, i32) {
    %c0_i32 = arith.constant 0 : i32
    %c0_i32_0 = arith.constant 0 : i32
    return %arg0, %c0_i32 : i32, i32
  }
}

</mosaic_0001>

<llo_original>
// kernel: autoencoder_forward.2
$region0: #{autoencoder_forward.2}
  #allocation0 [shape = 'u32[]', space=smem, size = 0x4, offset = 0x4, fixed_abs, tag = 'smem constant byte address 0x4 - core index']
  #allocation1 [shape = 'u32[72,128]{1,0:T(1,128)}', space=vmem, size = 0x9000, scoped, tag = 'internal scratch']
  #allocation2 [shape = 'u32[2048]{0}', space=vmem, size = 0x2000, scoped, tag = 'scoped memory for autoencoder_forward.2']
  #allocation3 [shape = 'u32[2048]{0}', space=vmem, size = 0x2000, scoped, tag = 'scoped memory for autoencoder_forward.2']
  #allocation4 [shape = 'u32[2048]{0}', space=vmem, size = 0x2000, scoped, tag = 'scoped memory for autoencoder_forward.2']
  #allocation5 [shape = 'u32[2048]{0}', space=vmem, size = 0x2000, scoped, tag = 'scoped memory for autoencoder_forward.2']
  #allocation6 [shape = 'u32[2048]{0}', space=vmem, size = 0x2000, scoped, tag = 'scoped memory for autoencoder_forward.2']
  %s0 = inlined_call_operand.vmem [shape: bf16[896,128], index: 0, kind: input, shape index: {}]
  %s1 = inlined_call_operand.vmem [shape: f32[1,128], index: 1, kind: input, shape index: {}]
  %s2 = inlined_call_operand.vmem [shape: bf16[128,64], index: 2, kind: input, shape index: {}]
  %s3 = inlined_call_operand.vmem [shape: f32[1,64], index: 3, kind: input, shape index: {}]
  %s4 = inlined_call_operand.vmem [shape: bf16[64,32], index: 4, kind: input, shape index: {}]
  %s5 = inlined_call_operand.vmem [shape: f32[1,32], index: 5, kind: input, shape index: {}]
  %s6 = inlined_call_operand.vmem [shape: bf16[32,32], index: 6, kind: input, shape index: {}]
  %s7 = inlined_call_operand.vmem [shape: f32[1,32], index: 7, kind: input, shape index: {}]
  %s8 = inlined_call_operand.vmem [shape: bf16[32,64], index: 8, kind: input, shape index: {}]
  %s9 = inlined_call_operand.vmem [shape: f32[1,64], index: 9, kind: input, shape index: {}]
  %s10 = inlined_call_operand.vmem [shape: bf16[64,128], index: 10, kind: input, shape index: {}]
  %s11 = inlined_call_operand.vmem [shape: f32[1,128], index: 11, kind: input, shape index: {}]
  %s12 = inlined_call_operand.vmem [shape: bf16[128,896], index: 12, kind: input, shape index: {}]
  %s13 = inlined_call_operand.vmem [shape: f32[1,896], index: 13, kind: input, shape index: {}]
  %s14 = inlined_call_operand.vmem [shape: bf16[256,784], index: 14, kind: input, shape index: {}]
  %s15 = inlined_call_operand.<no memory space> [shape: bf16[], index: 15, kind: input, shape index: {}]
  %s16 = inlined_call_operand.vmem [shape: bf16[256,896], index: 16, kind: output, shape index: {}]
  %s17 = sld [smem:[#allocation0]]
  $region93: #{autoencoder_forward.2} parent=0
    _
  %s19 = ssub.s32 1, %s17
  %s20 = scalar_select 0, %s19, %s17
  %v21 = vstv %s15
  %v22 = vunpack.i.l.bf16 %v21
  %v24 = vunpack.i.h.bf16 %v21
  loop: start=0, step=1, limit=4
  $region2: #{autoencoder_forward.2} parent=0 // loop_pre_header
    _
  $region3: #{autoencoder_forward.2} parent=0 // loop_header
    %s27 = sphi 0, %s31
    %p28 = scmp.ge.s32.totalorder %s27, 4
    %s37 = sphi 0, %s39
    %s40 = sphi 0, %s37
    %s41 = sphi 0, %s40
    %s57 = sphi 0, %s41
    %s61 = sphi 0, %s61
    %s63 = sphi 0, %s61
    %s64 = sphi 0, %s63
    %s78 = sphi 0, %s64
    %s82 = sphi 0, %s82
    %s84 = sphi 0, %s82
    %s85 = sphi 0, %s84
    %s99 = sphi 0, %s85
    %s103 = sphi 0, %s103
    %s105 = sphi 0, %s103
    %s106 = sphi 0, %s105
    %s120 = sphi 0, %s106
    %s124 = sphi 0, %s124
    %s126 = sphi 0, %s124
    %s127 = sphi 0, %s126
    %s141 = sphi 0, %s127
    %s145 = sphi 0, %s145
    %s147 = sphi 0, %s145
    %s148 = sphi 0, %s147
    %s162 = sphi 0, %s148
    %s166 = sphi 0, %s166
    %s168 = sphi 0, %s166
    %s169 = sphi 0, %s168
    %s183 = sphi 0, %s169
    %s187 = sphi 0, %s187
    %s189 = sphi 0, %s187
    %s190 = sphi 0, %s189
    %s204 = sphi 0, %s190
    %s208 = sphi 0, %s208
    %s210 = sphi 0, %s208
    %s211 = sphi 0, %s210
    %s225 = sphi 0, %s211
    %s229 = sphi 0, %s229
    %s231 = sphi 0, %s229
    %s232 = sphi 0, %s231
    %s246 = sphi 0, %s232
    %s250 = sphi 0, %s250
    %s252 = sphi 0, %s250
    %s253 = sphi 0, %s252
    %s267 = sphi 0, %s253
    %s271 = sphi 0, %s271
    %s273 = sphi 0, %s271
    %s274 = sphi 0, %s273
    %s288 = sphi 0, %s274
    %s292 = sphi 0, %s292
    %s294 = sphi 0, %s292
    %s295 = sphi 0, %s294
    %s309 = sphi 0, %s295
    %s313 = sphi 0, %s313
    %s315 = sphi 0, %s313
    %s316 = sphi 0, %s315
    %s330 = sphi 0, %s316
    %s334 = sphi 0, %s334
    %s336 = sphi 0, %s334
    %s337 = sphi 0, %s336
    %s351 = sphi 0, %s337
    %s357 = sphi 0, %s359
    %s360 = sphi 0, %s357
    %s361 = sphi 0, %s360
    %s377 = sphi 0, %s361
  $region4: #{autoencoder_forward.2} parent=0 // loop_header_branch
    %30 = sbr.rel (%p28) target = $region8
  $region5: #{autoencoder_forward.2} parent=0 // loop_body
    %s32 = ssub.s32 %s27, 1
    %s33 = ssub.s32 %s27, 2
    %s34 = sadd.s32 %s27, 1
    %s35 = ssub.s32 %s27, %s34
    %p36 = scmp.eq.s32.totalorder %s35, 0
    %s38 = sadd.s32 %s37, 1
    %s39 = scalar_select %p36, %s37, %s38
    %p42 = pneg %p36
    %p43 = scmp.eq.s32.totalorder %s27, 1
    %p44 = por %p42, %p43
    %p45 = scmp.ne.s32.totalorder %s37, %s40
    %p46 = scmp.eq.s32.totalorder %s27, 0
    %p47 = por %p45, %p46
    %p48 = scmp.ne.s32.totalorder %s37, %s40
    %p49 = scmp.eq.s32.totalorder %s32, 1
    %p50 = por %p48, %p49
    %p51 = scmp.ne.s32.totalorder %s40, %s41
    %p52 = scmp.eq.s32.totalorder %s32, 0
    %p53 = por %p51, %p52
    %p54 = scmp.ne.s32.totalorder %s40, %s41
    %p55 = scmp.eq.s32.totalorder %s33, 1
    %p56 = por %p54, %p55
    %p58 = scmp.ne.s32.totalorder %s41, %s57
    %p59 = scmp.eq.s32.totalorder %s33, 0
    %p60 = por %p58, %p59
    %s62 = sadd.s32 %s61, 1
    %p65 = scmp.eq.s32.totalorder %s27, 1
    %p66 = scmp.ne.s32.totalorder %s61, %s63
    %p67 = scmp.eq.s32.totalorder %s27, 0
    %p68 = por %p66, %p67
    %p69 = scmp.ne.s32.totalorder %s61, %s63
    %p70 = scmp.eq.s32.totalorder %s32, 1
    %p71 = por %p69, %p70
    %p72 = scmp.ne.s32.totalorder %s63, %s64
    %p73 = scmp.eq.s32.totalorder %s32, 0
    %p74 = por %p72, %p73
    %p75 = scmp.ne.s32.totalorder %s63, %s64
    %p76 = scmp.eq.s32.totalorder %s33, 1
    %p77 = por %p75, %p76
    %p79 = scmp.ne.s32.totalorder %s64, %s78
    %p80 = scmp.eq.s32.totalorder %s33, 0
    %p81 = por %p79, %p80
    %s83 = sadd.s32 %s82, 1
    %p86 = scmp.eq.s32.totalorder %s27, 1
    %p87 = scmp.ne.s32.totalorder %s82, %s84
    %p88 = scmp.eq.s32.totalorder %s27, 0
    %p89 = por %p87, %p88
    %p90 = scmp.ne.s32.totalorder %s82, %s84
    %p91 = scmp.eq.s32.totalorder %s32, 1
    %p92 = por %p90, %p91
    %p93 = scmp.ne.s32.totalorder %s84, %s85
    %p94 = scmp.eq.s32.totalorder %s32, 0
    %p95 = por %p93, %p94
    %p96 = scmp.ne.s32.totalorder %s84, %s85
    %p97 = scmp.eq.s32.totalorder %s33, 1
    %p98 = por %p96, %p97
    %p100 = scmp.ne.s32.totalorder %s85, %s99
    %p101 = scmp.eq.s32.totalorder %s33, 0
    %p102 = por %p100, %p101
    %s104 = sadd.s32 %s103, 1
    %p107 = scmp.eq.s32.totalorder %s27, 1
    %p108 = scmp.ne.s32.totalorder %s103, %s105
    %p109 = scmp.eq.s32.totalorder %s27, 0
    %p110 = por %p108, %p109
    %p111 = scmp.ne.s32.totalorder %s103, %s105
    %p112 = scmp.eq.s32.totalorder %s32, 1
    %p113 = por %p111, %p112
    %p114 = scmp.ne.s32.totalorder %s105, %s106
    %p115 = scmp.eq.s32.totalorder %s32, 0
    %p116 = por %p114, %p115
    %p117 = scmp.ne.s32.totalorder %s105, %s106
    %p118 = scmp.eq.s32.totalorder %s33, 1
    %p119 = por %p117, %p118
    %p121 = scmp.ne.s32.totalorder %s106, %s120
    %p122 = scmp.eq.s32.totalorder %s33, 0
    %p123 = por %p121, %p122
    %s125 = sadd.s32 %s124, 1
    %p128 = scmp.eq.s32.totalorder %s27, 1
    %p129 = scmp.ne.s32.totalorder %s124, %s126
    %p130 = scmp.eq.s32.totalorder %s27, 0
    %p131 = por %p129, %p130
    %p132 = scmp.ne.s32.totalorder %s124, %s126
    %p133 = scmp.eq.s32.totalorder %s32, 1
    %p134 = por %p132, %p133
    %p135 = scmp.ne.s32.totalorder %s126, %s127
    %p136 = scmp.eq.s32.totalorder %s32, 0
    %p137 = por %p135, %p136
    %p138 = scmp.ne.s32.totalorder %s126, %s127
    %p139 = scmp.eq.s32.totalorder %s33, 1
    %p140 = por %p138, %p139
    %p142 = scmp.ne.s32.totalorder %s127, %s141
    %p143 = scmp.eq.s32.totalorder %s33, 0
    %p144 = por %p142, %p143
    %s146 = sadd.s32 %s145, 1
    %p149 = scmp.eq.s32.totalorder %s27, 1
    %p150 = scmp.ne.s32.totalorder %s145, %s147
    %p151 = scmp.eq.s32.totalorder %s27, 0
    %p152 = por %p150, %p151
    %p153 = scmp.ne.s32.totalorder %s145, %s147
    %p154 = scmp.eq.s32.totalorder %s32, 1
    %p155 = por %p153, %p154
    %p156 = scmp.ne.s32.totalorder %s147, %s148
    %p157 = scmp.eq.s32.totalorder %s32, 0
    %p158 = por %p156, %p157
    %p159 = scmp.ne.s32.totalorder %s147, %s148
    %p160 = scmp.eq.s32.totalorder %s33, 1
    %p161 = por %p159, %p160
    %p163 = scmp.ne.s32.totalorder %s148, %s162
    %p164 = scmp.eq.s32.totalorder %s33, 0
    %p165 = por %p163, %p164
    %s167 = sadd.s32 %s166, 1
    %p170 = scmp.eq.s32.totalorder %s27, 1
    %p171 = scmp.ne.s32.totalorder %s166, %s168
    %p172 = scmp.eq.s32.totalorder %s27, 0
    %p173 = por %p171, %p172
    %p174 = scmp.ne.s32.totalorder %s166, %s168
    %p175 = scmp.eq.s32.totalorder %s32, 1
    %p176 = por %p174, %p175
    %p177 = scmp.ne.s32.totalorder %s168, %s169
    %p178 = scmp.eq.s32.totalorder %s32, 0
    %p179 = por %p177, %p178
    %p180 = scmp.ne.s32.totalorder %s168, %s169
    %p181 = scmp.eq.s32.totalorder %s33, 1
    %p182 = por %p180, %p181
    %p184 = scmp.ne.s32.totalorder %s169, %s183
    %p185 = scmp.eq.s32.totalorder %s33, 0
    %p186 = por %p184, %p185
    %s188 = sadd.s32 %s187, 1
    %p191 = scmp.eq.s32.totalorder %s27, 1
    %p192 = scmp.ne.s32.totalorder %s187, %s189
    %p193 = scmp.eq.s32.totalorder %s27, 0
    %p194 = por %p192, %p193
    %p195 = scmp.ne.s32.totalorder %s187, %s189
    %p196 = scmp.eq.s32.totalorder %s32, 1
    %p197 = por %p195, %p196
    %p198 = scmp.ne.s32.totalorder %s189, %s190
    %p199 = scmp.eq.s32.totalorder %s32, 0
    %p200 = por %p198, %p199
    %p201 = scmp.ne.s32.totalorder %s189, %s190
    %p202 = scmp.eq.s32.totalorder %s33, 1
    %p203 = por %p201, %p202
    %p205 = scmp.ne.s32.totalorder %s190, %s204
    %p206 = scmp.eq.s32.totalorder %s33, 0
    %p207 = por %p205, %p206
    %s209 = sadd.s32 %s208, 1
    %p212 = scmp.eq.s32.totalorder %s27, 1
    %p213 = scmp.ne.s32.totalorder %s208, %s210
    %p214 = scmp.eq.s32.totalorder %s27, 0
    %p215 = por %p213, %p214
    %p216 = scmp.ne.s32.totalorder %s208, %s210
    %p217 = scmp.eq.s32.totalorder %s32, 1
    %p218 = por %p216, %p217
    %p219 = scmp.ne.s32.totalorder %s210, %s211
    %p220 = scmp.eq.s32.totalorder %s32, 0
    %p221 = por %p219, %p220
    %p222 = scmp.ne.s32.totalorder %s210, %s211
    %p223 = scmp.eq.s32.totalorder %s33, 1
    %p224 = por %p222, %p223
    %p226 = scmp.ne.s32.totalorder %s211, %s225
    %p227 = scmp.eq.s32.totalorder %s33, 0
    %p228 = por %p226, %p227
    %s230 = sadd.s32 %s229, 1
    %p233 = scmp.eq.s32.totalorder %s27, 1
    %p234 = scmp.ne.s32.totalorder %s229, %s231
    %p235 = scmp.eq.s32.totalorder %s27, 0
    %p236 = por %p234, %p235
    %p237 = scmp.ne.s32.totalorder %s229, %s231
    %p238 = scmp.eq.s32.totalorder %s32, 1
    %p239 = por %p237, %p238
    %p240 = scmp.ne.s32.totalorder %s231, %s232
    %p241 = scmp.eq.s32.totalorder %s32, 0
    %p242 = por %p240, %p241
    %p243 = scmp.ne.s32.totalorder %s231, %s232
    %p244 = scmp.eq.s32.totalorder %s33, 1
    %p245 = por %p243, %p244
    %p247 = scmp.ne.s32.totalorder %s232, %s246
    %p248 = scmp.eq.s32.totalorder %s33, 0
    %p249 = por %p247, %p248
    %s251 = sadd.s32 %s250, 1
    %p254 = scmp.eq.s32.totalorder %s27, 1
    %p255 = scmp.ne.s32.totalorder %s250, %s252
    %p256 = scmp.eq.s32.totalorder %s27, 0
    %p257 = por %p255, %p256
    %p258 = scmp.ne.s32.totalorder %s250, %s252
    %p259 = scmp.eq.s32.totalorder %s32, 1
    %p260 = por %p258, %p259
    %p261 = scmp.ne.s32.totalorder %s252, %s253
    %p262 = scmp.eq.s32.totalorder %s32, 0
    %p263 = por %p261, %p262
    %p264 = scmp.ne.s32.totalorder %s252, %s253
    %p265 = scmp.eq.s32.totalorder %s33, 1
    %p266 = por %p264, %p265
    %p268 = scmp.ne.s32.totalorder %s253, %s267
    %p269 = scmp.eq.s32.totalorder %s33, 0
    %p270 = por %p268, %p269
    %s272 = sadd.s32 %s271, 1
    %p275 = scmp.eq.s32.totalorder %s27, 1
    %p276 = scmp.ne.s32.totalorder %s271, %s273
    %p277 = scmp.eq.s32.totalorder %s27, 0
    %p278 = por %p276, %p277
    %p279 = scmp.ne.s32.totalorder %s271, %s273
    %p280 = scmp.eq.s32.totalorder %s32, 1
    %p281 = por %p279, %p280
    %p282 = scmp.ne.s32.totalorder %s273, %s274
    %p283 = scmp.eq.s32.totalorder %s32, 0
    %p284 = por %p282, %p283
    %p285 = scmp.ne.s32.totalorder %s273, %s274
    %p286 = scmp.eq.s32.totalorder %s33, 1
    %p287 = por %p285, %p286
    %p289 = scmp.ne.s32.totalorder %s274, %s288
    %p290 = scmp.eq.s32.totalorder %s33, 0
    %p291 = por %p289, %p290
    %s293 = sadd.s32 %s292, 1
    %p296 = scmp.eq.s32.totalorder %s27, 1
    %p297 = scmp.ne.s32.totalorder %s292, %s294
    %p298 = scmp.eq.s32.totalorder %s27, 0
    %p299 = por %p297, %p298
    %p300 = scmp.ne.s32.totalorder %s292, %s294
    %p301 = scmp.eq.s32.totalorder %s32, 1
    %p302 = por %p300, %p301
    %p303 = scmp.ne.s32.totalorder %s294, %s295
    %p304 = scmp.eq.s32.totalorder %s32, 0
    %p305 = por %p303, %p304
    %p306 = scmp.ne.s32.totalorder %s294, %s295
    %p307 = scmp.eq.s32.totalorder %s33, 1
    %p308 = por %p306, %p307
    %p310 = scmp.ne.s32.totalorder %s295, %s309
    %p311 = scmp.eq.s32.totalorder %s33, 0
    %p312 = por %p310, %p311
    %s314 = sadd.s32 %s313, 1
    %p317 = scmp.eq.s32.totalorder %s27, 1
    %p318 = scmp.ne.s32.totalorder %s313, %s315
    %p319 = scmp.eq.s32.totalorder %s27, 0
    %p320 = por %p318, %p319
    %p321 = scmp.ne.s32.totalorder %s313, %s315
    %p322 = scmp.eq.s32.totalorder %s32, 1
    %p323 = por %p321, %p322
    %p324 = scmp.ne.s32.totalorder %s315, %s316
    %p325 = scmp.eq.s32.totalorder %s32, 0
    %p326 = por %p324, %p325
    %p327 = scmp.ne.s32.totalorder %s315, %s316
    %p328 = scmp.eq.s32.totalorder %s33, 1
    %p329 = por %p327, %p328
    %p331 = scmp.ne.s32.totalorder %s316, %s330
    %p332 = scmp.eq.s32.totalorder %s33, 0
    %p333 = por %p331, %p332
    %s335 = sadd.s32 %s334, 1
    %p338 = scmp.eq.s32.totalorder %s27, 1
    %p339 = scmp.ne.s32.totalorder %s334, %s336
    %p340 = scmp.eq.s32.totalorder %s27, 0
    %p341 = por %p339, %p340
    %p342 = scmp.ne.s32.totalorder %s334, %s336
    %p343 = scmp.eq.s32.totalorder %s32, 1
    %p344 = por %p342, %p343
    %p345 = scmp.ne.s32.totalorder %s336, %s337
    %p346 = scmp.eq.s32.totalorder %s32, 0
    %p347 = por %p345, %p346
    %p348 = scmp.ne.s32.totalorder %s336, %s337
    %p349 = scmp.eq.s32.totalorder %s33, 1
    %p350 = por %p348, %p349
    %p352 = scmp.ne.s32.totalorder %s337, %s351
    %p353 = scmp.eq.s32.totalorder %s33, 0
    %p354 = por %p352, %p353
    %s355 = ssub.s32 %s27, %s34
    %p356 = scmp.eq.s32.totalorder %s355, 0
    %s358 = sadd.s32 %s357, 1
    %s359 = scalar_select %p356, %s357, %s358
    %p362 = pneg %p356
    %p363 = scmp.eq.s32.totalorder %s27, 1
    %p364 = por %p362, %p363
    %p365 = scmp.ne.s32.totalorder %s357, %s360
    %p366 = scmp.eq.s32.totalorder %s27, 0
    %p367 = por %p365, %p366
    %p368 = scmp.ne.s32.totalorder %s357, %s360
    %p369 = scmp.eq.s32.totalorder %s32, 1
    %p370 = por %p368, %p369
    %p371 = scmp.ne.s32.totalorder %s360, %s361
    %p372 = scmp.eq.s32.totalorder %s32, 0
    %p373 = por %p371, %p372
    %p374 = scmp.ne.s32.totalorder %s360, %s361
    %p375 = scmp.eq.s32.totalorder %s33, 1
    %p376 = por %p374, %p375
    %p378 = scmp.ne.s32.totalorder %s361, %s377
    %p379 = scmp.eq.s32.totalorder %s33, 0
    %p380 = por %p378, %p379
    %p381 = scmp.le.s32.totalorder 1, %s27
    %p382 = scmp.lt.s32.totalorder %s27, 3
    %p383 = pnand %p381, %p382
    %p384 = pneg %p383
    // Predicated region
    $region9: #{autoencoder_forward.2} parent=5 // pred_check
      _
    $region10: #{autoencoder_forward.2} parent=5 // pred_check_branch
      %386 = sbr.rel (%p383) target = $region12
    $region11: #{autoencoder_forward.2} parent=5 // pred_region
      %s387 = ssub.s32 %s27, 1
      // Predicated region
      $region13: #{autoencoder_forward.2} parent=11 // pred_check
        %p388 = pneg %p74
      $region14: #{autoencoder_forward.2} parent=11 // pred_check_branch
        %390 = sbr.rel (%p388) target = $region16
      $region15: #{autoencoder_forward.2} parent=11 // pred_region
        _
      $region16: #{autoencoder_forward.2} parent=11 // pred_fallthru
        _
      // Predicated region
      $region17: #{autoencoder_forward.2} parent=11 // pred_check
        %p391 = pneg %p95
      $region18: #{autoencoder_forward.2} parent=11 // pred_check_branch
        %393 = sbr.rel (%p391) target = $region20
      $region19: #{autoencoder_forward.2} parent=11 // pred_region
        _
      $region20: #{autoencoder_forward.2} parent=11 // pred_fallthru
        _
      // Predicated region
      $region21: #{autoencoder_forward.2} parent=11 // pred_check
        %p394 = pneg %p116
      $region22: #{autoencoder_forward.2} parent=11 // pred_check_branch
        %396 = sbr.rel (%p394) target = $region24
      $region23: #{autoencoder_forward.2} parent=11 // pred_region
        _
      $region24: #{autoencoder_forward.2} parent=11 // pred_fallthru
        _
      // Predicated region
      $region25: #{autoencoder_forward.2} parent=11 // pred_check
        %p397 = pneg %p137
      $region26: #{autoencoder_forward.2} parent=11 // pred_check_branch
        %399 = sbr.rel (%p397) target = $region28
      $region27: #{autoencoder_forward.2} parent=11 // pred_region
        _
      $region28: #{autoencoder_forward.2} parent=11 // pred_fallthru
        _
      // Predicated region
      $region29: #{autoencoder_forward.2} parent=11 // pred_check
        %p400 = pneg %p158
      $region30: #{autoencoder_forward.2} parent=11 // pred_check_branch
        %402 = sbr.rel (%p400) target = $region32
      $region31: #{autoencoder_forward.2} parent=11 // pred_region
        _
      $region32: #{autoencoder_forward.2} parent=11 // pred_fallthru
        _
      // Predicated region
      $region33: #{autoencoder_forward.2} parent=11 // pred_check
        %p403 = pneg %p179
      $region34: #{autoencoder_forward.2} parent=11 // pred_check_branch
        %405 = sbr.rel (%p403) target = $region36
      $region35: #{autoencoder_forward.2} parent=11 // pred_region
        _
      $region36: #{autoencoder_forward.2} parent=11 // pred_fallthru
        _
      // Predicated region
      $region37: #{autoencoder_forward.2} parent=11 // pred_check
        %p406 = pneg %p200
      $region38: #{autoencoder_forward.2} parent=11 // pred_check_branch
        %408 = sbr.rel (%p406) target = $region40
      $region39: #{autoencoder_forward.2} parent=11 // pred_region
        _
      $region40: #{autoencoder_forward.2} parent=11 // pred_fallthru
        _
      // Predicated region
      $region41: #{autoencoder_forward.2} parent=11 // pred_check
        %p409 = pneg %p221
      $region42: #{autoencoder_forward.2} parent=11 // pred_check_branch
        %411 = sbr.rel (%p409) target = $region44
      $region43: #{autoencoder_forward.2} parent=11 // pred_region
        _
      $region44: #{autoencoder_forward.2} parent=11 // pred_fallthru
        _
      // Predicated region
      $region45: #{autoencoder_forward.2} parent=11 // pred_check
        %p412 = pneg %p242
      $region46: #{autoencoder_forward.2} parent=11 // pred_check_branch
        %414 = sbr.rel (%p412) target = $region48
      $region47: #{autoencoder_forward.2} parent=11 // pred_region
        _
      $region48: #{autoencoder_forward.2} parent=11 // pred_fallthru
        _
      // Predicated region
      $region49: #{autoencoder_forward.2} parent=11 // pred_check
        %p415 = pneg %p263
      $region50: #{autoencoder_forward.2} parent=11 // pred_check_branch
        %417 = sbr.rel (%p415) target = $region52
      $region51: #{autoencoder_forward.2} parent=11 // pred_region
        _
      $region52: #{autoencoder_forward.2} parent=11 // pred_fallthru
        _
      // Predicated region
      $region53: #{autoencoder_forward.2} parent=11 // pred_check
        %p418 = pneg %p284
      $region54: #{autoencoder_forward.2} parent=11 // pred_check_branch
        %420 = sbr.rel (%p418) target = $region56
      $region55: #{autoencoder_forward.2} parent=11 // pred_region
        _
      $region56: #{autoencoder_forward.2} parent=11 // pred_fallthru
        _
      // Predicated region
      $region57: #{autoencoder_forward.2} parent=11 // pred_check
        %p421 = pneg %p305
      $region58: #{autoencoder_forward.2} parent=11 // pred_check_branch
        %423 = sbr.rel (%p421) target = $region60
      $region59: #{autoencoder_forward.2} parent=11 // pred_region
        _
      $region60: #{autoencoder_forward.2} parent=11 // pred_fallthru
        _
      // Predicated region
      $region61: #{autoencoder_forward.2} parent=11 // pred_check
        %p424 = pneg %p326
      $region62: #{autoencoder_forward.2} parent=11 // pred_check_branch
        %426 = sbr.rel (%p424) target = $region64
      $region63: #{autoencoder_forward.2} parent=11 // pred_region
        _
      $region64: #{autoencoder_forward.2} parent=11 // pred_fallthru
        _
      // Predicated region
      $region65: #{autoencoder_forward.2} parent=11 // pred_check
        %p427 = pneg %p347
      $region66: #{autoencoder_forward.2} parent=11 // pred_check_branch
        %429 = sbr.rel (%p427) target = $region68
      $region67: #{autoencoder_forward.2} parent=11 // pred_region
        _
      $region68: #{autoencoder_forward.2} parent=11 // pred_fallthru
        _
    $region12: #{autoencoder_forward.2} parent=5 // pred_fallthru
      _
    %p430 = scmp.lt.s32.totalorder %s27, 2
    // Predicated region
    $region69: #{autoencoder_forward.2} parent=5 // pred_check
      %p431 = pneg %p430
    $region70: #{autoencoder_forward.2} parent=5 // pred_check_branch
      %433 = sbr.rel (%p431) target = $region72
    $region71: #{autoencoder_forward.2} parent=5 // pred_region
      // Predicated region
      $region73: #{autoencoder_forward.2} parent=71 // pred_check
        %p434 = pneg %p47
      $region74: #{autoencoder_forward.2} parent=71 // pred_check_branch
        %436 = sbr.rel (%p434) target = $region76
      $region75: #{autoencoder_forward.2} parent=71 // pred_region
        %s437 = smul.u32 16, %s27
        %p438 = scmp.lt.s32.totalorder %s437, 31
        %s439 = scalar_select %p438, %s437, 31
        %s440 = smul.addr %s439, 7
        %s441 = smul.addr %s440, 4
        %s442 = scalar_lea.vmem %s14, %s441
        %s443 = smul.u32 16, %s27
      $region76: #{autoencoder_forward.2} parent=71 // pred_fallthru
        _
    $region72: #{autoencoder_forward.2} parent=5 // pred_fallthru
      _
    %p444 = scmp.le.s32.totalorder 1, %s27
    %p445 = scmp.lt.s32.totalorder %s27, 3
    %p446 = pnand %p444, %p445
    %p447 = pneg %p446
    // Predicated region
    $region77: #{autoencoder_forward.2} parent=5 // pred_check
      _
    $region78: #{autoencoder_forward.2} parent=5 // pred_check_branch
      %449 = sbr.rel (%p446) target = $region80
    $region79: #{autoencoder_forward.2} parent=5 // pred_region
      #allocation7 [shape = 'u8[229376]{0}', space=vmem, size = 0x38000, dematerialized = true, scoped, tag = 'FusionAdapter Buffer %fusion.1 = bf16[256,896]{1,0:T(8,128)(2,1)} fusion(%param_14.1, %param_15), kind=kLoop, calls=%fused_computation.1.clone, metadata={op_name="jit(autoencoder_forward)/jit(_pad)/pad" stack_frame_id=1}']
      %s450 = ssub.s32 %s27, 1
      %s451 = smul.u32 16, %s32
      %p452 = scmp.lt.s32.totalorder %s451, 31
      %s453 = scalar_select %p452, %s451, 31
      %s454 = smul.addr %s453, 7
      %s455 = smul.addr %s454, 4
      %s456 = scalar_lea.vmem %s14, %s455
      %p457 = pneg %p53
      %p458 = pneg %p50
      %p459 = pneg %p74
      %p460 = pneg %p71
      %p461 = pneg %p95
      %p462 = pneg %p92
      %p463 = pneg %p116
      %p464 = pneg %p113
      %p465 = pneg %p137
      %p466 = pneg %p134
      %p467 = pneg %p158
      %p468 = pneg %p155
      %p469 = pneg %p179
      %p470 = pneg %p176
      %p471 = pneg %p200
      %p472 = pneg %p197
      %p473 = pneg %p221
      %p474 = pneg %p218
      %p475 = pneg %p242
      %p476 = pneg %p239
      %p477 = pneg %p263
      %p478 = pneg %p260
      %p479 = pneg %p284
      %p480 = pneg %p281
      %p481 = pneg %p305
      %p482 = pneg %p302
      %p483 = pneg %p326
      %p484 = pneg %p323
      %p485 = pneg %p347
      %p486 = pneg %p344
      %p487 = pneg %p373
      %p488 = pneg %p370
      %s489 = smul.u32 16, %s32
      %p490 = scmp.lt.s32.totalorder %s489, 31
      %s491 = scalar_select %p490, %s489, 31
      %s492 = smul.addr %s491, 7
      %s493 = smul.addr %s492, 4
      %s494 = scalar_lea.vmem %s16, %s493
      %s495 = smul.u32 16, %s32
      %p496 = scmp.lt.s32.totalorder %s495, 31
      %s497 = scalar_select %p496, %s495, 31
      %s498 = smul.addr %s497, 7
      %s499 = smul.addr %s498, 4
      %s500 = scalar_lea.vmem %s14, %s499
      %s501 = smul.u32 16, %s32
      %s502 = smul.u32 16, %s32
      %p503 = scmp.lt.s32.totalorder %s502, 31
      %s504 = scalar_select %p503, %s502, 31
      %s505 = smul.addr %s504, 7
      %s506 = smul.addr %s505, 4
      %s507 = scalar_lea.vmem %s16, %s506
      %s508 = smul.u32 16, %s32
      %v509 = vld [vmem:[%s500] sm:$0xf]
      %v510 = vunpack.c.l.bf16 %v509
      %v511 = vunpack.c.h.bf16 %v509
      %v512 = vlaneseq
      %v513 = vand.u32 %v512, 127
      %vm515 = vcmp.lt.s32.totalorder %v513, 784
      %v516 = vsel %vm515, %v510, %v22
      %v517 = vpack.c.bf16 0.0, %v516
      %s519 = ssub.s32 16, 1
      %520 = vst [vmem:[#allocation7] sm:%s519] %v517
      %s521 = scalar_lea.vmem %s500, 4
      %v522 = vld [vmem:[%s521] sm:$0xf]
      %v523 = vunpack.c.l.bf16 %v522
      %v524 = vunpack.c.h.bf16 %v522
      %v525 = vlaneseq
      %v526 = vand.u32 %v525, 127
      %v527 = vadd.s32 %v526, 128
      %vm528 = vcmp.lt.s32.totalorder %v527, 784
      %v529 = vsel %vm528, %v523, %v22
      %s530 = scalar_lea.vmem [#allocation7], 4
      %v531 = vpack.c.bf16 0.0, %v529
      %s533 = ssub.s32 16, 1
      %534 = vst [vmem:[%s530] sm:%s533] %v531
      %s535 = scalar_lea.vmem %s500, 8
      %v536 = vld [vmem:[%s535] sm:$0xf]
      %v537 = vunpack.c.l.bf16 %v536
      %v538 = vunpack.c.h.bf16 %v536
      %v539 = vlaneseq
      %v540 = vand.u32 %v539, 127
      %v541 = vadd.s32 %v540, 256
      %vm542 = vcmp.lt.s32.totalorder %v541, 784
      %v543 = vsel %vm542, %v537, %v22
      %s544 = scalar_lea.vmem [#allocation7], 8
      %v545 = vpack.c.bf16 0.0, %v543
      %s547 = ssub.s32 16, 1
      %548 = vst [vmem:[%s544] sm:%s547] %v545
      %s549 = scalar_lea.vmem %s500, 12
      %v550 = vld [vmem:[%s549] sm:$0xf]
      %v551 = vunpack.c.l.bf16 %v550
      %v552 = vunpack.c.h.bf16 %v550
      %v553 = vlaneseq
      %v554 = vand.u32 %v553, 127
      %v555 = vadd.s32 %v554, 384
      %vm556 = vcmp.lt.s32.totalorder %v555, 784
      %v557 = vsel %vm556, %v551, %v22
      %s558 = scalar_lea.vmem [#allocation7], 12
      %v559 = vpack.c.bf16 0.0, %v557
      %s561 = ssub.s32 16, 1
      %562 = vst [vmem:[%s558] sm:%s561] %v559
      %s563 = scalar_lea.vmem %s500, 16
      %v564 = vld [vmem:[%s563] sm:$0xf]
      %v565 = vunpack.c.l.bf16 %v564
      %v566 = vunpack.c.h.bf16 %v564
      %v567 = vlaneseq
      %v568 = vand.u32 %v567, 127
      %v569 = vadd.s32 %v568, 512
      %vm570 = vcmp.lt.s32.totalorder %v569, 784
      %v571 = vsel %vm570, %v565, %v22
      %s572 = scalar_lea.vmem [#allocation7], 16
      %v573 = vpack.c.bf16 0.0, %v571
      %s575 = ssub.s32 16, 1
      %576 = vst [vmem:[%s572] sm:%s575] %v573
      %s577 = scalar_lea.vmem %s500, 20
      %v578 = vld [vmem:[%s577] sm:$0xf]
      %v579 = vunpack.c.l.bf16 %v578
      %v580 = vunpack.c.h.bf16 %v578
      %v581 = vlaneseq
      %v582 = vand.u32 %v581, 127
      %v583 = vadd.s32 %v582, 640
      %vm584 = vcmp.lt.s32.totalorder %v583, 784
      %v585 = vsel %vm584, %v579, %v22
      %s586 = scalar_lea.vmem [#allocation7], 20
      %v587 = vpack.c.bf16 0.0, %v585
      %s589 = ssub.s32 16, 1
      %590 = vst [vmem:[%s586] sm:%s589] %v587
      %s591 = scalar_lea.vmem %s500, 24
      %s593 = sor.u32 255, 127
      %s594 = sand.u32 %s593, 85
      %s595 = sshrl.u32 %s594, 1
      %s596 = sor.u32 %s594, %s595
      %s597 = sand.u32 51, %s596
      %s598 = sshrl.u32 %s597, 2
      %s599 = sor.u32 %s597, %s598
      %s600 = sand.u32 15, %s599
      %v601 = vld [vmem:[%s591] sm:%s600]
      %v602 = vunpack.c.l.bf16 %v601
      %v603 = vunpack.c.h.bf16 %v601
      %v604 = vlaneseq
      %v605 = vand.u32 %v604, 127
      %v606 = vadd.s32 %v605, 768
      %vm607 = vcmp.lt.s32.totalorder %v606, 784
      %v608 = vsel %vm607, %v602, %v22
      %s609 = scalar_lea.vmem [#allocation7], 24
      %v610 = vpack.c.bf16 0.0, %v608
      %s612 = ssub.s32 16, 1
      %613 = vst [vmem:[%s609] sm:%s612] %v610
      %s614 = scalar_lea.vmem %s500, 28
      %v615 = vld [vmem:[%s614] sm:$0xf]
      %v616 = vunpack.c.l.bf16 %v615
      %v617 = vunpack.c.h.bf16 %v615
      %v618 = vlaneseq
      %v619 = vand.u32 %v618, 127
      %vm621 = vcmp.lt.s32.totalorder %v619, 784
      %v622 = vsel %vm621, %v616, %v22
      %s623 = scalar_lea.vmem [#allocation7], 28
      %v624 = vpack.c.bf16 0.0, %v622
      %s626 = ssub.s32 16, 1
      %627 = vst [vmem:[%s623] sm:%s626] %v624
      %s628 = scalar_lea.vmem %s500, 32
      %v629 = vld [vmem:[%s628] sm:$0xf]
      %v630 = vunpack.c.l.bf16 %v629
      %v631 = vunpack.c.h.bf16 %v629
      %v632 = vlaneseq
      %v633 = vand.u32 %v632, 127
      %v634 = vadd.s32 %v633, 128
      %vm635 = vcmp.lt.s32.totalorder %v634, 784
      %v636 = vsel %vm635, %v630, %v22
      %s637 = scalar_lea.vmem [#allocation7], 32
      %v638 = vpack.c.bf16 0.0, %v636
      %s640 = ssub.s32 16, 1
      %641 = vst [vmem:[%s637] sm:%s640] %v638
      %s642 = scalar_lea.vmem %s500, 36
      %v643 = vld [vmem:[%s642] sm:$0xf]
      %v644 = vunpack.c.l.bf16 %v643
      %v645 = vunpack.c.h.bf16 %v643
      %v646 = vlaneseq
      %v647 = vand.u32 %v646, 127
      %v648 = vadd.s32 %v647, 256
      %vm649 = vcmp.lt.s32.totalorder %v648, 784
      %v650 = vsel %vm649, %v644, %v22
      %s651 = scalar_lea.vmem [#allocation7], 36
      %v652 = vpack.c.bf16 0.0, %v650
      %s654 = ssub.s32 16, 1
      %655 = vst [vmem:[%s651] sm:%s654] %v652
      %s656 = scalar_lea.vmem %s500, 40
      %v657 = vld [vmem:[%s656] sm:$0xf]
      %v658 = vunpack.c.l.bf16 %v657
      %v659 = vunpack.c.h.bf16 %v657
      %v660 = vlaneseq
      %v661 = vand.u32 %v660, 127
      %v662 = vadd.s32 %v661, 384
      %vm663 = vcmp.lt.s32.totalorder %v662, 784
      %v664 = vsel %vm663, %v658, %v22
      %s665 = scalar_lea.vmem [#allocation7], 40
      %v666 = vpack.c.bf16 0.0, %v664
      %s668 = ssub.s32 16, 1
      %669 = vst [vmem:[%s665] sm:%s668] %v666
      %s670 = scalar_lea.vmem %s500, 44
      %v671 = vld [vmem:[%s670] sm:$0xf]
      %v672 = vunpack.c.l.bf16 %v671
      %v673 = vunpack.c.h.bf16 %v671
      %v674 = vlaneseq
      %v675 = vand.u32 %v674, 127
      %v676 = vadd.s32 %v675, 512
      %vm677 = vcmp.lt.s32.totalorder %v676, 784
      %v678 = vsel %vm677, %v672, %v22
      %s679 = scalar_lea.vmem [#allocation7], 44
      %v680 = vpack.c.bf16 0.0, %v678
      %s682 = ssub.s32 16, 1
      %683 = vst [vmem:[%s679] sm:%s682] %v680
      %s684 = scalar_lea.vmem %s500, 48
      %v685 = vld [vmem:[%s684] sm:$0xf]
      %v686 = vunpack.c.l.bf16 %v685
      %v687 = vunpack.c.h.bf16 %v685
      %v688 = vlaneseq
      %v689 = vand.u32 %v688, 127
      %v690 = vadd.s32 %v689, 640
      %vm691 = vcmp.lt.s32.totalorder %v690, 784
      %v692 = vsel %vm691, %v686, %v22
      %s693 = scalar_lea.vmem [#allocation7], 48
      %v694 = vpack.c.bf16 0.0, %v692
      %s696 = ssub.s32 16, 1
      %697 = vst [vmem:[%s693] sm:%s696] %v694
      %s698 = scalar_lea.vmem %s500, 52
      %s700 = sor.u32 255, 127
      %s701 = sand.u32 %s700, 85
      %s702 = sshrl.u32 %s701, 1
      %s703 = sor.u32 %s701, %s702
      %s704 = sand.u32 51, %s703
      %s705 = sshrl.u32 %s704, 2
      %s706 = sor.u32 %s704, %s705
      %s707 = sand.u32 15, %s706
      %v708 = vld [vmem:[%s698] sm:%s707]
      %v709 = vunpack.c.l.bf16 %v708
      %v710 = vunpack.c.h.bf16 %v708
      %v711 = vlaneseq
      %v712 = vand.u32 %v711, 127
      %v713 = vadd.s32 %v712, 768
      %vm714 = vcmp.lt.s32.totalorder %v713, 784
      %v715 = vsel %vm714, %v709, %v22
      %s716 = scalar_lea.vmem [#allocation7], 52
      %v717 = vpack.c.bf16 0.0, %v715
      %s719 = ssub.s32 16, 1
      %720 = vst [vmem:[%s716] sm:%s719] %v717
      %s721 = scalar_lea.vmem %s500, 56
      %v722 = vld [vmem:[%s721] sm:$0xf]
      %v723 = vunpack.c.l.bf16 %v722
      %v724 = vunpack.c.h.bf16 %v722
      %v725 = vlaneseq
      %v726 = vand.u32 %v725, 127
      %vm728 = vcmp.lt.s32.totalorder %v726, 784
      %v729 = vsel %vm728, %v723, %v22
      %s730 = scalar_lea.vmem [#allocation7], 56
      %v731 = vpack.c.bf16 0.0, %v729
      %s733 = ssub.s32 16, 1
      %734 = vst [vmem:[%s730] sm:%s733] %v731
      %s735 = scalar_lea.vmem %s500, 60
      %v736 = vld [vmem:[%s735] sm:$0xf]
      %v737 = vunpack.c.l.bf16 %v736
      %v738 = vunpack.c.h.bf16 %v736
      %v739 = vlaneseq
      %v740 = vand.u32 %v739, 127
      %v741 = vadd.s32 %v740, 128
      %vm742 = vcmp.lt.s32.totalorder %v741, 784
      %v743 = vsel %vm742, %v737, %v22
      %s744 = scalar_lea.vmem [#allocation7], 60
      %v745 = vpack.c.bf16 0.0, %v743
      %s747 = ssub.s32 16, 1
      %748 = vst [vmem:[%s744] sm:%s747] %v745
      %s749 = scalar_lea.vmem %s500, 64
      %v750 = vld [vmem:[%s749] sm:$0xf]
      %v751 = vunpack.c.l.bf16 %v750
      %v752 = vunpack.c.h.bf16 %v750
      %v753 = vlaneseq
      %v754 = vand.u32 %v753, 127
      %v755 = vadd.s32 %v754, 256
      %vm756 = vcmp.lt.s32.totalorder %v755, 784
      %v757 = vsel %vm756, %v751, %v22
      %s758 = scalar_lea.vmem [#allocation7], 64
      %v759 = vpack.c.bf16 0.0, %v757
      %s761 = ssub.s32 16, 1
      %762 = vst [vmem:[%s758] sm:%s761] %v759
      %s763 = scalar_lea.vmem %s500, 68
      %v764 = vld [vmem:[%s763] sm:$0xf]
      %v765 = vunpack.c.l.bf16 %v764
      %v766 = vunpack.c.h.bf16 %v764
      %v767 = vlaneseq
      %v768 = vand.u32 %v767, 127
      %v769 = vadd.s32 %v768, 384
      %vm770 = vcmp.lt.s32.totalorder %v769, 784
      %v771 = vsel %vm770, %v765, %v22
      %s772 = scalar_lea.vmem [#allocation7], 68
      %v773 = vpack.c.bf16 0.0, %v771
      %s775 = ssub.s32 16, 1
      %776 = vst [vmem:[%s772] sm:%s775] %v773
      %s777 = scalar_lea.vmem %s500, 72
      %v778 = vld [vmem:[%s777] sm:$0xf]
      %v779 = vunpack.c.l.bf16 %v778
      %v780 = vunpack.c.h.bf16 %v778
      %v781 = vlaneseq
      %v782 = vand.u32 %v781, 127
      %v783 = vadd.s32 %v782, 512
      %vm784 = vcmp.lt.s32.totalorder %v783, 784
      %v785 = vsel %vm784, %v779, %v22
      %s786 = scalar_lea.vmem [#allocation7], 72
      %v787 = vpack.c.bf16 0.0, %v785
      %s789 = ssub.s32 16, 1
      %790 = vst [vmem:[%s786] sm:%s789] %v787
      %s791 = scalar_lea.vmem %s500, 76
      %v792 = vld [vmem:[%s791] sm:$0xf]
      %v793 = vunpack.c.l.bf16 %v792
      %v794 = vunpack.c.h.bf16 %v792
      %v795 = vlaneseq
      %v796 = vand.u32 %v795, 127
      %v797 = vadd.s32 %v796, 640
      %vm798 = vcmp.lt.s32.totalorder %v797, 784
      %v799 = vsel %vm798, %v793, %v22
      %s800 = scalar_lea.vmem [#allocation7], 76
      %v801 = vpack.c.bf16 0.0, %v799
      %s803 = ssub.s32 16, 1
      %804 = vst [vmem:[%s800] sm:%s803] %v801
      %s805 = scalar_lea.vmem %s500, 80
      %s807 = sor.u32 255, 127
      %s808 = sand.u32 %s807, 85
      %s809 = sshrl.u32 %s808, 1
      %s810 = sor.u32 %s808, %s809
      %s811 = sand.u32 51, %s810
      %s812 = sshrl.u32 %s811, 2
      %s813 = sor.u32 %s811, %s812
      %s814 = sand.u32 15, %s813
      %v815 = vld [vmem:[%s805] sm:%s814]
      %v816 = vunpack.c.l.bf16 %v815
      %v817 = vunpack.c.h.bf16 %v815
      %v818 = vlaneseq
      %v819 = vand.u32 %v818, 127
      %v820 = vadd.s32 %v819, 768
      %vm821 = vcmp.lt.s32.totalorder %v820, 784
      %v822 = vsel %vm821, %v816, %v22
      %s823 = scalar_lea.vmem [#allocation7], 80
      %v824 = vpack.c.bf16 0.0, %v822
      %s826 = ssub.s32 16, 1
      %827 = vst [vmem:[%s823] sm:%s826] %v824
      %s828 = scalar_lea.vmem %s500, 84
      %v829 = vld [vmem:[%s828] sm:$0xf]
      %v830 = vunpack.c.l.bf16 %v829
      %v831 = vunpack.c.h.bf16 %v829
      %v832 = vlaneseq
      %v833 = vand.u32 %v832, 127
      %vm835 = vcmp.lt.s32.totalorder %v833, 784
      %v836 = vsel %vm835, %v830, %v22
      %s837 = scalar_lea.vmem [#allocation7], 84
      %v838 = vpack.c.bf16 0.0, %v836
      %s840 = ssub.s32 16, 1
      %841 = vst [vmem:[%s837] sm:%s840] %v838
      %s842 = scalar_lea.vmem %s500, 88
      %v843 = vld [vmem:[%s842] sm:$0xf]
      %v844 = vunpack.c.l.bf16 %v843
      %v845 = vunpack.c.h.bf16 %v843
      %v846 = vlaneseq
      %v847 = vand.u32 %v846, 127
      %v848 = vadd.s32 %v847, 128
      %vm849 = vcmp.lt.s32.totalorder %v848, 784
      %v850 = vsel %vm849, %v844, %v22
      %s851 = scalar_lea.vmem [#allocation7], 88
      %v852 = vpack.c.bf16 0.0, %v850
      %s854 = ssub.s32 16, 1
      %855 = vst [vmem:[%s851] sm:%s854] %v852
      %s856 = scalar_lea.vmem %s500, 92
      %v857 = vld [vmem:[%s856] sm:$0xf]
      %v858 = vunpack.c.l.bf16 %v857
      %v859 = vunpack.c.h.bf16 %v857
      %v860 = vlaneseq
      %v861 = vand.u32 %v860, 127
      %v862 = vadd.s32 %v861, 256
      %vm863 = vcmp.lt.s32.totalorder %v862, 784
      %v864 = vsel %vm863, %v858, %v22
      %s865 = scalar_lea.vmem [#allocation7], 92
      %v866 = vpack.c.bf16 0.0, %v864
      %s868 = ssub.s32 16, 1
      %869 = vst [vmem:[%s865] sm:%s868] %v866
      %s870 = scalar_lea.vmem %s500, 96
      %v871 = vld [vmem:[%s870] sm:$0xf]
      %v872 = vunpack.c.l.bf16 %v871
      %v873 = vunpack.c.h.bf16 %v871
      %v874 = vlaneseq
      %v875 = vand.u32 %v874, 127
      %v876 = vadd.s32 %v875, 384
      %vm877 = vcmp.lt.s32.totalorder %v876, 784
      %v878 = vsel %vm877, %v872, %v22
      %s879 = scalar_lea.vmem [#allocation7], 96
      %v880 = vpack.c.bf16 0.0, %v878
      %s882 = ssub.s32 16, 1
      %883 = vst [vmem:[%s879] sm:%s882] %v880
      %s884 = scalar_lea.vmem %s500, 100
      %v885 = vld [vmem:[%s884] sm:$0xf]
      %v886 = vunpack.c.l.bf16 %v885
      %v887 = vunpack.c.h.bf16 %v885
      %v888 = vlaneseq
      %v889 = vand.u32 %v888, 127
      %v890 = vadd.s32 %v889, 512
      %vm891 = vcmp.lt.s32.totalorder %v890, 784
      %v892 = vsel %vm891, %v886, %v22
      %s893 = scalar_lea.vmem [#allocation7], 100
      %v894 = vpack.c.bf16 0.0, %v892
      %s896 = ssub.s32 16, 1
      %897 = vst [vmem:[%s893] sm:%s896] %v894
      %s898 = scalar_lea.vmem %s500, 104
      %v899 = vld [vmem:[%s898] sm:$0xf]
      %v900 = vunpack.c.l.bf16 %v899
      %v901 = vunpack.c.h.bf16 %v899
      %v902 = vlaneseq
      %v903 = vand.u32 %v902, 127
      %v904 = vadd.s32 %v903, 640
      %vm905 = vcmp.lt.s32.totalorder %v904, 784
      %v906 = vsel %vm905, %v900, %v22
      %s907 = scalar_lea.vmem [#allocation7], 104
      %v908 = vpack.c.bf16 0.0, %v906
      %s910 = ssub.s32 16, 1
      %911 = vst [vmem:[%s907] sm:%s910] %v908
      %s912 = scalar_lea.vmem %s500, 108
      %s914 = sor.u32 255, 127
      %s915 = sand.u32 %s914, 85
      %s916 = sshrl.u32 %s915, 1
      %s917 = sor.u32 %s915, %s916
      %s918 = sand.u32 51, %s917
      %s919 = sshrl.u32 %s918, 2
      %s920 = sor.u32 %s918, %s919
      %s921 = sand.u32 15, %s920
      %v922 = vld [vmem:[%s912] sm:%s921]
      %v923 = vunpack.c.l.bf16 %v922
      %v924 = vunpack.c.h.bf16 %v922
      %v925 = vlaneseq
      %v926 = vand.u32 %v925, 127
      %v927 = vadd.s32 %v926, 768
      %vm928 = vcmp.lt.s32.totalorder %v927, 784
      %v929 = vsel %vm928, %v923, %v22
      %s930 = scalar_lea.vmem [#allocation7], 108
      %v931 = vpack.c.bf16 0.0, %v929
      %s933 = ssub.s32 16, 1
      %934 = vst [vmem:[%s930] sm:%s933] %v931
      %s935 = scalar_lea.vmem %s500, 112
      %v936 = vld [vmem:[%s935] sm:$0xf]
      %v937 = vunpack.c.l.bf16 %v936
      %v938 = vunpack.c.h.bf16 %v936
      %v939 = vlaneseq
      %v940 = vand.u32 %v939, 127
      %vm942 = vcmp.lt.s32.totalorder %v940, 784
      %v943 = vsel %vm942, %v937, %v22
      %s944 = scalar_lea.vmem [#allocation7], 112
      %v945 = vpack.c.bf16 0.0, %v943
      %s947 = ssub.s32 16, 1
      %948 = vst [vmem:[%s944] sm:%s947] %v945
      %s949 = scalar_lea.vmem %s500, 116
      %v950 = vld [vmem:[%s949] sm:$0xf]
      %v951 = vunpack.c.l.bf16 %v950
      %v952 = vunpack.c.h.bf16 %v950
      %v953 = vlaneseq
      %v954 = vand.u32 %v953, 127
      %v955 = vadd.s32 %v954, 128
      %vm956 = vcmp.lt.s32.totalorder %v955, 784
      %v957 = vsel %vm956, %v951, %v22
      %s958 = scalar_lea.vmem [#allocation7], 116
      %v959 = vpack.c.bf16 0.0, %v957
      %s961 = ssub.s32 16, 1
      %962 = vst [vmem:[%s958] sm:%s961] %v959
      %s963 = scalar_lea.vmem %s500, 120
      %v964 = vld [vmem:[%s963] sm:$0xf]
      %v965 = vunpack.c.l.bf16 %v964
      %v966 = vunpack.c.h.bf16 %v964
      %v967 = vlaneseq
      %v968 = vand.u32 %v967, 127
      %v969 = vadd.s32 %v968, 256
      %vm970 = vcmp.lt.s32.totalorder %v969, 784
      %v971 = vsel %vm970, %v965, %v22
      %s972 = scalar_lea.vmem [#allocation7], 120
      %v973 = vpack.c.bf16 0.0, %v971
      %s975 = ssub.s32 16, 1
      %976 = vst [vmem:[%s972] sm:%s975] %v973
      %s977 = scalar_lea.vmem %s500, 124
      %v978 = vld [vmem:[%s977] sm:$0xf]
      %v979 = vunpack.c.l.bf16 %v978
      %v980 = vunpack.c.h.bf16 %v978
      %v981 = vlaneseq
      %v982 = vand.u32 %v981, 127
      %v983 = vadd.s32 %v982, 384
      %vm984 = vcmp.lt.s32.totalorder %v983, 784
      %v985 = vsel %vm984, %v979, %v22
      %s986 = scalar_lea.vmem [#allocation7], 124
      %v987 = vpack.c.bf16 0.0, %v985
      %s989 = ssub.s32 16, 1
      %990 = vst [vmem:[%s986] sm:%s989] %v987
      %s991 = scalar_lea.vmem %s500, 128
      %v992 = vld [vmem:[%s991] sm:$0xf]
      %v993 = vunpack.c.l.bf16 %v992
      %v994 = vunpack.c.h.bf16 %v992
      %v995 = vlaneseq
      %v996 = vand.u32 %v995, 127
      %v997 = vadd.s32 %v996, 512
      %vm998 = vcmp.lt.s32.totalorder %v997, 784
      %v999 = vsel %vm998, %v993, %v22
      %s1000 = scalar_lea.vmem [#allocation7], 128
      %v1001 = vpack.c.bf16 0.0, %v999
      %s1003 = ssub.s32 16, 1
      %1004 = vst [vmem:[%s1000] sm:%s1003] %v1001
      %s1005 = scalar_lea.vmem %s500, 132
      %v1006 = vld [vmem:[%s1005] sm:$0xf]
      %v1007 = vunpack.c.l.bf16 %v1006
      %v1008 = vunpack.c.h.bf16 %v1006
      %v1009 = vlaneseq
      %v1010 = vand.u32 %v1009, 127
      %v1011 = vadd.s32 %v1010, 640
      %vm1012 = vcmp.lt.s32.totalorder %v1011, 784
      %v1013 = vsel %vm1012, %v1007, %v22
      %s1014 = scalar_lea.vmem [#allocation7], 132
      %v1015 = vpack.c.bf16 0.0, %v1013
      %s1017 = ssub.s32 16, 1
      %1018 = vst [vmem:[%s1014] sm:%s1017] %v1015
      %s1019 = scalar_lea.vmem %s500, 136
      %s1021 = sor.u32 255, 127
      %s1022 = sand.u32 %s1021, 85
      %s1023 = sshrl.u32 %s1022, 1
      %s1024 = sor.u32 %s1022, %s1023
      %s1025 = sand.u32 51, %s1024
      %s1026 = sshrl.u32 %s1025, 2
      %s1027 = sor.u32 %s1025, %s1026
      %s1028 = sand.u32 15, %s1027
      %v1029 = vld [vmem:[%s1019] sm:%s1028]
      %v1030 = vunpack.c.l.bf16 %v1029
      %v1031 = vunpack.c.h.bf16 %v1029
      %v1032 = vlaneseq
      %v1033 = vand.u32 %v1032, 127
      %v1034 = vadd.s32 %v1033, 768
      %vm1035 = vcmp.lt.s32.totalorder %v1034, 784
      %v1036 = vsel %vm1035, %v1030, %v22
      %s1037 = scalar_lea.vmem [#allocation7], 136
      %v1038 = vpack.c.bf16 0.0, %v1036
      %s1040 = ssub.s32 16, 1
      %1041 = vst [vmem:[%s1037] sm:%s1040] %v1038
      %s1042 = scalar_lea.vmem %s500, 140
      %v1043 = vld [vmem:[%s1042] sm:$0xf]
      %v1044 = vunpack.c.l.bf16 %v1043
      %v1045 = vunpack.c.h.bf16 %v1043
      %v1046 = vlaneseq
      %v1047 = vand.u32 %v1046, 127
      %vm1049 = vcmp.lt.s32.totalorder %v1047, 784
      %v1050 = vsel %vm1049, %v1044, %v22
      %s1051 = scalar_lea.vmem [#allocation7], 140
      %v1052 = vpack.c.bf16 0.0, %v1050
      %s1054 = ssub.s32 16, 1
      %1055 = vst [vmem:[%s1051] sm:%s1054] %v1052
      %s1056 = scalar_lea.vmem %s500, 144
      %v1057 = vld [vmem:[%s1056] sm:$0xf]
      %v1058 = vunpack.c.l.bf16 %v1057
      %v1059 = vunpack.c.h.bf16 %v1057
      %v1060 = vlaneseq
      %v1061 = vand.u32 %v1060, 127
      %v1062 = vadd.s32 %v1061, 128
      %vm1063 = vcmp.lt.s32.totalorder %v1062, 784
      %v1064 = vsel %vm1063, %v1058, %v22
      %s1065 = scalar_lea.vmem [#allocation7], 144
      %v1066 = vpack.c.bf16 0.0, %v1064
      %s1068 = ssub.s32 16, 1
      %1069 = vst [vmem:[%s1065] sm:%s1068] %v1066
      %s1070 = scalar_lea.vmem %s500, 148
      %v1071 = vld [vmem:[%s1070] sm:$0xf]
      %v1072 = vunpack.c.l.bf16 %v1071
      %v1073 = vunpack.c.h.bf16 %v1071
      %v1074 = vlaneseq
      %v1075 = vand.u32 %v1074, 127
      %v1076 = vadd.s32 %v1075, 256
      %vm1077 = vcmp.lt.s32.totalorder %v1076, 784
      %v1078 = vsel %vm1077, %v1072, %v22
      %s1079 = scalar_lea.vmem [#allocation7], 148
      %v1080 = vpack.c.bf16 0.0, %v1078
      %s1082 = ssub.s32 16, 1
      %1083 = vst [vmem:[%s1079] sm:%s1082] %v1080
      %s1084 = scalar_lea.vmem %s500, 152
      %v1085 = vld [vmem:[%s1084] sm:$0xf]
      %v1086 = vunpack.c.l.bf16 %v1085
      %v1087 = vunpack.c.h.bf16 %v1085
      %v1088 = vlaneseq
      %v1089 = vand.u32 %v1088, 127
      %v1090 = vadd.s32 %v1089, 384
      %vm1091 = vcmp.lt.s32.totalorder %v1090, 784
      %v1092 = vsel %vm1091, %v1086, %v22
      %s1093 = scalar_lea.vmem [#allocation7], 152
      %v1094 = vpack.c.bf16 0.0, %v1092
      %s1096 = ssub.s32 16, 1
      %1097 = vst [vmem:[%s1093] sm:%s1096] %v1094
      %s1098 = scalar_lea.vmem %s500, 156
      %v1099 = vld [vmem:[%s1098] sm:$0xf]
      %v1100 = vunpack.c.l.bf16 %v1099
      %v1101 = vunpack.c.h.bf16 %v1099
      %v1102 = vlaneseq
      %v1103 = vand.u32 %v1102, 127
      %v1104 = vadd.s32 %v1103, 512
      %vm1105 = vcmp.lt.s32.totalorder %v1104, 784
      %v1106 = vsel %vm1105, %v1100, %v22
      %s1107 = scalar_lea.vmem [#allocation7], 156
      %v1108 = vpack.c.bf16 0.0, %v1106
      %s1110 = ssub.s32 16, 1
      %1111 = vst [vmem:[%s1107] sm:%s1110] %v1108
      %s1112 = scalar_lea.vmem %s500, 160
      %v1113 = vld [vmem:[%s1112] sm:$0xf]
      %v1114 = vunpack.c.l.bf16 %v1113
      %v1115 = vunpack.c.h.bf16 %v1113
      %v1116 = vlaneseq
      %v1117 = vand.u32 %v1116, 127
      %v1118 = vadd.s32 %v1117, 640
      %vm1119 = vcmp.lt.s32.totalorder %v1118, 784
      %v1120 = vsel %vm1119, %v1114, %v22
      %s1121 = scalar_lea.vmem [#allocation7], 160
      %v1122 = vpack.c.bf16 0.0, %v1120
      %s1124 = ssub.s32 16, 1
      %1125 = vst [vmem:[%s1121] sm:%s1124] %v1122
      %s1126 = scalar_lea.vmem %s500, 164
      %s1128 = sor.u32 255, 127
      %s1129 = sand.u32 %s1128, 85
      %s1130 = sshrl.u32 %s1129, 1
      %s1131 = sor.u32 %s1129, %s1130
      %s1132 = sand.u32 51, %s1131
      %s1133 = sshrl.u32 %s1132, 2
      %s1134 = sor.u32 %s1132, %s1133
      %s1135 = sand.u32 15, %s1134
      %v1136 = vld [vmem:[%s1126] sm:%s1135]
      %v1137 = vunpack.c.l.bf16 %v1136
      %v1138 = vunpack.c.h.bf16 %v1136
      %v1139 = vlaneseq
      %v1140 = vand.u32 %v1139, 127
      %v1141 = vadd.s32 %v1140, 768
      %vm1142 = vcmp.lt.s32.totalorder %v1141, 784
      %v1143 = vsel %vm1142, %v1137, %v22
      %s1144 = scalar_lea.vmem [#allocation7], 164
      %v1145 = vpack.c.bf16 0.0, %v1143
      %s1147 = ssub.s32 16, 1
      %1148 = vst [vmem:[%s1144] sm:%s1147] %v1145
      %s1149 = scalar_lea.vmem %s500, 168
      %v1150 = vld [vmem:[%s1149] sm:$0xf]
      %v1151 = vunpack.c.l.bf16 %v1150
      %v1152 = vunpack.c.h.bf16 %v1150
      %v1153 = vlaneseq
      %v1154 = vand.u32 %v1153, 127
      %vm1156 = vcmp.lt.s32.totalorder %v1154, 784
      %v1157 = vsel %vm1156, %v1151, %v22
      %s1158 = scalar_lea.vmem [#allocation7], 168
      %v1159 = vpack.c.bf16 0.0, %v1157
      %s1161 = ssub.s32 16, 1
      %1162 = vst [vmem:[%s1158] sm:%s1161] %v1159
      %s1163 = scalar_lea.vmem %s500, 172
      %v1164 = vld [vmem:[%s1163] sm:$0xf]
      %v1165 = vunpack.c.l.bf16 %v1164
      %v1166 = vunpack.c.h.bf16 %v1164
      %v1167 = vlaneseq
      %v1168 = vand.u32 %v1167, 127
      %v1169 = vadd.s32 %v1168, 128
      %vm1170 = vcmp.lt.s32.totalorder %v1169, 784
      %v1171 = vsel %vm1170, %v1165, %v22
      %s1172 = scalar_lea.vmem [#allocation7], 172
      %v1173 = vpack.c.bf16 0.0, %v1171
      %s1175 = ssub.s32 16, 1
      %1176 = vst [vmem:[%s1172] sm:%s1175] %v1173
      %s1177 = scalar_lea.vmem %s500, 176
      %v1178 = vld [vmem:[%s1177] sm:$0xf]
      %v1179 = vunpack.c.l.bf16 %v1178
      %v1180 = vunpack.c.h.bf16 %v1178
      %v1181 = vlaneseq
      %v1182 = vand.u32 %v1181, 127
      %v1183 = vadd.s32 %v1182, 256
      %vm1184 = vcmp.lt.s32.totalorder %v1183, 784
      %v1185 = vsel %vm1184, %v1179, %v22
      %s1186 = scalar_lea.vmem [#allocation7], 176
      %v1187 = vpack.c.bf16 0.0, %v1185
      %s1189 = ssub.s32 16, 1
      %1190 = vst [vmem:[%s1186] sm:%s1189] %v1187
      %s1191 = scalar_lea.vmem %s500, 180
      %v1192 = vld [vmem:[%s1191] sm:$0xf]
      %v1193 = vunpack.c.l.bf16 %v1192
      %v1194 = vunpack.c.h.bf16 %v1192
      %v1195 = vlaneseq
      %v1196 = vand.u32 %v1195, 127
      %v1197 = vadd.s32 %v1196, 384
      %vm1198 = vcmp.lt.s32.totalorder %v1197, 784
      %v1199 = vsel %vm1198, %v1193, %v22
      %s1200 = scalar_lea.vmem [#allocation7], 180
      %v1201 = vpack.c.bf16 0.0, %v1199
      %s1203 = ssub.s32 16, 1
      %1204 = vst [vmem:[%s1200] sm:%s1203] %v1201
      %s1205 = scalar_lea.vmem %s500, 184
      %v1206 = vld [vmem:[%s1205] sm:$0xf]
      %v1207 = vunpack.c.l.bf16 %v1206
      %v1208 = vunpack.c.h.bf16 %v1206
      %v1209 = vlaneseq
      %v1210 = vand.u32 %v1209, 127
      %v1211 = vadd.s32 %v1210, 512
      %vm1212 = vcmp.lt.s32.totalorder %v1211, 784
      %v1213 = vsel %vm1212, %v1207, %v22
      %s1214 = scalar_lea.vmem [#allocation7], 184
      %v1215 = vpack.c.bf16 0.0, %v1213
      %s1217 = ssub.s32 16, 1
      %1218 = vst [vmem:[%s1214] sm:%s1217] %v1215
      %s1219 = scalar_lea.vmem %s500, 188
      %v1220 = vld [vmem:[%s1219] sm:$0xf]
      %v1221 = vunpack.c.l.bf16 %v1220
      %v1222 = vunpack.c.h.bf16 %v1220
      %v1223 = vlaneseq
      %v1224 = vand.u32 %v1223, 127
      %v1225 = vadd.s32 %v1224, 640
      %vm1226 = vcmp.lt.s32.totalorder %v1225, 784
      %v1227 = vsel %vm1226, %v1221, %v22
      %s1228 = scalar_lea.vmem [#allocation7], 188
      %v1229 = vpack.c.bf16 0.0, %v1227
      %s1231 = ssub.s32 16, 1
      %1232 = vst [vmem:[%s1228] sm:%s1231] %v1229
      %s1233 = scalar_lea.vmem %s500, 192
      %s1235 = sor.u32 255, 127
      %s1236 = sand.u32 %s1235, 85
      %s1237 = sshrl.u32 %s1236, 1
      %s1238 = sor.u32 %s1236, %s1237
      %s1239 = sand.u32 51, %s1238
      %s1240 = sshrl.u32 %s1239, 2
      %s1241 = sor.u32 %s1239, %s1240
      %s1242 = sand.u32 15, %s1241
      %v1243 = vld [vmem:[%s1233] sm:%s1242]
      %v1244 = vunpack.c.l.bf16 %v1243
      %v1245 = vunpack.c.h.bf16 %v1243
      %v1246 = vlaneseq
      %v1247 = vand.u32 %v1246, 127
      %v1248 = vadd.s32 %v1247, 768
      %vm1249 = vcmp.lt.s32.totalorder %v1248, 784
      %v1250 = vsel %vm1249, %v1244, %v22
      %s1251 = scalar_lea.vmem [#allocation7], 192
      %v1252 = vpack.c.bf16 0.0, %v1250
      %s1254 = ssub.s32 16, 1
      %1255 = vst [vmem:[%s1251] sm:%s1254] %v1252
      %s1256 = scalar_lea.vmem %s500, 196
      %v1257 = vld [vmem:[%s1256] sm:$0xf]
      %v1258 = vunpack.c.l.bf16 %v1257
      %v1259 = vunpack.c.h.bf16 %v1257
      %v1260 = vlaneseq
      %v1261 = vand.u32 %v1260, 127
      %vm1263 = vcmp.lt.s32.totalorder %v1261, 784
      %v1264 = vsel %vm1263, %v1258, %v22
      %s1265 = scalar_lea.vmem [#allocation7], 196
      %v1266 = vpack.c.bf16 0.0, %v1264
      %s1268 = ssub.s32 16, 1
      %1269 = vst [vmem:[%s1265] sm:%s1268] %v1266
      %s1270 = scalar_lea.vmem %s500, 200
      %v1271 = vld [vmem:[%s1270] sm:$0xf]
      %v1272 = vunpack.c.l.bf16 %v1271
      %v1273 = vunpack.c.h.bf16 %v1271
      %v1274 = vlaneseq
      %v1275 = vand.u32 %v1274, 127
      %v1276 = vadd.s32 %v1275, 128
      %vm1277 = vcmp.lt.s32.totalorder %v1276, 784
      %v1278 = vsel %vm1277, %v1272, %v22
      %s1279 = scalar_lea.vmem [#allocation7], 200
      %v1280 = vpack.c.bf16 0.0, %v1278
      %s1282 = ssub.s32 16, 1
      %1283 = vst [vmem:[%s1279] sm:%s1282] %v1280
      %s1284 = scalar_lea.vmem %s500, 204
      %v1285 = vld [vmem:[%s1284] sm:$0xf]
      %v1286 = vunpack.c.l.bf16 %v1285
      %v1287 = vunpack.c.h.bf16 %v1285
      %v1288 = vlaneseq
      %v1289 = vand.u32 %v1288, 127
      %v1290 = vadd.s32 %v1289, 256
      %vm1291 = vcmp.lt.s32.totalorder %v1290, 784
      %v1292 = vsel %vm1291, %v1286, %v22
      %s1293 = scalar_lea.vmem [#allocation7], 204
      %v1294 = vpack.c.bf16 0.0, %v1292
      %s1296 = ssub.s32 16, 1
      %1297 = vst [vmem:[%s1293] sm:%s1296] %v1294
      %s1298 = scalar_lea.vmem %s500, 208
      %v1299 = vld [vmem:[%s1298] sm:$0xf]
      %v1300 = vunpack.c.l.bf16 %v1299
      %v1301 = vunpack.c.h.bf16 %v1299
      %v1302 = vlaneseq
      %v1303 = vand.u32 %v1302, 127
      %v1304 = vadd.s32 %v1303, 384
      %vm1305 = vcmp.lt.s32.totalorder %v1304, 784
      %v1306 = vsel %vm1305, %v1300, %v22
      %s1307 = scalar_lea.vmem [#allocation7], 208
      %v1308 = vpack.c.bf16 0.0, %v1306
      %s1310 = ssub.s32 16, 1
      %1311 = vst [vmem:[%s1307] sm:%s1310] %v1308
      %s1312 = scalar_lea.vmem %s500, 212
      %v1313 = vld [vmem:[%s1312] sm:$0xf]
      %v1314 = vunpack.c.l.bf16 %v1313
      %v1315 = vunpack.c.h.bf16 %v1313
      %v1316 = vlaneseq
      %v1317 = vand.u32 %v1316, 127
      %v1318 = vadd.s32 %v1317, 512
      %vm1319 = vcmp.lt.s32.totalorder %v1318, 784
      %v1320 = vsel %vm1319, %v1314, %v22
      %s1321 = scalar_lea.vmem [#allocation7], 212
      %v1322 = vpack.c.bf16 0.0, %v1320
      %s1324 = ssub.s32 16, 1
      %1325 = vst [vmem:[%s1321] sm:%s1324] %v1322
      %s1326 = scalar_lea.vmem %s500, 216
      %v1327 = vld [vmem:[%s1326] sm:$0xf]
      %v1328 = vunpack.c.l.bf16 %v1327
      %v1329 = vunpack.c.h.bf16 %v1327
      %v1330 = vlaneseq
      %v1331 = vand.u32 %v1330, 127
      %v1332 = vadd.s32 %v1331, 640
      %vm1333 = vcmp.lt.s32.totalorder %v1332, 784
      %v1334 = vsel %vm1333, %v1328, %v22
      %s1335 = scalar_lea.vmem [#allocation7], 216
      %v1336 = vpack.c.bf16 0.0, %v1334
      %s1338 = ssub.s32 16, 1
      %1339 = vst [vmem:[%s1335] sm:%s1338] %v1336
      %s1340 = scalar_lea.vmem %s500, 220
      %s1342 = sor.u32 255, 127
      %s1343 = sand.u32 %s1342, 85
      %s1344 = sshrl.u32 %s1343, 1
      %s1345 = sor.u32 %s1343, %s1344
      %s1346 = sand.u32 51, %s1345
      %s1347 = sshrl.u32 %s1346, 2
      %s1348 = sor.u32 %s1346, %s1347
      %s1349 = sand.u32 15, %s1348
      %v1350 = vld [vmem:[%s1340] sm:%s1349]
      %v1351 = vunpack.c.l.bf16 %v1350
      %v1352 = vunpack.c.h.bf16 %v1350
      %v1353 = vlaneseq
      %v1354 = vand.u32 %v1353, 127
      %v1355 = vadd.s32 %v1354, 768
      %vm1356 = vcmp.lt.s32.totalorder %v1355, 784
      %v1357 = vsel %vm1356, %v1351, %v22
      %s1358 = scalar_lea.vmem [#allocation7], 220
      %v1359 = vpack.c.bf16 0.0, %v1357
      %s1361 = ssub.s32 16, 1
      %1362 = vst [vmem:[%s1358] sm:%s1361] %v1359
      %s1363 = scalar_lea.vmem %s500, 224
      %v1364 = vld [vmem:[%s1363] sm:$0xf]
      %v1365 = vunpack.c.l.bf16 %v1364
      %v1366 = vunpack.c.h.bf16 %v1364
      %v1367 = vlaneseq
      %v1368 = vand.u32 %v1367, 127
      %vm1370 = vcmp.lt.s32.totalorder %v1368, 784
      %v1371 = vsel %vm1370, %v1365, %v22
      %s1372 = scalar_lea.vmem [#allocation7], 224
      %v1373 = vpack.c.bf16 0.0, %v1371
      %s1375 = ssub.s32 16, 1
      %1376 = vst [vmem:[%s1372] sm:%s1375] %v1373
      %s1377 = scalar_lea.vmem %s500, 228
      %v1378 = vld [vmem:[%s1377] sm:$0xf]
      %v1379 = vunpack.c.l.bf16 %v1378
      %v1380 = vunpack.c.h.bf16 %v1378
      %v1381 = vlaneseq
      %v1382 = vand.u32 %v1381, 127
      %v1383 = vadd.s32 %v1382, 128
      %vm1384 = vcmp.lt.s32.totalorder %v1383, 784
      %v1385 = vsel %vm1384, %v1379, %v22
      %s1386 = scalar_lea.vmem [#allocation7], 228
      %v1387 = vpack.c.bf16 0.0, %v1385
      %s1389 = ssub.s32 16, 1
      %1390 = vst [vmem:[%s1386] sm:%s1389] %v1387
      %s1391 = scalar_lea.vmem %s500, 232
      %v1392 = vld [vmem:[%s1391] sm:$0xf]
      %v1393 = vunpack.c.l.bf16 %v1392
      %v1394 = vunpack.c.h.bf16 %v1392
      %v1395 = vlaneseq
      %v1396 = vand.u32 %v1395, 127
      %v1397 = vadd.s32 %v1396, 256
      %vm1398 = vcmp.lt.s32.totalorder %v1397, 784
      %v1399 = vsel %vm1398, %v1393, %v22
      %s1400 = scalar_lea.vmem [#allocation7], 232
      %v1401 = vpack.c.bf16 0.0, %v1399
      %s1403 = ssub.s32 16, 1
      %1404 = vst [vmem:[%s1400] sm:%s1403] %v1401
      %s1405 = scalar_lea.vmem %s500, 236
      %v1406 = vld [vmem:[%s1405] sm:$0xf]
      %v1407 = vunpack.c.l.bf16 %v1406
      %v1408 = vunpack.c.h.bf16 %v1406
      %v1409 = vlaneseq
      %v1410 = vand.u32 %v1409, 127
      %v1411 = vadd.s32 %v1410, 384
      %vm1412 = vcmp.lt.s32.totalorder %v1411, 784
      %v1413 = vsel %vm1412, %v1407, %v22
      %s1414 = scalar_lea.vmem [#allocation7], 236
      %v1415 = vpack.c.bf16 0.0, %v1413
      %s1417 = ssub.s32 16, 1
      %1418 = vst [vmem:[%s1414] sm:%s1417] %v1415
      %s1419 = scalar_lea.vmem %s500, 240
      %v1420 = vld [vmem:[%s1419] sm:$0xf]
      %v1421 = vunpack.c.l.bf16 %v1420
      %v1422 = vunpack.c.h.bf16 %v1420
      %v1423 = vlaneseq
      %v1424 = vand.u32 %v1423, 127
      %v1425 = vadd.s32 %v1424, 512
      %vm1426 = vcmp.lt.s32.totalorder %v1425, 784
      %v1427 = vsel %vm1426, %v1421, %v22
      %s1428 = scalar_lea.vmem [#allocation7], 240
      %v1429 = vpack.c.bf16 0.0, %v1427
      %s1431 = ssub.s32 16, 1
      %1432 = vst [vmem:[%s1428] sm:%s1431] %v1429
      %s1433 = scalar_lea.vmem %s500, 244
      %v1434 = vld [vmem:[%s1433] sm:$0xf]
      %v1435 = vunpack.c.l.bf16 %v1434
      %v1436 = vunpack.c.h.bf16 %v1434
      %v1437 = vlaneseq
      %v1438 = vand.u32 %v1437, 127
      %v1439 = vadd.s32 %v1438, 640
      %vm1440 = vcmp.lt.s32.totalorder %v1439, 784
      %v1441 = vsel %vm1440, %v1435, %v22
      %s1442 = scalar_lea.vmem [#allocation7], 244
      %v1443 = vpack.c.bf16 0.0, %v1441
      %s1445 = ssub.s32 16, 1
      %1446 = vst [vmem:[%s1442] sm:%s1445] %v1443
      %s1447 = scalar_lea.vmem %s500, 248
      %s1449 = sor.u32 255, 127
      %s1450 = sand.u32 %s1449, 85
      %s1451 = sshrl.u32 %s1450, 1
      %s1452 = sor.u32 %s1450, %s1451
      %s1453 = sand.u32 51, %s1452
      %s1454 = sshrl.u32 %s1453, 2
      %s1455 = sor.u32 %s1453, %s1454
      %s1456 = sand.u32 15, %s1455
      %v1457 = vld [vmem:[%s1447] sm:%s1456]
      %v1458 = vunpack.c.l.bf16 %v1457
      %v1459 = vunpack.c.h.bf16 %v1457
      %v1460 = vlaneseq
      %v1461 = vand.u32 %v1460, 127
      %v1462 = vadd.s32 %v1461, 768
      %vm1463 = vcmp.lt.s32.totalorder %v1462, 784
      %v1464 = vsel %vm1463, %v1458, %v22
      %s1465 = scalar_lea.vmem [#allocation7], 248
      %v1466 = vpack.c.bf16 0.0, %v1464
      %s1468 = ssub.s32 16, 1
      %1469 = vst [vmem:[%s1465] sm:%s1468] %v1466
      %s1470 = scalar_lea.vmem %s500, 252
      %v1471 = vld [vmem:[%s1470] sm:$0xf]
      %v1472 = vunpack.c.l.bf16 %v1471
      %v1473 = vunpack.c.h.bf16 %v1471
      %v1474 = vlaneseq
      %v1475 = vand.u32 %v1474, 127
      %vm1477 = vcmp.lt.s32.totalorder %v1475, 784
      %v1478 = vsel %vm1477, %v1472, %v22
      %s1479 = scalar_lea.vmem [#allocation7], 252
      %v1480 = vpack.c.bf16 0.0, %v1478
      %s1482 = ssub.s32 16, 1
      %1483 = vst [vmem:[%s1479] sm:%s1482] %v1480
      %s1484 = scalar_lea.vmem %s500, 256
      %v1485 = vld [vmem:[%s1484] sm:$0xf]
      %v1486 = vunpack.c.l.bf16 %v1485
      %v1487 = vunpack.c.h.bf16 %v1485
      %v1488 = vlaneseq
      %v1489 = vand.u32 %v1488, 127
      %v1490 = vadd.s32 %v1489, 128
      %vm1491 = vcmp.lt.s32.totalorder %v1490, 784
      %v1492 = vsel %vm1491, %v1486, %v22
      %s1493 = scalar_lea.vmem [#allocation7], 256
      %v1494 = vpack.c.bf16 0.0, %v1492
      %s1496 = ssub.s32 16, 1
      %1497 = vst [vmem:[%s1493] sm:%s1496] %v1494
      %s1498 = scalar_lea.vmem %s500, 260
      %v1499 = vld [vmem:[%s1498] sm:$0xf]
      %v1500 = vunpack.c.l.bf16 %v1499
      %v1501 = vunpack.c.h.bf16 %v1499
      %v1502 = vlaneseq
      %v1503 = vand.u32 %v1502, 127
      %v1504 = vadd.s32 %v1503, 256
      %vm1505 = vcmp.lt.s32.totalorder %v1504, 784
      %v1506 = vsel %vm1505, %v1500, %v22
      %s1507 = scalar_lea.vmem [#allocation7], 260
      %v1508 = vpack.c.bf16 0.0, %v1506
      %s1510 = ssub.s32 16, 1
      %1511 = vst [vmem:[%s1507] sm:%s1510] %v1508
      %s1512 = scalar_lea.vmem %s500, 264
      %v1513 = vld [vmem:[%s1512] sm:$0xf]
      %v1514 = vunpack.c.l.bf16 %v1513
      %v1515 = vunpack.c.h.bf16 %v1513
      %v1516 = vlaneseq
      %v1517 = vand.u32 %v1516, 127
      %v1518 = vadd.s32 %v1517, 384
      %vm1519 = vcmp.lt.s32.totalorder %v1518, 784
      %v1520 = vsel %vm1519, %v1514, %v22
      %s1521 = scalar_lea.vmem [#allocation7], 264
      %v1522 = vpack.c.bf16 0.0, %v1520
      %s1524 = ssub.s32 16, 1
      %1525 = vst [vmem:[%s1521] sm:%s1524] %v1522
      %s1526 = scalar_lea.vmem %s500, 268
      %v1527 = vld [vmem:[%s1526] sm:$0xf]
      %v1528 = vunpack.c.l.bf16 %v1527
      %v1529 = vunpack.c.h.bf16 %v1527
      %v1530 = vlaneseq
      %v1531 = vand.u32 %v1530, 127
      %v1532 = vadd.s32 %v1531, 512
      %vm1533 = vcmp.lt.s32.totalorder %v1532, 784
      %v1534 = vsel %vm1533, %v1528, %v22
      %s1535 = scalar_lea.vmem [#allocation7], 268
      %v1536 = vpack.c.bf16 0.0, %v1534
      %s1538 = ssub.s32 16, 1
      %1539 = vst [vmem:[%s1535] sm:%s1538] %v1536
      %s1540 = scalar_lea.vmem %s500, 272
      %v1541 = vld [vmem:[%s1540] sm:$0xf]
      %v1542 = vunpack.c.l.bf16 %v1541
      %v1543 = vunpack.c.h.bf16 %v1541
      %v1544 = vlaneseq
      %v1545 = vand.u32 %v1544, 127
      %v1546 = vadd.s32 %v1545, 640
      %vm1547 = vcmp.lt.s32.totalorder %v1546, 784
      %v1548 = vsel %vm1547, %v1542, %v22
      %s1549 = scalar_lea.vmem [#allocation7], 272
      %v1550 = vpack.c.bf16 0.0, %v1548
      %s1552 = ssub.s32 16, 1
      %1553 = vst [vmem:[%s1549] sm:%s1552] %v1550
      %s1554 = scalar_lea.vmem %s500, 276
      %s1556 = sor.u32 255, 127
      %s1557 = sand.u32 %s1556, 85
      %s1558 = sshrl.u32 %s1557, 1
      %s1559 = sor.u32 %s1557, %s1558
      %s1560 = sand.u32 51, %s1559
      %s1561 = sshrl.u32 %s1560, 2
      %s1562 = sor.u32 %s1560, %s1561
      %s1563 = sand.u32 15, %s1562
      %v1564 = vld [vmem:[%s1554] sm:%s1563]
      %v1565 = vunpack.c.l.bf16 %v1564
      %v1566 = vunpack.c.h.bf16 %v1564
      %v1567 = vlaneseq
      %v1568 = vand.u32 %v1567, 127
      %v1569 = vadd.s32 %v1568, 768
      %vm1570 = vcmp.lt.s32.totalorder %v1569, 784
      %v1571 = vsel %vm1570, %v1565, %v22
      %s1572 = scalar_lea.vmem [#allocation7], 276
      %v1573 = vpack.c.bf16 0.0, %v1571
      %s1575 = ssub.s32 16, 1
      %1576 = vst [vmem:[%s1572] sm:%s1575] %v1573
      %s1577 = scalar_lea.vmem %s500, 280
      %v1578 = vld [vmem:[%s1577] sm:$0xf]
      %v1579 = vunpack.c.l.bf16 %v1578
      %v1580 = vunpack.c.h.bf16 %v1578
      %v1581 = vlaneseq
      %v1582 = vand.u32 %v1581, 127
      %vm1584 = vcmp.lt.s32.totalorder %v1582, 784
      %v1585 = vsel %vm1584, %v1579, %v22
      %s1586 = scalar_lea.vmem [#allocation7], 280
      %v1587 = vpack.c.bf16 0.0, %v1585
      %s1589 = ssub.s32 16, 1
      %1590 = vst [vmem:[%s1586] sm:%s1589] %v1587
      %s1591 = scalar_lea.vmem %s500, 284
      %v1592 = vld [vmem:[%s1591] sm:$0xf]
      %v1593 = vunpack.c.l.bf16 %v1592
      %v1594 = vunpack.c.h.bf16 %v1592
      %v1595 = vlaneseq
      %v1596 = vand.u32 %v1595, 127
      %v1597 = vadd.s32 %v1596, 128
      %vm1598 = vcmp.lt.s32.totalorder %v1597, 784
      %v1599 = vsel %vm1598, %v1593, %v22
      %s1600 = scalar_lea.vmem [#allocation7], 284
      %v1601 = vpack.c.bf16 0.0, %v1599
      %s1603 = ssub.s32 16, 1
      %1604 = vst [vmem:[%s1600] sm:%s1603] %v1601
      %s1605 = scalar_lea.vmem %s500, 288
      %v1606 = vld [vmem:[%s1605] sm:$0xf]
      %v1607 = vunpack.c.l.bf16 %v1606
      %v1608 = vunpack.c.h.bf16 %v1606
      %v1609 = vlaneseq
      %v1610 = vand.u32 %v1609, 127
      %v1611 = vadd.s32 %v1610, 256
      %vm1612 = vcmp.lt.s32.totalorder %v1611, 784
      %v1613 = vsel %vm1612, %v1607, %v22
      %s1614 = scalar_lea.vmem [#allocation7], 288
      %v1615 = vpack.c.bf16 0.0, %v1613
      %s1617 = ssub.s32 16, 1
      %1618 = vst [vmem:[%s1614] sm:%s1617] %v1615
      %s1619 = scalar_lea.vmem %s500, 292
      %v1620 = vld [vmem:[%s1619] sm:$0xf]
      %v1621 = vunpack.c.l.bf16 %v1620
      %v1622 = vunpack.c.h.bf16 %v1620
      %v1623 = vlaneseq
      %v1624 = vand.u32 %v1623, 127
      %v1625 = vadd.s32 %v1624, 384
      %vm1626 = vcmp.lt.s32.totalorder %v1625, 784
      %v1627 = vsel %vm1626, %v1621, %v22
      %s1628 = scalar_lea.vmem [#allocation7], 292
      %v1629 = vpack.c.bf16 0.0, %v1627
      %s1631 = ssub.s32 16, 1
      %1632 = vst [vmem:[%s1628] sm:%s1631] %v1629
      %s1633 = scalar_lea.vmem %s500, 296
      %v1634 = vld [vmem:[%s1633] sm:$0xf]
      %v1635 = vunpack.c.l.bf16 %v1634
      %v1636 = vunpack.c.h.bf16 %v1634
      %v1637 = vlaneseq
      %v1638 = vand.u32 %v1637, 127
      %v1639 = vadd.s32 %v1638, 512
      %vm1640 = vcmp.lt.s32.totalorder %v1639, 784
      %v1641 = vsel %vm1640, %v1635, %v22
      %s1642 = scalar_lea.vmem [#allocation7], 296
      %v1643 = vpack.c.bf16 0.0, %v1641
      %s1645 = ssub.s32 16, 1
      %1646 = vst [vmem:[%s1642] sm:%s1645] %v1643
      %s1647 = scalar_lea.vmem %s500, 300
      %v1648 = vld [vmem:[%s1647] sm:$0xf]
      %v1649 = vunpack.c.l.bf16 %v1648
      %v1650 = vunpack.c.h.bf16 %v1648
      %v1651 = vlaneseq
      %v1652 = vand.u32 %v1651, 127
      %v1653 = vadd.s32 %v1652, 640
      %vm1654 = vcmp.lt.s32.totalorder %v1653, 784
      %v1655 = vsel %vm1654, %v1649, %v22
      %s1656 = scalar_lea.vmem [#allocation7], 300
      %v1657 = vpack.c.bf16 0.0, %v1655
      %s1659 = ssub.s32 16, 1
      %1660 = vst [vmem:[%s1656] sm:%s1659] %v1657
      %s1661 = scalar_lea.vmem %s500, 304
      %s1663 = sor.u32 255, 127
      %s1664 = sand.u32 %s1663, 85
      %s1665 = sshrl.u32 %s1664, 1
      %s1666 = sor.u32 %s1664, %s1665
      %s1667 = sand.u32 51, %s1666
      %s1668 = sshrl.u32 %s1667, 2
      %s1669 = sor.u32 %s1667, %s1668
      %s1670 = sand.u32 15, %s1669
      %v1671 = vld [vmem:[%s1661] sm:%s1670]
      %v1672 = vunpack.c.l.bf16 %v1671
      %v1673 = vunpack.c.h.bf16 %v1671
      %v1674 = vlaneseq
      %v1675 = vand.u32 %v1674, 127
      %v1676 = vadd.s32 %v1675, 768
      %vm1677 = vcmp.lt.s32.totalorder %v1676, 784
      %v1678 = vsel %vm1677, %v1672, %v22
      %s1679 = scalar_lea.vmem [#allocation7], 304
      %v1680 = vpack.c.bf16 0.0, %v1678
      %s1682 = ssub.s32 16, 1
      %1683 = vst [vmem:[%s1679] sm:%s1682] %v1680
      %s1684 = scalar_lea.vmem %s500, 308
      %v1685 = vld [vmem:[%s1684] sm:$0xf]
      %v1686 = vunpack.c.l.bf16 %v1685
      %v1687 = vunpack.c.h.bf16 %v1685
      %v1688 = vlaneseq
      %v1689 = vand.u32 %v1688, 127
      %vm1691 = vcmp.lt.s32.totalorder %v1689, 784
      %v1692 = vsel %vm1691, %v1686, %v22
      %s1693 = scalar_lea.vmem [#allocation7], 308
      %v1694 = vpack.c.bf16 0.0, %v1692
      %s1696 = ssub.s32 16, 1
      %1697 = vst [vmem:[%s1693] sm:%s1696] %v1694
      %s1698 = scalar_lea.vmem %s500, 312
      %v1699 = vld [vmem:[%s1698] sm:$0xf]
      %v1700 = vunpack.c.l.bf16 %v1699
      %v1701 = vunpack.c.h.bf16 %v1699
      %v1702 = vlaneseq
      %v1703 = vand.u32 %v1702, 127
      %v1704 = vadd.s32 %v1703, 128
      %vm1705 = vcmp.lt.s32.totalorder %v1704, 784
      %v1706 = vsel %vm1705, %v1700, %v22
      %s1707 = scalar_lea.vmem [#allocation7], 312
      %v1708 = vpack.c.bf16 0.0, %v1706
      %s1710 = ssub.s32 16, 1
      %1711 = vst [vmem:[%s1707] sm:%s1710] %v1708
      %s1712 = scalar_lea.vmem %s500, 316
      %v1713 = vld [vmem:[%s1712] sm:$0xf]
      %v1714 = vunpack.c.l.bf16 %v1713
      %v1715 = vunpack.c.h.bf16 %v1713
      %v1716 = vlaneseq
      %v1717 = vand.u32 %v1716, 127
      %v1718 = vadd.s32 %v1717, 256
      %vm1719 = vcmp.lt.s32.totalorder %v1718, 784
      %v1720 = vsel %vm1719, %v1714, %v22
      %s1721 = scalar_lea.vmem [#allocation7], 316
      %v1722 = vpack.c.bf16 0.0, %v1720
      %s1724 = ssub.s32 16, 1
      %1725 = vst [vmem:[%s1721] sm:%s1724] %v1722
      %s1726 = scalar_lea.vmem %s500, 320
      %v1727 = vld [vmem:[%s1726] sm:$0xf]
      %v1728 = vunpack.c.l.bf16 %v1727
      %v1729 = vunpack.c.h.bf16 %v1727
      %v1730 = vlaneseq
      %v1731 = vand.u32 %v1730, 127
      %v1732 = vadd.s32 %v1731, 384
      %vm1733 = vcmp.lt.s32.totalorder %v1732, 784
      %v1734 = vsel %vm1733, %v1728, %v22
      %s1735 = scalar_lea.vmem [#allocation7], 320
      %v1736 = vpack.c.bf16 0.0, %v1734
      %s1738 = ssub.s32 16, 1
      %1739 = vst [vmem:[%s1735] sm:%s1738] %v1736
      %s1740 = scalar_lea.vmem %s500, 324
      %v1741 = vld [vmem:[%s1740] sm:$0xf]
      %v1742 = vunpack.c.l.bf16 %v1741
      %v1743 = vunpack.c.h.bf16 %v1741
      %v1744 = vlaneseq
      %v1745 = vand.u32 %v1744, 127
      %v1746 = vadd.s32 %v1745, 512
      %vm1747 = vcmp.lt.s32.totalorder %v1746, 784
      %v1748 = vsel %vm1747, %v1742, %v22
      %s1749 = scalar_lea.vmem [#allocation7], 324
      %v1750 = vpack.c.bf16 0.0, %v1748
      %s1752 = ssub.s32 16, 1
      %1753 = vst [vmem:[%s1749] sm:%s1752] %v1750
      %s1754 = scalar_lea.vmem %s500, 328
      %v1755 = vld [vmem:[%s1754] sm:$0xf]
      %v1756 = vunpack.c.l.bf16 %v1755
      %v1757 = vunpack.c.h.bf16 %v1755
      %v1758 = vlaneseq
      %v1759 = vand.u32 %v1758, 127
      %v1760 = vadd.s32 %v1759, 640
      %vm1761 = vcmp.lt.s32.totalorder %v1760, 784
      %v1762 = vsel %vm1761, %v1756, %v22
      %s1763 = scalar_lea.vmem [#allocation7], 328
      %v1764 = vpack.c.bf16 0.0, %v1762
      %s1766 = ssub.s32 16, 1
      %1767 = vst [vmem:[%s1763] sm:%s1766] %v1764
      %s1768 = scalar_lea.vmem %s500, 332
      %s1770 = sor.u32 255, 127
      %s1771 = sand.u32 %s1770, 85
      %s1772 = sshrl.u32 %s1771, 1
      %s1773 = sor.u32 %s1771, %s1772
      %s1774 = sand.u32 51, %s1773
      %s1775 = sshrl.u32 %s1774, 2
      %s1776 = sor.u32 %s1774, %s1775
      %s1777 = sand.u32 15, %s1776
      %v1778 = vld [vmem:[%s1768] sm:%s1777]
      %v1779 = vunpack.c.l.bf16 %v1778
      %v1780 = vunpack.c.h.bf16 %v1778
      %v1781 = vlaneseq
      %v1782 = vand.u32 %v1781, 127
      %v1783 = vadd.s32 %v1782, 768
      %vm1784 = vcmp.lt.s32.totalorder %v1783, 784
      %v1785 = vsel %vm1784, %v1779, %v22
      %s1786 = scalar_lea.vmem [#allocation7], 332
      %v1787 = vpack.c.bf16 0.0, %v1785
      %s1789 = ssub.s32 16, 1
      %1790 = vst [vmem:[%s1786] sm:%s1789] %v1787
      %s1791 = scalar_lea.vmem %s500, 336
      %v1792 = vld [vmem:[%s1791] sm:$0xf]
      %v1793 = vunpack.c.l.bf16 %v1792
      %v1794 = vunpack.c.h.bf16 %v1792
      %v1795 = vlaneseq
      %v1796 = vand.u32 %v1795, 127
      %vm1798 = vcmp.lt.s32.totalorder %v1796, 784
      %v1799 = vsel %vm1798, %v1793, %v22
      %s1800 = scalar_lea.vmem [#allocation7], 336
      %v1801 = vpack.c.bf16 0.0, %v1799
      %s1803 = ssub.s32 16, 1
      %1804 = vst [vmem:[%s1800] sm:%s1803] %v1801
      %s1805 = scalar_lea.vmem %s500, 340
      %v1806 = vld [vmem:[%s1805] sm:$0xf]
      %v1807 = vunpack.c.l.bf16 %v1806
      %v1808 = vunpack.c.h.bf16 %v1806
      %v1809 = vlaneseq
      %v1810 = vand.u32 %v1809, 127
      %v1811 = vadd.s32 %v1810, 128
      %vm1812 = vcmp.lt.s32.totalorder %v1811, 784
      %v1813 = vsel %vm1812, %v1807, %v22
      %s1814 = scalar_lea.vmem [#allocation7], 340
      %v1815 = vpack.c.bf16 0.0, %v1813
      %s1817 = ssub.s32 16, 1
      %1818 = vst [vmem:[%s1814] sm:%s1817] %v1815
      %s1819 = scalar_lea.vmem %s500, 344
      %v1820 = vld [vmem:[%s1819] sm:$0xf]
      %v1821 = vunpack.c.l.bf16 %v1820
      %v1822 = vunpack.c.h.bf16 %v1820
      %v1823 = vlaneseq
      %v1824 = vand.u32 %v1823, 127
      %v1825 = vadd.s32 %v1824, 256
      %vm1826 = vcmp.lt.s32.totalorder %v1825, 784
      %v1827 = vsel %vm1826, %v1821, %v22
      %s1828 = scalar_lea.vmem [#allocation7], 344
      %v1829 = vpack.c.bf16 0.0, %v1827
      %s1831 = ssub.s32 16, 1
      %1832 = vst [vmem:[%s1828] sm:%s1831] %v1829
      %s1833 = scalar_lea.vmem %s500, 348
      %v1834 = vld [vmem:[%s1833] sm:$0xf]
      %v1835 = vunpack.c.l.bf16 %v1834
      %v1836 = vunpack.c.h.bf16 %v1834
      %v1837 = vlaneseq
      %v1838 = vand.u32 %v1837, 127
      %v1839 = vadd.s32 %v1838, 384
      %vm1840 = vcmp.lt.s32.totalorder %v1839, 784
      %v1841 = vsel %vm1840, %v1835, %v22
      %s1842 = scalar_lea.vmem [#allocation7], 348
      %v1843 = vpack.c.bf16 0.0, %v1841
      %s1845 = ssub.s32 16, 1
      %1846 = vst [vmem:[%s1842] sm:%s1845] %v1843
      %s1847 = scalar_lea.vmem %s500, 352
      %v1848 = vld [vmem:[%s1847] sm:$0xf]
      %v1849 = vunpack.c.l.bf16 %v1848
      %v1850 = vunpack.c.h.bf16 %v1848
      %v1851 = vlaneseq
      %v1852 = vand.u32 %v1851, 127
      %v1853 = vadd.s32 %v1852, 512
      %vm1854 = vcmp.lt.s32.totalorder %v1853, 784
      %v1855 = vsel %vm1854, %v1849, %v22
      %s1856 = scalar_lea.vmem [#allocation7], 352
      %v1857 = vpack.c.bf16 0.0, %v1855
      %s1859 = ssub.s32 16, 1
      %1860 = vst [vmem:[%s1856] sm:%s1859] %v1857
      %s1861 = scalar_lea.vmem %s500, 356
      %v1862 = vld [vmem:[%s1861] sm:$0xf]
      %v1863 = vunpack.c.l.bf16 %v1862
      %v1864 = vunpack.c.h.bf16 %v1862
      %v1865 = vlaneseq
      %v1866 = vand.u32 %v1865, 127
      %v1867 = vadd.s32 %v1866, 640
      %vm1868 = vcmp.lt.s32.totalorder %v1867, 784
      %v1869 = vsel %vm1868, %v1863, %v22
      %s1870 = scalar_lea.vmem [#allocation7], 356
      %v1871 = vpack.c.bf16 0.0, %v1869
      %s1873 = ssub.s32 16, 1
      %1874 = vst [vmem:[%s1870] sm:%s1873] %v1871
      %s1875 = scalar_lea.vmem %s500, 360
      %s1877 = sor.u32 255, 127
      %s1878 = sand.u32 %s1877, 85
      %s1879 = sshrl.u32 %s1878, 1
      %s1880 = sor.u32 %s1878, %s1879
      %s1881 = sand.u32 51, %s1880
      %s1882 = sshrl.u32 %s1881, 2
      %s1883 = sor.u32 %s1881, %s1882
      %s1884 = sand.u32 15, %s1883
      %v1885 = vld [vmem:[%s1875] sm:%s1884]
      %v1886 = vunpack.c.l.bf16 %v1885
      %v1887 = vunpack.c.h.bf16 %v1885
      %v1888 = vlaneseq
      %v1889 = vand.u32 %v1888, 127
      %v1890 = vadd.s32 %v1889, 768
      %vm1891 = vcmp.lt.s32.totalorder %v1890, 784
      %v1892 = vsel %vm1891, %v1886, %v22
      %s1893 = scalar_lea.vmem [#allocation7], 360
      %v1894 = vpack.c.bf16 0.0, %v1892
      %s1896 = ssub.s32 16, 1
      %1897 = vst [vmem:[%s1893] sm:%s1896] %v1894
      %s1898 = scalar_lea.vmem %s500, 364
      %v1899 = vld [vmem:[%s1898] sm:$0xf]
      %v1900 = vunpack.c.l.bf16 %v1899
      %v1901 = vunpack.c.h.bf16 %v1899
      %v1902 = vlaneseq
      %v1903 = vand.u32 %v1902, 127
      %vm1905 = vcmp.lt.s32.totalorder %v1903, 784
      %v1906 = vsel %vm1905, %v1900, %v22
      %s1907 = scalar_lea.vmem [#allocation7], 364
      %v1908 = vpack.c.bf16 0.0, %v1906
      %s1910 = ssub.s32 16, 1
      %1911 = vst [vmem:[%s1907] sm:%s1910] %v1908
      %s1912 = scalar_lea.vmem %s500, 368
      %v1913 = vld [vmem:[%s1912] sm:$0xf]
      %v1914 = vunpack.c.l.bf16 %v1913
      %v1915 = vunpack.c.h.bf16 %v1913
      %v1916 = vlaneseq
      %v1917 = vand.u32 %v1916, 127
      %v1918 = vadd.s32 %v1917, 128
      %vm1919 = vcmp.lt.s32.totalorder %v1918, 784
      %v1920 = vsel %vm1919, %v1914, %v22
      %s1921 = scalar_lea.vmem [#allocation7], 368
      %v1922 = vpack.c.bf16 0.0, %v1920
      %s1924 = ssub.s32 16, 1
      %1925 = vst [vmem:[%s1921] sm:%s1924] %v1922
      %s1926 = scalar_lea.vmem %s500, 372
      %v1927 = vld [vmem:[%s1926] sm:$0xf]
      %v1928 = vunpack.c.l.bf16 %v1927
      %v1929 = vunpack.c.h.bf16 %v1927
      %v1930 = vlaneseq
      %v1931 = vand.u32 %v1930, 127
      %v1932 = vadd.s32 %v1931, 256
      %vm1933 = vcmp.lt.s32.totalorder %v1932, 784
      %v1934 = vsel %vm1933, %v1928, %v22
      %s1935 = scalar_lea.vmem [#allocation7], 372
      %v1936 = vpack.c.bf16 0.0, %v1934
      %s1938 = ssub.s32 16, 1
      %1939 = vst [vmem:[%s1935] sm:%s1938] %v1936
      %s1940 = scalar_lea.vmem %s500, 376
      %v1941 = vld [vmem:[%s1940] sm:$0xf]
      %v1942 = vunpack.c.l.bf16 %v1941
      %v1943 = vunpack.c.h.bf16 %v1941
      %v1944 = vlaneseq
      %v1945 = vand.u32 %v1944, 127
      %v1946 = vadd.s32 %v1945, 384
      %vm1947 = vcmp.lt.s32.totalorder %v1946, 784
      %v1948 = vsel %vm1947, %v1942, %v22
      %s1949 = scalar_lea.vmem [#allocation7], 376
      %v1950 = vpack.c.bf16 0.0, %v1948
      %s1952 = ssub.s32 16, 1
      %1953 = vst [vmem:[%s1949] sm:%s1952] %v1950
      %s1954 = scalar_lea.vmem %s500, 380
      %v1955 = vld [vmem:[%s1954] sm:$0xf]
      %v1956 = vunpack.c.l.bf16 %v1955
      %v1957 = vunpack.c.h.bf16 %v1955
      %v1958 = vlaneseq
      %v1959 = vand.u32 %v1958, 127
      %v1960 = vadd.s32 %v1959, 512
      %vm1961 = vcmp.lt.s32.totalorder %v1960, 784
      %v1962 = vsel %vm1961, %v1956, %v22
      %s1963 = scalar_lea.vmem [#allocation7], 380
      %v1964 = vpack.c.bf16 0.0, %v1962
      %s1966 = ssub.s32 16, 1
      %1967 = vst [vmem:[%s1963] sm:%s1966] %v1964
      %s1968 = scalar_lea.vmem %s500, 384
      %v1969 = vld [vmem:[%s1968] sm:$0xf]
      %v1970 = vunpack.c.l.bf16 %v1969
      %v1971 = vunpack.c.h.bf16 %v1969
      %v1972 = vlaneseq
      %v1973 = vand.u32 %v1972, 127
      %v1974 = vadd.s32 %v1973, 640
      %vm1975 = vcmp.lt.s32.totalorder %v1974, 784
      %v1976 = vsel %vm1975, %v1970, %v22
      %s1977 = scalar_lea.vmem [#allocation7], 384
      %v1978 = vpack.c.bf16 0.0, %v1976
      %s1980 = ssub.s32 16, 1
      %1981 = vst [vmem:[%s1977] sm:%s1980] %v1978
      %s1982 = scalar_lea.vmem %s500, 388
      %s1984 = sor.u32 255, 127
      %s1985 = sand.u32 %s1984, 85
      %s1986 = sshrl.u32 %s1985, 1
      %s1987 = sor.u32 %s1985, %s1986
      %s1988 = sand.u32 51, %s1987
      %s1989 = sshrl.u32 %s1988, 2
      %s1990 = sor.u32 %s1988, %s1989
      %s1991 = sand.u32 15, %s1990
      %v1992 = vld [vmem:[%s1982] sm:%s1991]
      %v1993 = vunpack.c.l.bf16 %v1992
      %v1994 = vunpack.c.h.bf16 %v1992
      %v1995 = vlaneseq
      %v1996 = vand.u32 %v1995, 127
      %v1997 = vadd.s32 %v1996, 768
      %vm1998 = vcmp.lt.s32.totalorder %v1997, 784
      %v1999 = vsel %vm1998, %v1993, %v22
      %s2000 = scalar_lea.vmem [#allocation7], 388
      %v2001 = vpack.c.bf16 0.0, %v1999
      %s2003 = ssub.s32 16, 1
      %2004 = vst [vmem:[%s2000] sm:%s2003] %v2001
      %s2005 = scalar_lea.vmem %s500, 392
      %v2006 = vld [vmem:[%s2005] sm:$0xf]
      %v2007 = vunpack.c.l.bf16 %v2006
      %v2008 = vunpack.c.h.bf16 %v2006
      %v2009 = vlaneseq
      %v2010 = vand.u32 %v2009, 127
      %vm2012 = vcmp.lt.s32.totalorder %v2010, 784
      %v2013 = vsel %vm2012, %v2007, %v22
      %s2014 = scalar_lea.vmem [#allocation7], 392
      %v2015 = vpack.c.bf16 0.0, %v2013
      %s2017 = ssub.s32 16, 1
      %2018 = vst [vmem:[%s2014] sm:%s2017] %v2015
      %s2019 = scalar_lea.vmem %s500, 396
      %v2020 = vld [vmem:[%s2019] sm:$0xf]
      %v2021 = vunpack.c.l.bf16 %v2020
      %v2022 = vunpack.c.h.bf16 %v2020
      %v2023 = vlaneseq
      %v2024 = vand.u32 %v2023, 127
      %v2025 = vadd.s32 %v2024, 128
      %vm2026 = vcmp.lt.s32.totalorder %v2025, 784
      %v2027 = vsel %vm2026, %v2021, %v22
      %s2028 = scalar_lea.vmem [#allocation7], 396
      %v2029 = vpack.c.bf16 0.0, %v2027
      %s2031 = ssub.s32 16, 1
      %2032 = vst [vmem:[%s2028] sm:%s2031] %v2029
      %s2033 = scalar_lea.vmem %s500, 400
      %v2034 = vld [vmem:[%s2033] sm:$0xf]
      %v2035 = vunpack.c.l.bf16 %v2034
      %v2036 = vunpack.c.h.bf16 %v2034
      %v2037 = vlaneseq
      %v2038 = vand.u32 %v2037, 127
      %v2039 = vadd.s32 %v2038, 256
      %vm2040 = vcmp.lt.s32.totalorder %v2039, 784
      %v2041 = vsel %vm2040, %v2035, %v22
      %s2042 = scalar_lea.vmem [#allocation7], 400
      %v2043 = vpack.c.bf16 0.0, %v2041
      %s2045 = ssub.s32 16, 1
      %2046 = vst [vmem:[%s2042] sm:%s2045] %v2043
      %s2047 = scalar_lea.vmem %s500, 404
      %v2048 = vld [vmem:[%s2047] sm:$0xf]
      %v2049 = vunpack.c.l.bf16 %v2048
      %v2050 = vunpack.c.h.bf16 %v2048
      %v2051 = vlaneseq
      %v2052 = vand.u32 %v2051, 127
      %v2053 = vadd.s32 %v2052, 384
      %vm2054 = vcmp.lt.s32.totalorder %v2053, 784
      %v2055 = vsel %vm2054, %v2049, %v22
      %s2056 = scalar_lea.vmem [#allocation7], 404
      %v2057 = vpack.c.bf16 0.0, %v2055
      %s2059 = ssub.s32 16, 1
      %2060 = vst [vmem:[%s2056] sm:%s2059] %v2057
      %s2061 = scalar_lea.vmem %s500, 408
      %v2062 = vld [vmem:[%s2061] sm:$0xf]
      %v2063 = vunpack.c.l.bf16 %v2062
      %v2064 = vunpack.c.h.bf16 %v2062
      %v2065 = vlaneseq
      %v2066 = vand.u32 %v2065, 127
      %v2067 = vadd.s32 %v2066, 512
      %vm2068 = vcmp.lt.s32.totalorder %v2067, 784
      %v2069 = vsel %vm2068, %v2063, %v22
      %s2070 = scalar_lea.vmem [#allocation7], 408
      %v2071 = vpack.c.bf16 0.0, %v2069
      %s2073 = ssub.s32 16, 1
      %2074 = vst [vmem:[%s2070] sm:%s2073] %v2071
      %s2075 = scalar_lea.vmem %s500, 412
      %v2076 = vld [vmem:[%s2075] sm:$0xf]
      %v2077 = vunpack.c.l.bf16 %v2076
      %v2078 = vunpack.c.h.bf16 %v2076
      %v2079 = vlaneseq
      %v2080 = vand.u32 %v2079, 127
      %v2081 = vadd.s32 %v2080, 640
      %vm2082 = vcmp.lt.s32.totalorder %v2081, 784
      %v2083 = vsel %vm2082, %v2077, %v22
      %s2084 = scalar_lea.vmem [#allocation7], 412
      %v2085 = vpack.c.bf16 0.0, %v2083
      %s2087 = ssub.s32 16, 1
      %2088 = vst [vmem:[%s2084] sm:%s2087] %v2085
      %s2089 = scalar_lea.vmem %s500, 416
      %s2091 = sor.u32 255, 127
      %s2092 = sand.u32 %s2091, 85
      %s2093 = sshrl.u32 %s2092, 1
      %s2094 = sor.u32 %s2092, %s2093
      %s2095 = sand.u32 51, %s2094
      %s2096 = sshrl.u32 %s2095, 2
      %s2097 = sor.u32 %s2095, %s2096
      %s2098 = sand.u32 15, %s2097
      %v2099 = vld [vmem:[%s2089] sm:%s2098]
      %v2100 = vunpack.c.l.bf16 %v2099
      %v2101 = vunpack.c.h.bf16 %v2099
      %v2102 = vlaneseq
      %v2103 = vand.u32 %v2102, 127
      %v2104 = vadd.s32 %v2103, 768
      %vm2105 = vcmp.lt.s32.totalorder %v2104, 784
      %v2106 = vsel %vm2105, %v2100, %v22
      %s2107 = scalar_lea.vmem [#allocation7], 416
      %v2108 = vpack.c.bf16 0.0, %v2106
      %s2110 = ssub.s32 16, 1
      %2111 = vst [vmem:[%s2107] sm:%s2110] %v2108
      %s2112 = scalar_lea.vmem %s500, 420
      %v2113 = vld [vmem:[%s2112] sm:$0xf]
      %v2114 = vunpack.c.l.bf16 %v2113
      %v2115 = vunpack.c.h.bf16 %v2113
      %v2116 = vlaneseq
      %v2117 = vand.u32 %v2116, 127
      %vm2119 = vcmp.lt.s32.totalorder %v2117, 784
      %v2120 = vsel %vm2119, %v2114, %v22
      %s2121 = scalar_lea.vmem [#allocation7], 420
      %v2122 = vpack.c.bf16 0.0, %v2120
      %s2124 = ssub.s32 16, 1
      %2125 = vst [vmem:[%s2121] sm:%s2124] %v2122
      %s2126 = scalar_lea.vmem %s500, 424
      %v2127 = vld [vmem:[%s2126] sm:$0xf]
      %v2128 = vunpack.c.l.bf16 %v2127
      %v2129 = vunpack.c.h.bf16 %v2127
      %v2130 = vlaneseq
      %v2131 = vand.u32 %v2130, 127
      %v2132 = vadd.s32 %v2131, 128
      %vm2133 = vcmp.lt.s32.totalorder %v2132, 784
      %v2134 = vsel %vm2133, %v2128, %v22
      %s2135 = scalar_lea.vmem [#allocation7], 424
      %v2136 = vpack.c.bf16 0.0, %v2134
      %s2138 = ssub.s32 16, 1
      %2139 = vst [vmem:[%s2135] sm:%s2138] %v2136
      %s2140 = scalar_lea.vmem %s500, 428
      %v2141 = vld [vmem:[%s2140] sm:$0xf]
      %v2142 = vunpack.c.l.bf16 %v2141
      %v2143 = vunpack.c.h.bf16 %v2141
      %v2144 = vlaneseq
      %v2145 = vand.u32 %v2144, 127
      %v2146 = vadd.s32 %v2145, 256
      %vm2147 = vcmp.lt.s32.totalorder %v2146, 784
      %v2148 = vsel %vm2147, %v2142, %v22
      %s2149 = scalar_lea.vmem [#allocation7], 428
      %v2150 = vpack.c.bf16 0.0, %v2148
      %s2152 = ssub.s32 16, 1
      %2153 = vst [vmem:[%s2149] sm:%s2152] %v2150
      %s2154 = scalar_lea.vmem %s500, 432
      %v2155 = vld [vmem:[%s2154] sm:$0xf]
      %v2156 = vunpack.c.l.bf16 %v2155
      %v2157 = vunpack.c.h.bf16 %v2155
      %v2158 = vlaneseq
      %v2159 = vand.u32 %v2158, 127
      %v2160 = vadd.s32 %v2159, 384
      %vm2161 = vcmp.lt.s32.totalorder %v2160, 784
      %v2162 = vsel %vm2161, %v2156, %v22
      %s2163 = scalar_lea.vmem [#allocation7], 432
      %v2164 = vpack.c.bf16 0.0, %v2162
      %s2166 = ssub.s32 16, 1
      %2167 = vst [vmem:[%s2163] sm:%s2166] %v2164
      %s2168 = scalar_lea.vmem %s500, 436
      %v2169 = vld [vmem:[%s2168] sm:$0xf]
      %v2170 = vunpack.c.l.bf16 %v2169
      %v2171 = vunpack.c.h.bf16 %v2169
      %v2172 = vlaneseq
      %v2173 = vand.u32 %v2172, 127
      %v2174 = vadd.s32 %v2173, 512
      %vm2175 = vcmp.lt.s32.totalorder %v2174, 784
      %v2176 = vsel %vm2175, %v2170, %v22
      %s2177 = scalar_lea.vmem [#allocation7], 436
      %v2178 = vpack.c.bf16 0.0, %v2176
      %s2180 = ssub.s32 16, 1
      %2181 = vst [vmem:[%s2177] sm:%s2180] %v2178
      %s2182 = scalar_lea.vmem %s500, 440
      %v2183 = vld [vmem:[%s2182] sm:$0xf]
      %v2184 = vunpack.c.l.bf16 %v2183
      %v2185 = vunpack.c.h.bf16 %v2183
      %v2186 = vlaneseq
      %v2187 = vand.u32 %v2186, 127
      %v2188 = vadd.s32 %v2187, 640
      %vm2189 = vcmp.lt.s32.totalorder %v2188, 784
      %v2190 = vsel %vm2189, %v2184, %v22
      %s2191 = scalar_lea.vmem [#allocation7], 440
      %v2192 = vpack.c.bf16 0.0, %v2190
      %s2194 = ssub.s32 16, 1
      %2195 = vst [vmem:[%s2191] sm:%s2194] %v2192
      %s2196 = scalar_lea.vmem %s500, 444
      %s2198 = sor.u32 255, 127
      %s2199 = sand.u32 %s2198, 85
      %s2200 = sshrl.u32 %s2199, 1
      %s2201 = sor.u32 %s2199, %s2200
      %s2202 = sand.u32 51, %s2201
      %s2203 = sshrl.u32 %s2202, 2
      %s2204 = sor.u32 %s2202, %s2203
      %s2205 = sand.u32 15, %s2204
      %v2206 = vld [vmem:[%s2196] sm:%s2205]
      %v2207 = vunpack.c.l.bf16 %v2206
      %v2208 = vunpack.c.h.bf16 %v2206
      %v2209 = vlaneseq
      %v2210 = vand.u32 %v2209, 127
      %v2211 = vadd.s32 %v2210, 768
      %vm2212 = vcmp.lt.s32.totalorder %v2211, 784
      %v2213 = vsel %vm2212, %v2207, %v22
      %s2214 = scalar_lea.vmem [#allocation7], 444
      %v2215 = vpack.c.bf16 0.0, %v2213
      %s2217 = ssub.s32 16, 1
      %2218 = vst [vmem:[%s2214] sm:%s2217] %v2215
      %v2220 = vld [vmem:[#allocation7] sm:$0xff]
      %v2221 = vld [vmem:[#allocation7 + $0x8] sm:$0xff]
      %v2222 = vld [vmem:[#allocation7 + $0x10] sm:$0xff]
      %v2223 = vld [vmem:[#allocation7 + $0x18] sm:$0xf]
      %v2224 = vld [vmem:[#allocation7 + $0x1c] sm:$0xff]
      %v2225 = vld [vmem:[#allocation7 + $0x24] sm:$0xff]
      %v2226 = vld [vmem:[#allocation7 + $0x2c] sm:$0xff]
      %v2227 = vld [vmem:[#allocation7 + $0x34] sm:$0xf]
      %v2228 = vld [vmem:[#allocation7 + $0x38] sm:$0xff]
      %v2229 = vld [vmem:[#allocation7 + $0x40] sm:$0xff]
      %v2230 = vld [vmem:[#allocation7 + $0x48] sm:$0xff]
      %v2231 = vld [vmem:[#allocation7 + $0x50] sm:$0xf]
      %v2232 = vld [vmem:[#allocation7 + $0x54] sm:$0xff]
      %v2233 = vld [vmem:[#allocation7 + $0x5c] sm:$0xff]
      %v2234 = vld [vmem:[#allocation7 + $0x64] sm:$0xff]
      %v2235 = vld [vmem:[#allocation7 + $0x6c] sm:$0xf]
      %v2236 = vld [vmem:[#allocation7 + $0x70] sm:$0xff]
      %v2237 = vld [vmem:[#allocation7 + $0x78] sm:$0xff]
      %v2238 = vld [vmem:[#allocation7 + $0x80] sm:$0xff]
      %v2239 = vld [vmem:[#allocation7 + $0x88] sm:$0xf]
      %v2240 = vld [vmem:[#allocation7 + $0x8c] sm:$0xff]
      %v2241 = vld [vmem:[#allocation7 + $0x94] sm:$0xff]
      %v2242 = vld [vmem:[#allocation7 + $0x9c] sm:$0xff]
      %v2243 = vld [vmem:[#allocation7 + $0xa4] sm:$0xf]
      %v2244 = vld [vmem:[#allocation7 + $0xa8] sm:$0xff]
      %v2245 = vld [vmem:[#allocation7 + $0xb0] sm:$0xff]
      %v2246 = vld [vmem:[#allocation7 + $0xb8] sm:$0xff]
      %v2247 = vld [vmem:[#allocation7 + $0xc0] sm:$0xf]
      %v2248 = vld [vmem:[#allocation7 + $0xc4] sm:$0xff]
      %v2249 = vld [vmem:[#allocation7 + $0xcc] sm:$0xff]
      %v2250 = vld [vmem:[#allocation7 + $0xd4] sm:$0xff]
      %v2251 = vld [vmem:[#allocation7 + $0xdc] sm:$0xf]
      %v2252 = vld [vmem:[#allocation7 + $0xe0] sm:$0xff]
      %v2253 = vld [vmem:[#allocation7 + $0xe8] sm:$0xff]
      %v2254 = vld [vmem:[#allocation7 + $0xf0] sm:$0xff]
      %v2255 = vld [vmem:[#allocation7 + $0xf8] sm:$0xf]
      %v2256 = vld [vmem:[#allocation7 + $0xfc] sm:$0xff]
      %v2257 = vld [vmem:[#allocation7 + $0x104] sm:$0xff]
      %v2258 = vld [vmem:[#allocation7 + $0x10c] sm:$0xff]
      %v2259 = vld [vmem:[#allocation7 + $0x114] sm:$0xf]
      %v2260 = vld [vmem:[#allocation7 + $0x118] sm:$0xff]
      %v2261 = vld [vmem:[#allocation7 + $0x120] sm:$0xff]
      %v2262 = vld [vmem:[#allocation7 + $0x128] sm:$0xff]
      %v2263 = vld [vmem:[#allocation7 + $0x130] sm:$0xf]
      %v2264 = vld [vmem:[#allocation7 + $0x134] sm:$0xff]
      %v2265 = vld [vmem:[#allocation7 + $0x13c] sm:$0xff]
      %v2266 = vld [vmem:[#allocation7 + $0x144] sm:$0xff]
      %v2267 = vld [vmem:[#allocation7 + $0x14c] sm:$0xf]
      %v2268 = vld [vmem:[#allocation7 + $0x150] sm:$0xff]
      %v2269 = vld [vmem:[#allocation7 + $0x158] sm:$0xff]
      %v2270 = vld [vmem:[#allocation7 + $0x160] sm:$0xff]
      %v2271 = vld [vmem:[#allocation7 + $0x168] sm:$0xf]
      %v2272 = vld [vmem:[#allocation7 + $0x16c] sm:$0xff]
      %v2273 = vld [vmem:[#allocation7 + $0x174] sm:$0xff]
      %v2274 = vld [vmem:[#allocation7 + $0x17c] sm:$0xff]
      %v2275 = vld [vmem:[#allocation7 + $0x184] sm:$0xf]
      %v2276 = vld [vmem:[#allocation7 + $0x188] sm:$0xff]
      %v2277 = vld [vmem:[#allocation7 + $0x190] sm:$0xff]
      %v2278 = vld [vmem:[#allocation7 + $0x198] sm:$0xff]
      %v2279 = vld [vmem:[#allocation7 + $0x1a0] sm:$0xf]
      %v2280 = vld [vmem:[#allocation7 + $0x1a4] sm:$0xff]
      %v2281 = vld [vmem:[#allocation7 + $0x1ac] sm:$0xff]
      %v2282 = vld [vmem:[#allocation7 + $0x1b4] sm:$0xff]
      %v2283 = vld [vmem:[#allocation7 + $0x1bc] sm:$0xf]
      %v2284 = vld [vmem:[%s0] sm:$0xf]
      %v2285 = vld [vmem:[%s0 + $0x4] sm:$0xf]
      %v2286 = vld [vmem:[%s0 + $0x8] sm:$0xf]
      %v2287 = vld [vmem:[%s0 + $0xc] sm:$0xf]
      %v2288 = vld [vmem:[%s0 + $0x10] sm:$0xf]
      %v2289 = vld [vmem:[%s0 + $0x14] sm:$0xf]
      %v2290 = vld [vmem:[%s0 + $0x18] sm:$0xf]
      %v2291 = vld [vmem:[%s0 + $0x1c] sm:$0xf]
      %v2292 = vld [vmem:[%s0 + $0x20] sm:$0xf]
      %v2293 = vld [vmem:[%s0 + $0x24] sm:$0xf]
      %v2294 = vld [vmem:[%s0 + $0x28] sm:$0xf]
      %v2295 = vld [vmem:[%s0 + $0x2c] sm:$0xf]
      %v2296 = vld [vmem:[%s0 + $0x30] sm:$0xf]
      %v2297 = vld [vmem:[%s0 + $0x34] sm:$0xf]
      %v2298 = vld [vmem:[%s0 + $0x38] sm:$0xf]
      %v2299 = vld [vmem:[%s0 + $0x3c] sm:$0xf]
      %v2300 = vld [vmem:[%s0 + $0x40] sm:$0xf]
      %v2301 = vld [vmem:[%s0 + $0x44] sm:$0xf]
      %v2302 = vld [vmem:[%s0 + $0x48] sm:$0xf]
      %v2303 = vld [vmem:[%s0 + $0x4c] sm:$0xf]
      %v2304 = vld [vmem:[%s0 + $0x50] sm:$0xf]
      %v2305 = vld [vmem:[%s0 + $0x54] sm:$0xf]
      %v2306 = vld [vmem:[%s0 + $0x58] sm:$0xf]
      %v2307 = vld [vmem:[%s0 + $0x5c] sm:$0xf]
      %v2308 = vld [vmem:[%s0 + $0x60] sm:$0xf]
      %v2309 = vld [vmem:[%s0 + $0x64] sm:$0xf]
      %v2310 = vld [vmem:[%s0 + $0x68] sm:$0xf]
      %v2311 = vld [vmem:[%s0 + $0x6c] sm:$0xf]
      %v2312 = vld [vmem:[%s0 + $0x70] sm:$0xf]
      %v2313 = vld [vmem:[%s0 + $0x74] sm:$0xf]
      %v2314 = vld [vmem:[%s0 + $0x78] sm:$0xf]
      %v2315 = vld [vmem:[%s0 + $0x7c] sm:$0xf]
      %v2316 = vld [vmem:[%s0 + $0x80] sm:$0xf]
      %v2317 = vld [vmem:[%s0 + $0x84] sm:$0xf]
      %v2318 = vld [vmem:[%s0 + $0x88] sm:$0xf]
      %v2319 = vld [vmem:[%s0 + $0x8c] sm:$0xf]
      %v2320 = vld [vmem:[%s0 + $0x90] sm:$0xf]
      %v2321 = vld [vmem:[%s0 + $0x94] sm:$0xf]
      %v2322 = vld [vmem:[%s0 + $0x98] sm:$0xf]
      %v2323 = vld [vmem:[%s0 + $0x9c] sm:$0xf]
      %v2324 = vld [vmem:[%s0 + $0xa0] sm:$0xf]
      %v2325 = vld [vmem:[%s0 + $0xa4] sm:$0xf]
      %v2326 = vld [vmem:[%s0 + $0xa8] sm:$0xf]
      %v2327 = vld [vmem:[%s0 + $0xac] sm:$0xf]
      %v2328 = vld [vmem:[%s0 + $0xb0] sm:$0xf]
      %v2329 = vld [vmem:[%s0 + $0xb4] sm:$0xf]
      %v2330 = vld [vmem:[%s0 + $0xb8] sm:$0xf]
      %v2331 = vld [vmem:[%s0 + $0xbc] sm:$0xf]
      %v2332 = vld [vmem:[%s0 + $0xc0] sm:$0xf]
      %v2333 = vld [vmem:[%s0 + $0xc4] sm:$0xf]
      %v2334 = vld [vmem:[%s0 + $0xc8] sm:$0xf]
      %v2335 = vld [vmem:[%s0 + $0xcc] sm:$0xf]
      %v2336 = vld [vmem:[%s0 + $0xd0] sm:$0xf]
      %v2337 = vld [vmem:[%s0 + $0xd4] sm:$0xf]
      %v2338 = vld [vmem:[%s0 + $0xd8] sm:$0xf]
      %v2339 = vld [vmem:[%s0 + $0xdc] sm:$0xf]
      %v2340 = vld [vmem:[%s0 + $0xe0] sm:$0xf]
      %v2341 = vld [vmem:[%s0 + $0xe4] sm:$0xf]
      %v2342 = vld [vmem:[%s0 + $0xe8] sm:$0xf]
      %v2343 = vld [vmem:[%s0 + $0xec] sm:$0xf]
      %v2344 = vld [vmem:[%s0 + $0xf0] sm:$0xf]
      %v2345 = vld [vmem:[%s0 + $0xf4] sm:$0xf]
      %v2346 = vld [vmem:[%s0 + $0xf8] sm:$0xf]
      %v2347 = vld [vmem:[%s0 + $0xfc] sm:$0xf]
      %v2348 = vld [vmem:[%s0 + $0x100] sm:$0xf]
      %v2349 = vld [vmem:[%s0 + $0x104] sm:$0xf]
      %v2350 = vld [vmem:[%s0 + $0x108] sm:$0xf]
      %v2351 = vld [vmem:[%s0 + $0x10c] sm:$0xf]
      %v2352 = vld [vmem:[%s0 + $0x110] sm:$0xf]
      %v2353 = vld [vmem:[%s0 + $0x114] sm:$0xf]
      %v2354 = vld [vmem:[%s0 + $0x118] sm:$0xf]
      %v2355 = vld [vmem:[%s0 + $0x11c] sm:$0xf]
      %v2356 = vld [vmem:[%s0 + $0x120] sm:$0xf]
      %v2357 = vld [vmem:[%s0 + $0x124] sm:$0xf]
      %v2358 = vld [vmem:[%s0 + $0x128] sm:$0xf]
      %v2359 = vld [vmem:[%s0 + $0x12c] sm:$0xf]
      %v2360 = vld [vmem:[%s0 + $0x130] sm:$0xf]
      %v2361 = vld [vmem:[%s0 + $0x134] sm:$0xf]
      %v2362 = vld [vmem:[%s0 + $0x138] sm:$0xf]
      %v2363 = vld [vmem:[%s0 + $0x13c] sm:$0xf]
      %v2364 = vld [vmem:[%s0 + $0x140] sm:$0xf]
      %v2365 = vld [vmem:[%s0 + $0x144] sm:$0xf]
      %v2366 = vld [vmem:[%s0 + $0x148] sm:$0xf]
      %v2367 = vld [vmem:[%s0 + $0x14c] sm:$0xf]
      %v2368 = vld [vmem:[%s0 + $0x150] sm:$0xf]
      %v2369 = vld [vmem:[%s0 + $0x154] sm:$0xf]
      %v2370 = vld [vmem:[%s0 + $0x158] sm:$0xf]
      %v2371 = vld [vmem:[%s0 + $0x15c] sm:$0xf]
      %v2372 = vld [vmem:[%s0 + $0x160] sm:$0xf]
      %v2373 = vld [vmem:[%s0 + $0x164] sm:$0xf]
      %v2374 = vld [vmem:[%s0 + $0x168] sm:$0xf]
      %v2375 = vld [vmem:[%s0 + $0x16c] sm:$0xf]
      %v2376 = vld [vmem:[%s0 + $0x170] sm:$0xf]
      %v2377 = vld [vmem:[%s0 + $0x174] sm:$0xf]
      %v2378 = vld [vmem:[%s0 + $0x178] sm:$0xf]
      %v2379 = vld [vmem:[%s0 + $0x17c] sm:$0xf]
      %v2380 = vld [vmem:[%s0 + $0x180] sm:$0xf]
      %v2381 = vld [vmem:[%s0 + $0x184] sm:$0xf]
      %v2382 = vld [vmem:[%s0 + $0x188] sm:$0xf]
      %v2383 = vld [vmem:[%s0 + $0x18c] sm:$0xf]
      %v2384 = vld [vmem:[%s0 + $0x190] sm:$0xf]
      %v2385 = vld [vmem:[%s0 + $0x194] sm:$0xf]
      %v2386 = vld [vmem:[%s0 + $0x198] sm:$0xf]
      %v2387 = vld [vmem:[%s0 + $0x19c] sm:$0xf]
      %v2388 = vld [vmem:[%s0 + $0x1a0] sm:$0xf]
      %v2389 = vld [vmem:[%s0 + $0x1a4] sm:$0xf]
      %v2390 = vld [vmem:[%s0 + $0x1a8] sm:$0xf]
      %v2391 = vld [vmem:[%s0 + $0x1ac] sm:$0xf]
      %v2392 = vld [vmem:[%s0 + $0x1b0] sm:$0xf]
      %v2393 = vld [vmem:[%s0 + $0x1b4] sm:$0xf]
      %v2394 = vld [vmem:[%s0 + $0x1b8] sm:$0xf]
      %v2395 = vld [vmem:[%s0 + $0x1bc] sm:$0xf]
      %v2396 = vld [vmem:[%s1] sm:$0x1]
      %v2398 = vperm.slane %v2396, 0
      %v2464 = vunpack.c.l.b16 %v2220
      %v2465 = vunpack.c.h.b16 %v2220
      %v2466 = vunpack.c.l.b16 %v2221
      %v2467 = vunpack.c.h.b16 %v2221
      %v2468 = vunpack.c.l.b16 %v2222
      %v2469 = vunpack.c.h.b16 %v2222
      %v2470 = vunpack.c.l.b16 %v2223
      %v2471 = vunpack.c.l.b16 %v2224
      %v2472 = vunpack.c.h.b16 %v2224
      %v2473 = vunpack.c.l.b16 %v2225
      %v2474 = vunpack.c.h.b16 %v2225
      %v2475 = vunpack.c.l.b16 %v2226
      %v2476 = vunpack.c.h.b16 %v2226
      %v2477 = vunpack.c.l.b16 %v2227
      %v2478 = vunpack.c.l.b16 %v2228
      %v2479 = vunpack.c.h.b16 %v2228
      %v2480 = vunpack.c.l.b16 %v2229
      %v2481 = vunpack.c.h.b16 %v2229
      %v2482 = vunpack.c.l.b16 %v2230
      %v2483 = vunpack.c.h.b16 %v2230
      %v2484 = vunpack.c.l.b16 %v2231
      %v2485 = vunpack.c.l.b16 %v2232
      %v2486 = vunpack.c.h.b16 %v2232
      %v2487 = vunpack.c.l.b16 %v2233
      %v2488 = vunpack.c.h.b16 %v2233
      %v2489 = vunpack.c.l.b16 %v2234
      %v2490 = vunpack.c.h.b16 %v2234
      %v2491 = vunpack.c.l.b16 %v2235
      %v2492 = vunpack.c.l.b16 %v2236
      %v2493 = vunpack.c.h.b16 %v2236
      %v2494 = vunpack.c.l.b16 %v2237
      %v2495 = vunpack.c.h.b16 %v2237
      %v2496 = vunpack.c.l.b16 %v2238
      %v2497 = vunpack.c.h.b16 %v2238
      %v2498 = vunpack.c.l.b16 %v2239
      %v2499 = vunpack.c.l.b16 %v2240
      %v2500 = vunpack.c.h.b16 %v2240
      %v2501 = vunpack.c.l.b16 %v2241
      %v2502 = vunpack.c.h.b16 %v2241
      %v2503 = vunpack.c.l.b16 %v2242
      %v2504 = vunpack.c.h.b16 %v2242
      %v2505 = vunpack.c.l.b16 %v2243
      %v2506 = vunpack.c.l.b16 %v2244
      %v2507 = vunpack.c.h.b16 %v2244
      %v2508 = vunpack.c.l.b16 %v2245
      %v2509 = vunpack.c.h.b16 %v2245
      %v2510 = vunpack.c.l.b16 %v2246
      %v2511 = vunpack.c.h.b16 %v2246
      %v2512 = vunpack.c.l.b16 %v2247
      %v2513 = vunpack.c.l.b16 %v2248
      %v2514 = vunpack.c.h.b16 %v2248
      %v2515 = vunpack.c.l.b16 %v2249
      %v2516 = vunpack.c.h.b16 %v2249
      %v2517 = vunpack.c.l.b16 %v2250
      %v2518 = vunpack.c.h.b16 %v2250
      %v2519 = vunpack.c.l.b16 %v2251
      %v2520 = vunpack.c.l.b16 %v2252
      %v2521 = vunpack.c.h.b16 %v2252
      %v2522 = vunpack.c.l.b16 %v2253
      %v2523 = vunpack.c.h.b16 %v2253
      %v2524 = vunpack.c.l.b16 %v2254
      %v2525 = vunpack.c.h.b16 %v2254
      %v2526 = vunpack.c.l.b16 %v2255
      %v2527 = vunpack.c.l.b16 %v2256
      %v2528 = vunpack.c.h.b16 %v2256
      %v2529 = vunpack.c.l.b16 %v2257
      %v2530 = vunpack.c.h.b16 %v2257
      %v2531 = vunpack.c.l.b16 %v2258
      %v2532 = vunpack.c.h.b16 %v2258
      %v2533 = vunpack.c.l.b16 %v2259
      %v2534 = vunpack.c.l.b16 %v2260
      %v2535 = vunpack.c.h.b16 %v2260
      %v2536 = vunpack.c.l.b16 %v2261
      %v2537 = vunpack.c.h.b16 %v2261
      %v2538 = vunpack.c.l.b16 %v2262
      %v2539 = vunpack.c.h.b16 %v2262
      %v2540 = vunpack.c.l.b16 %v2263
      %v2541 = vunpack.c.l.b16 %v2264
      %v2542 = vunpack.c.h.b16 %v2264
      %v2543 = vunpack.c.l.b16 %v2265
      %v2544 = vunpack.c.h.b16 %v2265
      %v2545 = vunpack.c.l.b16 %v2266
      %v2546 = vunpack.c.h.b16 %v2266
      %v2547 = vunpack.c.l.b16 %v2267
      %v2548 = vunpack.c.l.b16 %v2268
      %v2549 = vunpack.c.h.b16 %v2268
      %v2550 = vunpack.c.l.b16 %v2269
      %v2551 = vunpack.c.h.b16 %v2269
      %v2552 = vunpack.c.l.b16 %v2270
      %v2553 = vunpack.c.h.b16 %v2270
      %v2554 = vunpack.c.l.b16 %v2271
      %v2555 = vunpack.c.l.b16 %v2272
      %v2556 = vunpack.c.h.b16 %v2272
      %v2557 = vunpack.c.l.b16 %v2273
      %v2558 = vunpack.c.h.b16 %v2273
      %v2559 = vunpack.c.l.b16 %v2274
      %v2560 = vunpack.c.h.b16 %v2274
      %v2561 = vunpack.c.l.b16 %v2275
      %v2562 = vunpack.c.l.b16 %v2276
      %v2563 = vunpack.c.h.b16 %v2276
      %v2564 = vunpack.c.l.b16 %v2277
      %v2565 = vunpack.c.h.b16 %v2277
      %v2566 = vunpack.c.l.b16 %v2278
      %v2567 = vunpack.c.h.b16 %v2278
      %v2568 = vunpack.c.l.b16 %v2279
      %v2569 = vunpack.c.l.b16 %v2280
      %v2570 = vunpack.c.h.b16 %v2280
      %v2571 = vunpack.c.l.b16 %v2281
      %v2572 = vunpack.c.h.b16 %v2281
      %v2573 = vunpack.c.l.b16 %v2282
      %v2574 = vunpack.c.h.b16 %v2282
      %v2575 = vunpack.c.l.b16 %v2283
      %v2576 = vpack.c.b16 %v2471, %v2464
      %v2577 = vpack.c.b16 %v2472, %v2465
      %v2578 = vpack.c.b16 %v2473, %v2466
      %v2579 = vpack.c.b16 %v2474, %v2467
      %v2580 = vpack.c.b16 %v2475, %v2468
      %v2581 = vpack.c.b16 %v2476, %v2469
      %v2582 = vpack.c.b16 %v2477, %v2470
      %v2583 = vpack.c.b16 %v2485, %v2478
      %v2584 = vpack.c.b16 %v2486, %v2479
      %v2585 = vpack.c.b16 %v2487, %v2480
      %v2586 = vpack.c.b16 %v2488, %v2481
      %v2587 = vpack.c.b16 %v2489, %v2482
      %v2588 = vpack.c.b16 %v2490, %v2483
      %v2589 = vpack.c.b16 %v2491, %v2484
      %v2590 = vpack.c.b16 %v2499, %v2492
      %v2591 = vpack.c.b16 %v2500, %v2493
      %v2592 = vpack.c.b16 %v2501, %v2494
      %v2593 = vpack.c.b16 %v2502, %v2495
      %v2594 = vpack.c.b16 %v2503, %v2496
      %v2595 = vpack.c.b16 %v2504, %v2497
      %v2596 = vpack.c.b16 %v2505, %v2498
      %v2597 = vpack.c.b16 %v2513, %v2506
      %v2598 = vpack.c.b16 %v2514, %v2507
      %v2599 = vpack.c.b16 %v2515, %v2508
      %v2600 = vpack.c.b16 %v2516, %v2509
      %v2601 = vpack.c.b16 %v2517, %v2510
      %v2602 = vpack.c.b16 %v2518, %v2511
      %v2603 = vpack.c.b16 %v2519, %v2512
      %v2604 = vpack.c.b16 %v2527, %v2520
      %v2605 = vpack.c.b16 %v2528, %v2521
      %v2606 = vpack.c.b16 %v2529, %v2522
      %v2607 = vpack.c.b16 %v2530, %v2523
      %v2608 = vpack.c.b16 %v2531, %v2524
      %v2609 = vpack.c.b16 %v2532, %v2525
      %v2610 = vpack.c.b16 %v2533, %v2526
      %v2611 = vpack.c.b16 %v2541, %v2534
      %v2612 = vpack.c.b16 %v2542, %v2535
      %v2613 = vpack.c.b16 %v2543, %v2536
      %v2614 = vpack.c.b16 %v2544, %v2537
      %v2615 = vpack.c.b16 %v2545, %v2538
      %v2616 = vpack.c.b16 %v2546, %v2539
      %v2617 = vpack.c.b16 %v2547, %v2540
      %v2618 = vpack.c.b16 %v2555, %v2548
      %v2619 = vpack.c.b16 %v2556, %v2549
      %v2620 = vpack.c.b16 %v2557, %v2550
      %v2621 = vpack.c.b16 %v2558, %v2551
      %v2622 = vpack.c.b16 %v2559, %v2552
      %v2623 = vpack.c.b16 %v2560, %v2553
      %v2624 = vpack.c.b16 %v2561, %v2554
      %v2625 = vpack.c.b16 %v2569, %v2562
      %v2626 = vpack.c.b16 %v2570, %v2563
      %v2627 = vpack.c.b16 %v2571, %v2564
      %v2628 = vpack.c.b16 %v2572, %v2565
      %v2629 = vpack.c.b16 %v2573, %v2566
      %v2630 = vpack.c.b16 %v2574, %v2567
      %v2631 = vpack.c.b16 %v2575, %v2568
      %v2800 = vunpack.c.l.b16 %v2284
      %v2801 = vunpack.c.l.b16 %v2285
      %v2802 = vunpack.c.l.b16 %v2286
      %v2803 = vunpack.c.l.b16 %v2287
      %v2804 = vunpack.c.l.b16 %v2288
      %v2805 = vunpack.c.l.b16 %v2289
      %v2806 = vunpack.c.l.b16 %v2290
      %v2807 = vunpack.c.l.b16 %v2291
      %v2808 = vunpack.c.l.b16 %v2292
      %v2809 = vunpack.c.l.b16 %v2293
      %v2810 = vunpack.c.l.b16 %v2294
      %v2811 = vunpack.c.l.b16 %v2295
      %v2812 = vunpack.c.l.b16 %v2296
      %v2813 = vunpack.c.l.b16 %v2297
      %v2814 = vunpack.c.l.b16 %v2298
      %v2815 = vunpack.c.l.b16 %v2299
      %v2816 = vunpack.c.l.b16 %v2300
      %v2817 = vunpack.c.l.b16 %v2301
      %v2818 = vunpack.c.l.b16 %v2302
      %v2819 = vunpack.c.l.b16 %v2303
      %v2820 = vunpack.c.l.b16 %v2304
      %v2821 = vunpack.c.l.b16 %v2305
      %v2822 = vunpack.c.l.b16 %v2306
      %v2823 = vunpack.c.l.b16 %v2307
      %v2824 = vunpack.c.l.b16 %v2308
      %v2825 = vunpack.c.l.b16 %v2309
      %v2826 = vunpack.c.l.b16 %v2310
      %v2827 = vunpack.c.l.b16 %v2311
      %v2828 = vunpack.c.l.b16 %v2312
      %v2829 = vunpack.c.l.b16 %v2313
      %v2830 = vunpack.c.l.b16 %v2314
      %v2831 = vunpack.c.l.b16 %v2315
      %v2832 = vunpack.c.l.b16 %v2316
      %v2833 = vunpack.c.l.b16 %v2317
      %v2834 = vunpack.c.l.b16 %v2318
      %v2835 = vunpack.c.l.b16 %v2319
      %v2836 = vunpack.c.l.b16 %v2320
      %v2837 = vunpack.c.l.b16 %v2321
      %v2838 = vunpack.c.l.b16 %v2322
      %v2839 = vunpack.c.l.b16 %v2323
      %v2840 = vunpack.c.l.b16 %v2324
      %v2841 = vunpack.c.l.b16 %v2325
      %v2842 = vunpack.c.l.b16 %v2326
      %v2843 = vunpack.c.l.b16 %v2327
      %v2844 = vunpack.c.l.b16 %v2328
      %v2845 = vunpack.c.l.b16 %v2329
      %v2846 = vunpack.c.l.b16 %v2330
      %v2847 = vunpack.c.l.b16 %v2331
      %v2848 = vunpack.c.l.b16 %v2332
      %v2849 = vunpack.c.l.b16 %v2333
      %v2850 = vunpack.c.l.b16 %v2334
      %v2851 = vunpack.c.l.b16 %v2335
      %v2852 = vunpack.c.l.b16 %v2336
      %v2853 = vunpack.c.l.b16 %v2337
      %v2854 = vunpack.c.l.b16 %v2338
      %v2855 = vunpack.c.l.b16 %v2339
      %v2856 = vunpack.c.l.b16 %v2340
      %v2857 = vunpack.c.l.b16 %v2341
      %v2858 = vunpack.c.l.b16 %v2342
      %v2859 = vunpack.c.l.b16 %v2343
      %v2860 = vunpack.c.l.b16 %v2344
      %v2861 = vunpack.c.l.b16 %v2345
      %v2862 = vunpack.c.l.b16 %v2346
      %v2863 = vunpack.c.l.b16 %v2347
      %v2864 = vunpack.c.l.b16 %v2348
      %v2865 = vunpack.c.l.b16 %v2349
      %v2866 = vunpack.c.l.b16 %v2350
      %v2867 = vunpack.c.l.b16 %v2351
      %v2868 = vunpack.c.l.b16 %v2352
      %v2869 = vunpack.c.l.b16 %v2353
      %v2870 = vunpack.c.l.b16 %v2354
      %v2871 = vunpack.c.l.b16 %v2355
      %v2872 = vunpack.c.l.b16 %v2356
      %v2873 = vunpack.c.l.b16 %v2357
      %v2874 = vunpack.c.l.b16 %v2358
      %v2875 = vunpack.c.l.b16 %v2359
      %v2876 = vunpack.c.l.b16 %v2360
      %v2877 = vunpack.c.l.b16 %v2361
      %v2878 = vunpack.c.l.b16 %v2362
      %v2879 = vunpack.c.l.b16 %v2363
      %v2880 = vunpack.c.l.b16 %v2364
      %v2881 = vunpack.c.l.b16 %v2365
      %v2882 = vunpack.c.l.b16 %v2366
      %v2883 = vunpack.c.l.b16 %v2367
      %v2884 = vunpack.c.l.b16 %v2368
      %v2885 = vunpack.c.l.b16 %v2369
      %v2886 = vunpack.c.l.b16 %v2370
      %v2887 = vunpack.c.l.b16 %v2371
      %v2888 = vunpack.c.l.b16 %v2372
      %v2889 = vunpack.c.l.b16 %v2373
      %v2890 = vunpack.c.l.b16 %v2374
      %v2891 = vunpack.c.l.b16 %v2375
      %v2892 = vunpack.c.l.b16 %v2376
      %v2893 = vunpack.c.l.b16 %v2377
      %v2894 = vunpack.c.l.b16 %v2378
      %v2895 = vunpack.c.l.b16 %v2379
      %v2896 = vunpack.c.l.b16 %v2380
      %v2897 = vunpack.c.l.b16 %v2381
      %v2898 = vunpack.c.l.b16 %v2382
      %v2899 = vunpack.c.l.b16 %v2383
      %v2900 = vunpack.c.l.b16 %v2384
      %v2901 = vunpack.c.l.b16 %v2385
      %v2902 = vunpack.c.l.b16 %v2386
      %v2903 = vunpack.c.l.b16 %v2387
      %v2904 = vunpack.c.l.b16 %v2388
      %v2905 = vunpack.c.l.b16 %v2389
      %v2906 = vunpack.c.l.b16 %v2390
      %v2907 = vunpack.c.l.b16 %v2391
      %v2908 = vunpack.c.l.b16 %v2392
      %v2909 = vunpack.c.l.b16 %v2393
      %v2910 = vunpack.c.l.b16 %v2394
      %v2911 = vunpack.c.l.b16 %v2395
      %v2912 = vpack.c.b16 %v2801, %v2800
      %v2913 = vpack.c.b16 %v2803, %v2802
      %v2914 = vpack.c.b16 %v2805, %v2804
      %v2915 = vpack.c.b16 %v2807, %v2806
      %v2916 = vpack.c.b16 %v2809, %v2808
      %v2917 = vpack.c.b16 %v2811, %v2810
      %v2918 = vpack.c.b16 %v2813, %v2812
      %v2919 = vpack.c.b16 %v2815, %v2814
      %v2920 = vpack.c.b16 %v2817, %v2816
      %v2921 = vpack.c.b16 %v2819, %v2818
      %v2922 = vpack.c.b16 %v2821, %v2820
      %v2923 = vpack.c.b16 %v2823, %v2822
      %v2924 = vpack.c.b16 %v2825, %v2824
      %v2925 = vpack.c.b16 %v2827, %v2826
      %v2926 = vpack.c.b16 %v2829, %v2828
      %v2927 = vpack.c.b16 %v2831, %v2830
      %v2928 = vpack.c.b16 %v2833, %v2832
      %v2929 = vpack.c.b16 %v2835, %v2834
      %v2930 = vpack.c.b16 %v2837, %v2836
      %v2931 = vpack.c.b16 %v2839, %v2838
      %v2932 = vpack.c.b16 %v2841, %v2840
      %v2933 = vpack.c.b16 %v2843, %v2842
      %v2934 = vpack.c.b16 %v2845, %v2844
      %v2935 = vpack.c.b16 %v2847, %v2846
      %v2936 = vpack.c.b16 %v2849, %v2848
      %v2937 = vpack.c.b16 %v2851, %v2850
      %v2938 = vpack.c.b16 %v2853, %v2852
      %v2939 = vpack.c.b16 %v2855, %v2854
      %v2940 = vpack.c.b16 %v2857, %v2856
      %v2941 = vpack.c.b16 %v2859, %v2858
      %v2942 = vpack.c.b16 %v2861, %v2860
      %v2943 = vpack.c.b16 %v2863, %v2862
      %v2944 = vpack.c.b16 %v2865, %v2864
      %v2945 = vpack.c.b16 %v2867, %v2866
      %v2946 = vpack.c.b16 %v2869, %v2868
      %v2947 = vpack.c.b16 %v2871, %v2870
      %v2948 = vpack.c.b16 %v2873, %v2872
      %v2949 = vpack.c.b16 %v2875, %v2874
      %v2950 = vpack.c.b16 %v2877, %v2876
      %v2951 = vpack.c.b16 %v2879, %v2878
      %v2952 = vpack.c.b16 %v2881, %v2880
      %v2953 = vpack.c.b16 %v2883, %v2882
      %v2954 = vpack.c.b16 %v2885, %v2884
      %v2955 = vpack.c.b16 %v2887, %v2886
      %v2956 = vpack.c.b16 %v2889, %v2888
      %v2957 = vpack.c.b16 %v2891, %v2890
      %v2958 = vpack.c.b16 %v2893, %v2892
      %v2959 = vpack.c.b16 %v2895, %v2894
      %v2960 = vpack.c.b16 %v2897, %v2896
      %v2961 = vpack.c.b16 %v2899, %v2898
      %v2962 = vpack.c.b16 %v2901, %v2900
      %v2963 = vpack.c.b16 %v2903, %v2902
      %v2964 = vpack.c.b16 %v2905, %v2904
      %v2965 = vpack.c.b16 %v2907, %v2906
      %v2966 = vpack.c.b16 %v2909, %v2908
      %v2967 = vpack.c.b16 %v2911, %v2910
      %3024 = vmatpush.bf16.msra.mxu0 %v2919
      %3025 = vmatpush.bf16.msra.mxu0 %v2918
      %3026 = vmatpush.bf16.msra.mxu0 %v2917
      %3027 = vmatpush.bf16.msra.mxu0 %v2916
      %3028 = vmatpush.bf16.msra.mxu0 %v2915
      %3029 = vmatpush.bf16.msra.mxu0 %v2914
      %3030 = vmatpush.bf16.msra.mxu0 %v2913
      %3031 = vmatpush.bf16.msra.mxu0 %v2912
      %3032 = vmatmul.bf16.gmra.mxu0 %v2576
      %v3033 = vpop.f32.mrf.mxu0
      %v3034 = vadd.f32 %v2398, %v3033
      %v3035 = vpop.f32.mrf.mxu0
      %v3036 = vadd.f32 %v2398, %v3035
      %3037 = vmatmul.bf16.gmra.mxu0 %v2583
      %v3038 = vpop.f32.mrf.mxu0
      %v3039 = vadd.f32 %v2398, %v3038
      %v3040 = vpop.f32.mrf.mxu0
      %v3041 = vadd.f32 %v2398, %v3040
      %3042 = vmatmul.bf16.gmra.mxu0 %v2590
      %v3043 = vpop.f32.mrf.mxu0
      %v3044 = vadd.f32 %v2398, %v3043
      %v3045 = vpop.f32.mrf.mxu0
      %v3046 = vadd.f32 %v2398, %v3045
      %3047 = vmatmul.bf16.gmra.mxu0 %v2597
      %v3048 = vpop.f32.mrf.mxu0
      %v3049 = vadd.f32 %v2398, %v3048
      %v3050 = vpop.f32.mrf.mxu0
      %v3051 = vadd.f32 %v2398, %v3050
      %3052 = vmatmul.bf16.gmra.mxu0 %v2604
      %v3053 = vpop.f32.mrf.mxu0
      %v3054 = vadd.f32 %v2398, %v3053
      %v3055 = vpop.f32.mrf.mxu0
      %v3056 = vadd.f32 %v2398, %v3055
      %3057 = vmatmul.bf16.gmra.mxu0 %v2611
      %v3058 = vpop.f32.mrf.mxu0
      %v3059 = vadd.f32 %v2398, %v3058
      %v3060 = vpop.f32.mrf.mxu0
      %v3061 = vadd.f32 %v2398, %v3060
      %3062 = vmatmul.bf16.gmra.mxu0 %v2618
      %v3063 = vpop.f32.mrf.mxu0
      %v3064 = vadd.f32 %v2398, %v3063
      %v3065 = vpop.f32.mrf.mxu0
      %v3066 = vadd.f32 %v2398, %v3065
      %3067 = vmatmul.bf16.gmra.mxu0 %v2625
      %v3068 = vpop.f32.mrf.mxu0
      %v3069 = vadd.f32 %v2398, %v3068
      %v3070 = vpop.f32.mrf.mxu0
      %v3071 = vadd.f32 %v2398, %v3070
      %3072 = vdwg.mxu0
      %3073 = vmatpush.bf16.msra.mxu0 %v2927
      %3074 = vmatpush.bf16.msra.mxu0 %v2926
      %3075 = vmatpush.bf16.msra.mxu0 %v2925
      %3076 = vmatpush.bf16.msra.mxu0 %v2924
      %3077 = vmatpush.bf16.msra.mxu0 %v2923
      %3078 = vmatpush.bf16.msra.mxu0 %v2922
      %3079 = vmatpush.bf16.msra.mxu0 %v2921
      %3080 = vmatpush.bf16.msra.mxu0 %v2920
      %3081 = vmatmul.bf16.gmra.mxu0 %v2577
      %v3082 = vpop.f32.mrf.mxu0
      %v3083 = vadd.f32 %v3034, %v3082
      %v3084 = vpop.f32.mrf.mxu0
      %v3085 = vadd.f32 %v3036, %v3084
      %3086 = vmatmul.bf16.gmra.mxu0 %v2584
      %v3087 = vpop.f32.mrf.mxu0
      %v3088 = vadd.f32 %v3039, %v3087
      %v3089 = vpop.f32.mrf.mxu0
      %v3090 = vadd.f32 %v3041, %v3089
      %3091 = vmatmul.bf16.gmra.mxu0 %v2591
      %v3092 = vpop.f32.mrf.mxu0
      %v3093 = vadd.f32 %v3044, %v3092
      %v3094 = vpop.f32.mrf.mxu0
      %v3095 = vadd.f32 %v3046, %v3094
      %3096 = vmatmul.bf16.gmra.mxu0 %v2598
      %v3097 = vpop.f32.mrf.mxu0
      %v3098 = vadd.f32 %v3049, %v3097
      %v3099 = vpop.f32.mrf.mxu0
      %v3100 = vadd.f32 %v3051, %v3099
      %3101 = vmatmul.bf16.gmra.mxu0 %v2605
      %v3102 = vpop.f32.mrf.mxu0
      %v3103 = vadd.f32 %v3054, %v3102
      %v3104 = vpop.f32.mrf.mxu0
      %v3105 = vadd.f32 %v3056, %v3104
      %3106 = vmatmul.bf16.gmra.mxu0 %v2612
      %v3107 = vpop.f32.mrf.mxu0
      %v3108 = vadd.f32 %v3059, %v3107
      %v3109 = vpop.f32.mrf.mxu0
      %v3110 = vadd.f32 %v3061, %v3109
      %3111 = vmatmul.bf16.gmra.mxu0 %v2619
      %v3112 = vpop.f32.mrf.mxu0
      %v3113 = vadd.f32 %v3064, %v3112
      %v3114 = vpop.f32.mrf.mxu0
      %v3115 = vadd.f32 %v3066, %v3114
      %3116 = vmatmul.bf16.gmra.mxu0 %v2626
      %v3117 = vpop.f32.mrf.mxu0
      %v3118 = vadd.f32 %v3069, %v3117
      %v3119 = vpop.f32.mrf.mxu0
      %v3120 = vadd.f32 %v3071, %v3119
      %3121 = vdwg.mxu0
      %3122 = vmatpush.bf16.msra.mxu0 %v2935
      %3123 = vmatpush.bf16.msra.mxu0 %v2934
      %3124 = vmatpush.bf16.msra.mxu0 %v2933
      %3125 = vmatpush.bf16.msra.mxu0 %v2932
      %3126 = vmatpush.bf16.msra.mxu0 %v2931
      %3127 = vmatpush.bf16.msra.mxu0 %v2930
      %3128 = vmatpush.bf16.msra.mxu0 %v2929
      %3129 = vmatpush.bf16.msra.mxu0 %v2928
      %3130 = vmatmul.bf16.gmra.mxu0 %v2578
      %v3131 = vpop.f32.mrf.mxu0
      %v3132 = vadd.f32 %v3083, %v3131
      %v3133 = vpop.f32.mrf.mxu0
      %v3134 = vadd.f32 %v3085, %v3133
      %3135 = vmatmul.bf16.gmra.mxu0 %v2585
      %v3136 = vpop.f32.mrf.mxu0
      %v3137 = vadd.f32 %v3088, %v3136
      %v3138 = vpop.f32.mrf.mxu0
      %v3139 = vadd.f32 %v3090, %v3138
      %3140 = vmatmul.bf16.gmra.mxu0 %v2592
      %v3141 = vpop.f32.mrf.mxu0
      %v3142 = vadd.f32 %v3093, %v3141
      %v3143 = vpop.f32.mrf.mxu0
      %v3144 = vadd.f32 %v3095, %v3143
      %3145 = vmatmul.bf16.gmra.mxu0 %v2599
      %v3146 = vpop.f32.mrf.mxu0
      %v3147 = vadd.f32 %v3098, %v3146
      %v3148 = vpop.f32.mrf.mxu0
      %v3149 = vadd.f32 %v3100, %v3148
      %3150 = vmatmul.bf16.gmra.mxu0 %v2606
      %v3151 = vpop.f32.mrf.mxu0
      %v3152 = vadd.f32 %v3103, %v3151
      %v3153 = vpop.f32.mrf.mxu0
      %v3154 = vadd.f32 %v3105, %v3153
      %3155 = vmatmul.bf16.gmra.mxu0 %v2613
      %v3156 = vpop.f32.mrf.mxu0
      %v3157 = vadd.f32 %v3108, %v3156
      %v3158 = vpop.f32.mrf.mxu0
      %v3159 = vadd.f32 %v3110, %v3158
      %3160 = vmatmul.bf16.gmra.mxu0 %v2620
      %v3161 = vpop.f32.mrf.mxu0
      %v3162 = vadd.f32 %v3113, %v3161
      %v3163 = vpop.f32.mrf.mxu0
      %v3164 = vadd.f32 %v3115, %v3163
      %3165 = vmatmul.bf16.gmra.mxu0 %v2627
      %v3166 = vpop.f32.mrf.mxu0
      %v3167 = vadd.f32 %v3118, %v3166
      %v3168 = vpop.f32.mrf.mxu0
      %v3169 = vadd.f32 %v3120, %v3168
      %3170 = vdwg.mxu0
      %3171 = vmatpush.bf16.msra.mxu0 %v2943
      %3172 = vmatpush.bf16.msra.mxu0 %v2942
      %3173 = vmatpush.bf16.msra.mxu0 %v2941
      %3174 = vmatpush.bf16.msra.mxu0 %v2940
      %3175 = vmatpush.bf16.msra.mxu0 %v2939
      %3176 = vmatpush.bf16.msra.mxu0 %v2938
      %3177 = vmatpush.bf16.msra.mxu0 %v2937
      %3178 = vmatpush.bf16.msra.mxu0 %v2936
      %3179 = vmatmul.bf16.gmra.mxu0 %v2579
      %v3180 = vpop.f32.mrf.mxu0
      %v3181 = vadd.f32 %v3132, %v3180
      %v3182 = vpop.f32.mrf.mxu0
      %v3183 = vadd.f32 %v3134, %v3182
      %3184 = vmatmul.bf16.gmra.mxu0 %v2586
      %v3185 = vpop.f32.mrf.mxu0
      %v3186 = vadd.f32 %v3137, %v3185
      %v3187 = vpop.f32.mrf.mxu0
      %v3188 = vadd.f32 %v3139, %v3187
      %3189 = vmatmul.bf16.gmra.mxu0 %v2593
      %v3190 = vpop.f32.mrf.mxu0
      %v3191 = vadd.f32 %v3142, %v3190
      %v3192 = vpop.f32.mrf.mxu0
      %v3193 = vadd.f32 %v3144, %v3192
      %3194 = vmatmul.bf16.gmra.mxu0 %v2600
      %v3195 = vpop.f32.mrf.mxu0
      %v3196 = vadd.f32 %v3147, %v3195
      %v3197 = vpop.f32.mrf.mxu0
      %v3198 = vadd.f32 %v3149, %v3197
      %3199 = vmatmul.bf16.gmra.mxu0 %v2607
      %v3200 = vpop.f32.mrf.mxu0
      %v3201 = vadd.f32 %v3152, %v3200
      %v3202 = vpop.f32.mrf.mxu0
      %v3203 = vadd.f32 %v3154, %v3202
      %3204 = vmatmul.bf16.gmra.mxu0 %v2614
      %v3205 = vpop.f32.mrf.mxu0
      %v3206 = vadd.f32 %v3157, %v3205
      %v3207 = vpop.f32.mrf.mxu0
      %v3208 = vadd.f32 %v3159, %v3207
      %3209 = vmatmul.bf16.gmra.mxu0 %v2621
      %v3210 = vpop.f32.mrf.mxu0
      %v3211 = vadd.f32 %v3162, %v3210
      %v3212 = vpop.f32.mrf.mxu0
      %v3213 = vadd.f32 %v3164, %v3212
      %3214 = vmatmul.bf16.gmra.mxu0 %v2628
      %v3215 = vpop.f32.mrf.mxu0
      %v3216 = vadd.f32 %v3167, %v3215
      %v3217 = vpop.f32.mrf.mxu0
      %v3218 = vadd.f32 %v3169, %v3217
      %3219 = vdwg.mxu0
      %3220 = vmatpush.bf16.msra.mxu0 %v2951
      %3221 = vmatpush.bf16.msra.mxu0 %v2950
      %3222 = vmatpush.bf16.msra.mxu0 %v2949
      %3223 = vmatpush.bf16.msra.mxu0 %v2948
      %3224 = vmatpush.bf16.msra.mxu0 %v2947
      %3225 = vmatpush.bf16.msra.mxu0 %v2946
      %3226 = vmatpush.bf16.msra.mxu0 %v2945
      %3227 = vmatpush.bf16.msra.mxu0 %v2944
      %3228 = vmatmul.bf16.gmra.mxu0 %v2580
      %v3229 = vpop.f32.mrf.mxu0
      %v3230 = vadd.f32 %v3181, %v3229
      %v3231 = vpop.f32.mrf.mxu0
      %v3232 = vadd.f32 %v3183, %v3231
      %3233 = vmatmul.bf16.gmra.mxu0 %v2587
      %v3234 = vpop.f32.mrf.mxu0
      %v3235 = vadd.f32 %v3186, %v3234
      %v3236 = vpop.f32.mrf.mxu0
      %v3237 = vadd.f32 %v3188, %v3236
      %3238 = vmatmul.bf16.gmra.mxu0 %v2594
      %v3239 = vpop.f32.mrf.mxu0
      %v3240 = vadd.f32 %v3191, %v3239
      %v3241 = vpop.f32.mrf.mxu0
      %v3242 = vadd.f32 %v3193, %v3241
      %3243 = vmatmul.bf16.gmra.mxu0 %v2601
      %v3244 = vpop.f32.mrf.mxu0
      %v3245 = vadd.f32 %v3196, %v3244
      %v3246 = vpop.f32.mrf.mxu0
      %v3247 = vadd.f32 %v3198, %v3246
      %3248 = vmatmul.bf16.gmra.mxu0 %v2608
      %v3249 = vpop.f32.mrf.mxu0
      %v3250 = vadd.f32 %v3201, %v3249
      %v3251 = vpop.f32.mrf.mxu0
      %v3252 = vadd.f32 %v3203, %v3251
      %3253 = vmatmul.bf16.gmra.mxu0 %v2615
      %v3254 = vpop.f32.mrf.mxu0
      %v3255 = vadd.f32 %v3206, %v3254
      %v3256 = vpop.f32.mrf.mxu0
      %v3257 = vadd.f32 %v3208, %v3256
      %3258 = vmatmul.bf16.gmra.mxu0 %v2622
      %v3259 = vpop.f32.mrf.mxu0
      %v3260 = vadd.f32 %v3211, %v3259
      %v3261 = vpop.f32.mrf.mxu0
      %v3262 = vadd.f32 %v3213, %v3261
      %3263 = vmatmul.bf16.gmra.mxu0 %v2629
      %v3264 = vpop.f32.mrf.mxu0
      %v3265 = vadd.f32 %v3216, %v3264
      %v3266 = vpop.f32.mrf.mxu0
      %v3267 = vadd.f32 %v3218, %v3266
      %3268 = vdwg.mxu0
      %3269 = vmatpush.bf16.msra.mxu0 %v2959
      %3270 = vmatpush.bf16.msra.mxu0 %v2958
      %3271 = vmatpush.bf16.msra.mxu0 %v2957
      %3272 = vmatpush.bf16.msra.mxu0 %v2956
      %3273 = vmatpush.bf16.msra.mxu0 %v2955
      %3274 = vmatpush.bf16.msra.mxu0 %v2954
      %3275 = vmatpush.bf16.msra.mxu0 %v2953
      %3276 = vmatpush.bf16.msra.mxu0 %v2952
      %3277 = vmatmul.bf16.gmra.mxu0 %v2581
      %v3278 = vpop.f32.mrf.mxu0
      %v3279 = vadd.f32 %v3230, %v3278
      %v3280 = vpop.f32.mrf.mxu0
      %v3281 = vadd.f32 %v3232, %v3280
      %3282 = vmatmul.bf16.gmra.mxu0 %v2588
      %v3283 = vpop.f32.mrf.mxu0
      %v3284 = vadd.f32 %v3235, %v3283
      %v3285 = vpop.f32.mrf.mxu0
      %v3286 = vadd.f32 %v3237, %v3285
      %3287 = vmatmul.bf16.gmra.mxu0 %v2595
      %v3288 = vpop.f32.mrf.mxu0
      %v3289 = vadd.f32 %v3240, %v3288
      %v3290 = vpop.f32.mrf.mxu0
      %v3291 = vadd.f32 %v3242, %v3290
      %3292 = vmatmul.bf16.gmra.mxu0 %v2602
      %v3293 = vpop.f32.mrf.mxu0
      %v3294 = vadd.f32 %v3245, %v3293
      %v3295 = vpop.f32.mrf.mxu0
      %v3296 = vadd.f32 %v3247, %v3295
      %3297 = vmatmul.bf16.gmra.mxu0 %v2609
      %v3298 = vpop.f32.mrf.mxu0
      %v3299 = vadd.f32 %v3250, %v3298
      %v3300 = vpop.f32.mrf.mxu0
      %v3301 = vadd.f32 %v3252, %v3300
      %3302 = vmatmul.bf16.gmra.mxu0 %v2616
      %v3303 = vpop.f32.mrf.mxu0
      %v3304 = vadd.f32 %v3255, %v3303
      %v3305 = vpop.f32.mrf.mxu0
      %v3306 = vadd.f32 %v3257, %v3305
      %3307 = vmatmul.bf16.gmra.mxu0 %v2623
      %v3308 = vpop.f32.mrf.mxu0
      %v3309 = vadd.f32 %v3260, %v3308
      %v3310 = vpop.f32.mrf.mxu0
      %v3311 = vadd.f32 %v3262, %v3310
      %3312 = vmatmul.bf16.gmra.mxu0 %v2630
      %v3313 = vpop.f32.mrf.mxu0
      %v3314 = vadd.f32 %v3265, %v3313
      %v3315 = vpop.f32.mrf.mxu0
      %v3316 = vadd.f32 %v3267, %v3315
      %3317 = vdwg.mxu0
      %3318 = vmatpush.bf16.msra.mxu0 %v2967
      %3319 = vmatpush.bf16.msra.mxu0 %v2966
      %3320 = vmatpush.bf16.msra.mxu0 %v2965
      %3321 = vmatpush.bf16.msra.mxu0 %v2964
      %3322 = vmatpush.bf16.msra.mxu0 %v2963
      %3323 = vmatpush.bf16.msra.mxu0 %v2962
      %3324 = vmatpush.bf16.msra.mxu0 %v2961
      %3325 = vmatpush.bf16.msra.mxu0 %v2960
      %3326 = vmatmul.bf16.gmra.mxu0 %v2582
      %v3327 = vpop.f32.mrf.mxu0
      %v3328 = vadd.f32 %v3279, %v3327
      %v3329 = vpop.f32.mrf.mxu0
      %v3330 = vadd.f32 %v3281, %v3329
      %3331 = vmatmul.bf16.gmra.mxu0 %v2589
      %v3332 = vpop.f32.mrf.mxu0
      %v3333 = vadd.f32 %v3284, %v3332
      %v3334 = vpop.f32.mrf.mxu0
      %v3335 = vadd.f32 %v3286, %v3334
      %3336 = vmatmul.bf16.gmra.mxu0 %v2596
      %v3337 = vpop.f32.mrf.mxu0
      %v3338 = vadd.f32 %v3289, %v3337
      %v3339 = vpop.f32.mrf.mxu0
      %v3340 = vadd.f32 %v3291, %v3339
      %3341 = vmatmul.bf16.gmra.mxu0 %v2603
      %v3342 = vpop.f32.mrf.mxu0
      %v3343 = vadd.f32 %v3294, %v3342
      %v3344 = vpop.f32.mrf.mxu0
      %v3345 = vadd.f32 %v3296, %v3344
      %3346 = vmatmul.bf16.gmra.mxu0 %v2610
      %v3347 = vpop.f32.mrf.mxu0
      %v3348 = vadd.f32 %v3299, %v3347
      %v3349 = vpop.f32.mrf.mxu0
      %v3350 = vadd.f32 %v3301, %v3349
      %3351 = vmatmul.bf16.gmra.mxu0 %v2617
      %v3352 = vpop.f32.mrf.mxu0
      %v3353 = vadd.f32 %v3304, %v3352
      %v3354 = vpop.f32.mrf.mxu0
      %v3355 = vadd.f32 %v3306, %v3354
      %3356 = vmatmul.bf16.gmra.mxu0 %v2624
      %v3357 = vpop.f32.mrf.mxu0
      %v3358 = vadd.f32 %v3309, %v3357
      %v3359 = vpop.f32.mrf.mxu0
      %v3360 = vadd.f32 %v3311, %v3359
      %3361 = vmatmul.bf16.gmra.mxu0 %v2631
      %v3362 = vpop.f32.mrf.mxu0
      %v3363 = vadd.f32 %v3314, %v3362
      %v3364 = vpop.f32.mrf.mxu0
      %v3365 = vadd.f32 %v3316, %v3364
      %3366 = vdwg.mxu0
      %v3367 = vmax.f32 %v3328, 0.0
      %v3368 = vmax.f32 %v3330, 0.0
      %v3369 = vmax.f32 %v3333, 0.0
      %v3370 = vmax.f32 %v3335, 0.0
      %v3371 = vmax.f32 %v3338, 0.0
      %v3372 = vmax.f32 %v3340, 0.0
      %v3373 = vmax.f32 %v3343, 0.0
      %v3374 = vmax.f32 %v3345, 0.0
      %v3375 = vmax.f32 %v3348, 0.0
      %v3376 = vmax.f32 %v3350, 0.0
      %v3377 = vmax.f32 %v3353, 0.0
      %v3378 = vmax.f32 %v3355, 0.0
      %v3379 = vmax.f32 %v3358, 0.0
      %v3380 = vmax.f32 %v3360, 0.0
      %v3381 = vmax.f32 %v3363, 0.0
      %v3382 = vmax.f32 %v3365, 0.0
      %v3383 = vpack.c.bf16 %v3368, %v3367
      %v3384 = vpack.c.bf16 %v3370, %v3369
      %v3385 = vpack.c.bf16 %v3372, %v3371
      %v3386 = vpack.c.bf16 %v3374, %v3373
      %v3387 = vpack.c.bf16 %v3376, %v3375
      %v3388 = vpack.c.bf16 %v3378, %v3377
      %v3389 = vpack.c.bf16 %v3380, %v3379
      %v3390 = vpack.c.bf16 %v3382, %v3381
      %v3391 = vld [vmem:[%s2] sm:$0xf]
      %v3392 = vld [vmem:[%s2 + $0x4] sm:$0xf]
      %v3393 = vld [vmem:[%s2 + $0x8] sm:$0xf]
      %v3394 = vld [vmem:[%s2 + $0xc] sm:$0xf]
      %v3395 = vld [vmem:[%s2 + $0x10] sm:$0xf]
      %v3396 = vld [vmem:[%s2 + $0x14] sm:$0xf]
      %v3397 = vld [vmem:[%s2 + $0x18] sm:$0xf]
      %v3398 = vld [vmem:[%s2 + $0x1c] sm:$0xf]
      %v3399 = vld [vmem:[%s2 + $0x20] sm:$0xf]
      %v3400 = vld [vmem:[%s2 + $0x24] sm:$0xf]
      %v3401 = vld [vmem:[%s2 + $0x28] sm:$0xf]
      %v3402 = vld [vmem:[%s2 + $0x2c] sm:$0xf]
      %v3403 = vld [vmem:[%s2 + $0x30] sm:$0xf]
      %v3404 = vld [vmem:[%s2 + $0x34] sm:$0xf]
      %v3405 = vld [vmem:[%s2 + $0x38] sm:$0xf]
      %v3406 = vld [vmem:[%s2 + $0x3c] sm:$0xf]
      %v3407 = vld [vmem:[%s3] sm:$0x1]
      %v3409 = vperm.slane %v3407, 0
      %v3427 = vunpack.c.l.b16 %v3391
      %v3428 = vunpack.c.l.b16 %v3392
      %v3429 = vunpack.c.l.b16 %v3393
      %v3430 = vunpack.c.l.b16 %v3394
      %v3431 = vunpack.c.l.b16 %v3395
      %v3432 = vunpack.c.l.b16 %v3396
      %v3433 = vunpack.c.l.b16 %v3397
      %v3434 = vunpack.c.l.b16 %v3398
      %v3435 = vunpack.c.l.b16 %v3399
      %v3436 = vunpack.c.l.b16 %v3400
      %v3437 = vunpack.c.l.b16 %v3401
      %v3438 = vunpack.c.l.b16 %v3402
      %v3439 = vunpack.c.l.b16 %v3403
      %v3440 = vunpack.c.l.b16 %v3404
      %v3441 = vunpack.c.l.b16 %v3405
      %v3442 = vunpack.c.l.b16 %v3406
      %v3443 = vpack.c.b16 %v3428, %v3427
      %v3444 = vpack.c.b16 %v3430, %v3429
      %v3445 = vpack.c.b16 %v3432, %v3431
      %v3446 = vpack.c.b16 %v3434, %v3433
      %v3447 = vpack.c.b16 %v3436, %v3435
      %v3448 = vpack.c.b16 %v3438, %v3437
      %v3449 = vpack.c.b16 %v3440, %v3439
      %v3450 = vpack.c.b16 %v3442, %v3441
      %3459 = vmatpush.bf16.msra.mxu0 %v3450
      %3460 = vmatpush.bf16.msra.mxu0 %v3449
      %3461 = vmatpush.bf16.msra.mxu0 %v3448
      %3462 = vmatpush.bf16.msra.mxu0 %v3447
      %3463 = vmatpush.bf16.msra.mxu0 %v3446
      %3464 = vmatpush.bf16.msra.mxu0 %v3445
      %3465 = vmatpush.bf16.msra.mxu0 %v3444
      %3466 = vmatpush.bf16.msra.mxu0 %v3443
      %3467 = vmatmul.bf16.gmra.mxu0 %v3383
      %v3468 = vpop.f32.mrf.mxu0
      %v3469 = vadd.f32 %v3409, %v3468
      %v3470 = vpop.f32.mrf.mxu0
      %v3471 = vadd.f32 %v3409, %v3470
      %3472 = vmatmul.bf16.gmra.mxu0 %v3384
      %v3473 = vpop.f32.mrf.mxu0
      %v3474 = vadd.f32 %v3409, %v3473
      %v3475 = vpop.f32.mrf.mxu0
      %v3476 = vadd.f32 %v3409, %v3475
      %3477 = vmatmul.bf16.gmra.mxu0 %v3385
      %v3478 = vpop.f32.mrf.mxu0
      %v3479 = vadd.f32 %v3409, %v3478
      %v3480 = vpop.f32.mrf.mxu0
      %v3481 = vadd.f32 %v3409, %v3480
      %3482 = vmatmul.bf16.gmra.mxu0 %v3386
      %v3483 = vpop.f32.mrf.mxu0
      %v3484 = vadd.f32 %v3409, %v3483
      %v3485 = vpop.f32.mrf.mxu0
      %v3486 = vadd.f32 %v3409, %v3485
      %3487 = vmatmul.bf16.gmra.mxu0 %v3387
      %v3488 = vpop.f32.mrf.mxu0
      %v3489 = vadd.f32 %v3409, %v3488
      %v3490 = vpop.f32.mrf.mxu0
      %v3491 = vadd.f32 %v3409, %v3490
      %3492 = vmatmul.bf16.gmra.mxu0 %v3388
      %v3493 = vpop.f32.mrf.mxu0
      %v3494 = vadd.f32 %v3409, %v3493
      %v3495 = vpop.f32.mrf.mxu0
      %v3496 = vadd.f32 %v3409, %v3495
      %3497 = vmatmul.bf16.gmra.mxu0 %v3389
      %v3498 = vpop.f32.mrf.mxu0
      %v3499 = vadd.f32 %v3409, %v3498
      %v3500 = vpop.f32.mrf.mxu0
      %v3501 = vadd.f32 %v3409, %v3500
      %3502 = vmatmul.bf16.gmra.mxu0 %v3390
      %v3503 = vpop.f32.mrf.mxu0
      %v3504 = vadd.f32 %v3409, %v3503
      %v3505 = vpop.f32.mrf.mxu0
      %v3506 = vadd.f32 %v3409, %v3505
      %3507 = vdwg.mxu0
      %v3508 = vmax.f32 %v3469, 0.0
      %v3509 = vmax.f32 %v3471, 0.0
      %v3510 = vmax.f32 %v3474, 0.0
      %v3511 = vmax.f32 %v3476, 0.0
      %v3512 = vmax.f32 %v3479, 0.0
      %v3513 = vmax.f32 %v3481, 0.0
      %v3514 = vmax.f32 %v3484, 0.0
      %v3515 = vmax.f32 %v3486, 0.0
      %v3516 = vmax.f32 %v3489, 0.0
      %v3517 = vmax.f32 %v3491, 0.0
      %v3518 = vmax.f32 %v3494, 0.0
      %v3519 = vmax.f32 %v3496, 0.0
      %v3520 = vmax.f32 %v3499, 0.0
      %v3521 = vmax.f32 %v3501, 0.0
      %v3522 = vmax.f32 %v3504, 0.0
      %v3523 = vmax.f32 %v3506, 0.0
      %v3524 = vpack.c.bf16 %v3509, %v3508
      %v3525 = vpack.c.bf16 %v3511, %v3510
      %v3526 = vpack.c.bf16 %v3513, %v3512
      %v3527 = vpack.c.bf16 %v3515, %v3514
      %v3528 = vpack.c.bf16 %v3517, %v3516
      %v3529 = vpack.c.bf16 %v3519, %v3518
      %v3530 = vpack.c.bf16 %v3521, %v3520
      %v3531 = vpack.c.bf16 %v3523, %v3522
      %v3532 = vld [vmem:[%s4] sm:$0xf]
      %v3533 = vld [vmem:[%s4 + $0x4] sm:$0xf]
      %v3534 = vld [vmem:[%s4 + $0x8] sm:$0xf]
      %v3535 = vld [vmem:[%s4 + $0xc] sm:$0xf]
      %v3536 = vld [vmem:[%s4 + $0x10] sm:$0xf]
      %v3537 = vld [vmem:[%s4 + $0x14] sm:$0xf]
      %v3538 = vld [vmem:[%s4 + $0x18] sm:$0xf]
      %v3539 = vld [vmem:[%s4 + $0x1c] sm:$0xf]
      %v3540 = vld [vmem:[%s5] sm:$0x1]
      %v3542 = vperm.slane %v3540, 0
      %v3552 = vunpack.c.l.b16 %v3532
      %v3553 = vunpack.c.l.b16 %v3533
      %v3554 = vunpack.c.l.b16 %v3534
      %v3555 = vunpack.c.l.b16 %v3535
      %v3556 = vunpack.c.l.b16 %v3536
      %v3557 = vunpack.c.l.b16 %v3537
      %v3558 = vunpack.c.l.b16 %v3538
      %v3559 = vunpack.c.l.b16 %v3539
      %v3560 = vpack.c.b16 %v3553, %v3552
      %v3561 = vpack.c.b16 %v3555, %v3554
      %v3562 = vpack.c.b16 %v3557, %v3556
      %v3563 = vpack.c.b16 %v3559, %v3558
      %vm3568 = vcmask 523264
      %v3570 = vsel %vm3568, %v3524, 0
      %v3573 = vsel %vm3568, %v3525, 0
      %v3576 = vsel %vm3568, %v3526, 0
      %v3579 = vsel %vm3568, %v3527, 0
      %v3582 = vsel %vm3568, %v3528, 0
      %v3585 = vsel %vm3568, %v3529, 0
      %v3588 = vsel %vm3568, %v3530, 0
      %v3591 = vsel %vm3568, %v3531, 0
      %3593 = vmatpush.bf16.msra.mxu0 0
      %3594 = vmatpush.bf16.msra.mxu0 0
      %3595 = vmatpush.bf16.msra.mxu0 0
      %3596 = vmatpush.bf16.msra.mxu0 0
      %3597 = vmatpush.bf16.msra.mxu0 %v3563
      %3598 = vmatpush.bf16.msra.mxu0 %v3562
      %3599 = vmatpush.bf16.msra.mxu0 %v3561
      %3600 = vmatpush.bf16.msra.mxu0 %v3560
      %3601 = vmatmul.bf16.gmra.mxu0 %v3570
      %v3602 = vpop.f32.mrf.mxu0
      %v3603 = vadd.f32 %v3542, %v3602
      %v3604 = vpop.f32.mrf.mxu0
      %v3605 = vadd.f32 %v3542, %v3604
      %3606 = vmatmul.bf16.gmra.mxu0 %v3573
      %v3607 = vpop.f32.mrf.mxu0
      %v3608 = vadd.f32 %v3542, %v3607
      %v3609 = vpop.f32.mrf.mxu0
      %v3610 = vadd.f32 %v3542, %v3609
      %3611 = vmatmul.bf16.gmra.mxu0 %v3576
      %v3612 = vpop.f32.mrf.mxu0
      %v3613 = vadd.f32 %v3542, %v3612
      %v3614 = vpop.f32.mrf.mxu0
      %v3615 = vadd.f32 %v3542, %v3614
      %3616 = vmatmul.bf16.gmra.mxu0 %v3579
      %v3617 = vpop.f32.mrf.mxu0
      %v3618 = vadd.f32 %v3542, %v3617
      %v3619 = vpop.f32.mrf.mxu0
      %v3620 = vadd.f32 %v3542, %v3619
      %3621 = vmatmul.bf16.gmra.mxu0 %v3582
      %v3622 = vpop.f32.mrf.mxu0
      %v3623 = vadd.f32 %v3542, %v3622
      %v3624 = vpop.f32.mrf.mxu0
      %v3625 = vadd.f32 %v3542, %v3624
      %3626 = vmatmul.bf16.gmra.mxu0 %v3585
      %v3627 = vpop.f32.mrf.mxu0
      %v3628 = vadd.f32 %v3542, %v3627
      %v3629 = vpop.f32.mrf.mxu0
      %v3630 = vadd.f32 %v3542, %v3629
      %3631 = vmatmul.bf16.gmra.mxu0 %v3588
      %v3632 = vpop.f32.mrf.mxu0
      %v3633 = vadd.f32 %v3542, %v3632
      %v3634 = vpop.f32.mrf.mxu0
      %v3635 = vadd.f32 %v3542, %v3634
      %3636 = vmatmul.bf16.gmra.mxu0 %v3591
      %v3637 = vpop.f32.mrf.mxu0
      %v3638 = vadd.f32 %v3542, %v3637
      %v3639 = vpop.f32.mrf.mxu0
      %v3640 = vadd.f32 %v3542, %v3639
      %3641 = vdwg.mxu0
      %v3642 = vmax.f32 %v3603, 0.0
      %v3643 = vmax.f32 %v3605, 0.0
      %v3644 = vmax.f32 %v3608, 0.0
      %v3645 = vmax.f32 %v3610, 0.0
      %v3646 = vmax.f32 %v3613, 0.0
      %v3647 = vmax.f32 %v3615, 0.0
      %v3648 = vmax.f32 %v3618, 0.0
      %v3649 = vmax.f32 %v3620, 0.0
      %v3650 = vmax.f32 %v3623, 0.0
      %v3651 = vmax.f32 %v3625, 0.0
      %v3652 = vmax.f32 %v3628, 0.0
      %v3653 = vmax.f32 %v3630, 0.0
      %v3654 = vmax.f32 %v3633, 0.0
      %v3655 = vmax.f32 %v3635, 0.0
      %v3656 = vmax.f32 %v3638, 0.0
      %v3657 = vmax.f32 %v3640, 0.0
      %v3658 = vpack.c.bf16 %v3643, %v3642
      %v3659 = vpack.c.bf16 %v3645, %v3644
      %v3660 = vpack.c.bf16 %v3647, %v3646
      %v3661 = vpack.c.bf16 %v3649, %v3648
      %v3662 = vpack.c.bf16 %v3651, %v3650
      %v3663 = vpack.c.bf16 %v3653, %v3652
      %v3664 = vpack.c.bf16 %v3655, %v3654
      %v3665 = vpack.c.bf16 %v3657, %v3656
      %v3666 = vld [vmem:[%s6] sm:$0xf]
      %v3667 = vld [vmem:[%s6 + $0x4] sm:$0xf]
      %v3668 = vld [vmem:[%s6 + $0x8] sm:$0xf]
      %v3669 = vld [vmem:[%s6 + $0xc] sm:$0xf]
      %v3670 = vld [vmem:[%s7] sm:$0x1]
      %v3672 = vperm.slane %v3670, 0
      %v3678 = vunpack.c.l.b16 %v3666
      %v3679 = vunpack.c.l.b16 %v3667
      %v3680 = vunpack.c.l.b16 %v3668
      %v3681 = vunpack.c.l.b16 %v3669
      %v3682 = vpack.c.b16 %v3679, %v3678
      %v3683 = vpack.c.b16 %v3681, %v3680
      %vm3686 = vcmask 261120
      %v3688 = vsel %vm3686, %v3658, 0
      %v3691 = vsel %vm3686, %v3659, 0
      %v3694 = vsel %vm3686, %v3660, 0
      %v3697 = vsel %vm3686, %v3661, 0
      %v3700 = vsel %vm3686, %v3662, 0
      %v3703 = vsel %vm3686, %v3663, 0
      %v3706 = vsel %vm3686, %v3664, 0
      %v3709 = vsel %vm3686, %v3665, 0
      %3711 = vmatpush.bf16.msra.mxu0 0
      %3712 = vmatpush.bf16.msra.mxu0 0
      %3713 = vmatpush.bf16.msra.mxu0 0
      %3714 = vmatpush.bf16.msra.mxu0 0
      %3715 = vmatpush.bf16.msra.mxu0 0
      %3716 = vmatpush.bf16.msra.mxu0 0
      %3717 = vmatpush.bf16.msra.mxu0 %v3683
      %3718 = vmatpush.bf16.msra.mxu0 %v3682
      %3719 = vmatmul.bf16.gmra.mxu0 %v3688
      %v3720 = vpop.f32.mrf.mxu0
      %v3721 = vadd.f32 %v3672, %v3720
      %v3722 = vpop.f32.mrf.mxu0
      %v3723 = vadd.f32 %v3672, %v3722
      %3724 = vmatmul.bf16.gmra.mxu0 %v3691
      %v3725 = vpop.f32.mrf.mxu0
      %v3726 = vadd.f32 %v3672, %v3725
      %v3727 = vpop.f32.mrf.mxu0
      %v3728 = vadd.f32 %v3672, %v3727
      %3729 = vmatmul.bf16.gmra.mxu0 %v3694
      %v3730 = vpop.f32.mrf.mxu0
      %v3731 = vadd.f32 %v3672, %v3730
      %v3732 = vpop.f32.mrf.mxu0
      %v3733 = vadd.f32 %v3672, %v3732
      %3734 = vmatmul.bf16.gmra.mxu0 %v3697
      %v3735 = vpop.f32.mrf.mxu0
      %v3736 = vadd.f32 %v3672, %v3735
      %v3737 = vpop.f32.mrf.mxu0
      %v3738 = vadd.f32 %v3672, %v3737
      %3739 = vmatmul.bf16.gmra.mxu0 %v3700
      %v3740 = vpop.f32.mrf.mxu0
      %v3741 = vadd.f32 %v3672, %v3740
      %v3742 = vpop.f32.mrf.mxu0
      %v3743 = vadd.f32 %v3672, %v3742
      %3744 = vmatmul.bf16.gmra.mxu0 %v3703
      %v3745 = vpop.f32.mrf.mxu0
      %v3746 = vadd.f32 %v3672, %v3745
      %v3747 = vpop.f32.mrf.mxu0
      %v3748 = vadd.f32 %v3672, %v3747
      %3749 = vmatmul.bf16.gmra.mxu0 %v3706
      %v3750 = vpop.f32.mrf.mxu0
      %v3751 = vadd.f32 %v3672, %v3750
      %v3752 = vpop.f32.mrf.mxu0
      %v3753 = vadd.f32 %v3672, %v3752
      %3754 = vmatmul.bf16.gmra.mxu0 %v3709
      %v3755 = vpop.f32.mrf.mxu0
      %v3756 = vadd.f32 %v3672, %v3755
      %v3757 = vpop.f32.mrf.mxu0
      %v3758 = vadd.f32 %v3672, %v3757
      %3759 = vdwg.mxu0
      %v3760 = vmax.f32 %v3721, 0.0
      %v3761 = vmax.f32 %v3723, 0.0
      %v3762 = vmax.f32 %v3726, 0.0
      %v3763 = vmax.f32 %v3728, 0.0
      %v3764 = vmax.f32 %v3731, 0.0
      %v3765 = vmax.f32 %v3733, 0.0
      %v3766 = vmax.f32 %v3736, 0.0
      %v3767 = vmax.f32 %v3738, 0.0
      %v3768 = vmax.f32 %v3741, 0.0
      %v3769 = vmax.f32 %v3743, 0.0
      %v3770 = vmax.f32 %v3746, 0.0
      %v3771 = vmax.f32 %v3748, 0.0
      %v3772 = vmax.f32 %v3751, 0.0
      %v3773 = vmax.f32 %v3753, 0.0
      %v3774 = vmax.f32 %v3756, 0.0
      %v3775 = vmax.f32 %v3758, 0.0
      %v3776 = vpack.c.bf16 %v3761, %v3760
      %v3777 = vpack.c.bf16 %v3763, %v3762
      %v3778 = vpack.c.bf16 %v3765, %v3764
      %v3779 = vpack.c.bf16 %v3767, %v3766
      %v3780 = vpack.c.bf16 %v3769, %v3768
      %v3781 = vpack.c.bf16 %v3771, %v3770
      %v3782 = vpack.c.bf16 %v3773, %v3772
      %v3783 = vpack.c.bf16 %v3775, %v3774
      %v3784 = vld [vmem:[%s8] sm:$0xf]
      %v3785 = vld [vmem:[%s8 + $0x4] sm:$0xf]
      %v3786 = vld [vmem:[%s8 + $0x8] sm:$0xf]
      %v3787 = vld [vmem:[%s8 + $0xc] sm:$0xf]
      %v3788 = vld [vmem:[%s9] sm:$0x1]
      %v3790 = vperm.slane %v3788, 0
      %v3796 = vunpack.c.l.b16 %v3784
      %v3797 = vunpack.c.l.b16 %v3785
      %v3798 = vunpack.c.l.b16 %v3786
      %v3799 = vunpack.c.l.b16 %v3787
      %v3800 = vpack.c.b16 %v3797, %v3796
      %v3801 = vpack.c.b16 %v3799, %v3798
      %v3805 = vsel %vm3686, %v3776, 0
      %v3808 = vsel %vm3686, %v3777, 0
      %v3811 = vsel %vm3686, %v3778, 0
      %v3814 = vsel %vm3686, %v3779, 0
      %v3817 = vsel %vm3686, %v3780, 0
      %v3820 = vsel %vm3686, %v3781, 0
      %v3823 = vsel %vm3686, %v3782, 0
      %v3826 = vsel %vm3686, %v3783, 0
      %3828 = vmatpush.bf16.msra.mxu0 0
      %3829 = vmatpush.bf16.msra.mxu0 0
      %3830 = vmatpush.bf16.msra.mxu0 0
      %3831 = vmatpush.bf16.msra.mxu0 0
      %3832 = vmatpush.bf16.msra.mxu0 0
      %3833 = vmatpush.bf16.msra.mxu0 0
      %3834 = vmatpush.bf16.msra.mxu0 %v3801
      %3835 = vmatpush.bf16.msra.mxu0 %v3800
      %3836 = vmatmul.bf16.gmra.mxu0 %v3805
      %v3837 = vpop.f32.mrf.mxu0
      %v3838 = vadd.f32 %v3790, %v3837
      %v3839 = vpop.f32.mrf.mxu0
      %v3840 = vadd.f32 %v3790, %v3839
      %3841 = vmatmul.bf16.gmra.mxu0 %v3808
      %v3842 = vpop.f32.mrf.mxu0
      %v3843 = vadd.f32 %v3790, %v3842
      %v3844 = vpop.f32.mrf.mxu0
      %v3845 = vadd.f32 %v3790, %v3844
      %3846 = vmatmul.bf16.gmra.mxu0 %v3811
      %v3847 = vpop.f32.mrf.mxu0
      %v3848 = vadd.f32 %v3790, %v3847
      %v3849 = vpop.f32.mrf.mxu0
      %v3850 = vadd.f32 %v3790, %v3849
      %3851 = vmatmul.bf16.gmra.mxu0 %v3814
      %v3852 = vpop.f32.mrf.mxu0
      %v3853 = vadd.f32 %v3790, %v3852
      %v3854 = vpop.f32.mrf.mxu0
      %v3855 = vadd.f32 %v3790, %v3854
      %3856 = vmatmul.bf16.gmra.mxu0 %v3817
      %v3857 = vpop.f32.mrf.mxu0
      %v3858 = vadd.f32 %v3790, %v3857
      %v3859 = vpop.f32.mrf.mxu0
      %v3860 = vadd.f32 %v3790, %v3859
      %3861 = vmatmul.bf16.gmra.mxu0 %v3820
      %v3862 = vpop.f32.mrf.mxu0
      %v3863 = vadd.f32 %v3790, %v3862
      %v3864 = vpop.f32.mrf.mxu0
      %v3865 = vadd.f32 %v3790, %v3864
      %3866 = vmatmul.bf16.gmra.mxu0 %v3823
      %v3867 = vpop.f32.mrf.mxu0
      %v3868 = vadd.f32 %v3790, %v3867
      %v3869 = vpop.f32.mrf.mxu0
      %v3870 = vadd.f32 %v3790, %v3869
      %3871 = vmatmul.bf16.gmra.mxu0 %v3826
      %v3872 = vpop.f32.mrf.mxu0
      %v3873 = vadd.f32 %v3790, %v3872
      %v3874 = vpop.f32.mrf.mxu0
      %v3875 = vadd.f32 %v3790, %v3874
      %3876 = vdwg.mxu0
      %v3877 = vmax.f32 %v3838, 0.0
      %v3878 = vmax.f32 %v3840, 0.0
      %v3879 = vmax.f32 %v3843, 0.0
      %v3880 = vmax.f32 %v3845, 0.0
      %v3881 = vmax.f32 %v3848, 0.0
      %v3882 = vmax.f32 %v3850, 0.0
      %v3883 = vmax.f32 %v3853, 0.0
      %v3884 = vmax.f32 %v3855, 0.0
      %v3885 = vmax.f32 %v3858, 0.0
      %v3886 = vmax.f32 %v3860, 0.0
      %v3887 = vmax.f32 %v3863, 0.0
      %v3888 = vmax.f32 %v3865, 0.0
      %v3889 = vmax.f32 %v3868, 0.0
      %v3890 = vmax.f32 %v3870, 0.0
      %v3891 = vmax.f32 %v3873, 0.0
      %v3892 = vmax.f32 %v3875, 0.0
      %v3893 = vpack.c.bf16 %v3878, %v3877
      %v3894 = vpack.c.bf16 %v3880, %v3879
      %v3895 = vpack.c.bf16 %v3882, %v3881
      %v3896 = vpack.c.bf16 %v3884, %v3883
      %v3897 = vpack.c.bf16 %v3886, %v3885
      %v3898 = vpack.c.bf16 %v3888, %v3887
      %v3899 = vpack.c.bf16 %v3890, %v3889
      %v3900 = vpack.c.bf16 %v3892, %v3891
      %v3901 = vld [vmem:[%s10] sm:$0xf]
      %v3902 = vld [vmem:[%s10 + $0x4] sm:$0xf]
      %v3903 = vld [vmem:[%s10 + $0x8] sm:$0xf]
      %v3904 = vld [vmem:[%s10 + $0xc] sm:$0xf]
      %v3905 = vld [vmem:[%s10 + $0x10] sm:$0xf]
      %v3906 = vld [vmem:[%s10 + $0x14] sm:$0xf]
      %v3907 = vld [vmem:[%s10 + $0x18] sm:$0xf]
      %v3908 = vld [vmem:[%s10 + $0x1c] sm:$0xf]
      %v3909 = vld [vmem:[%s11] sm:$0x1]
      %v3911 = vperm.slane %v3909, 0
      %v3921 = vunpack.c.l.b16 %v3901
      %v3922 = vunpack.c.l.b16 %v3902
      %v3923 = vunpack.c.l.b16 %v3903
      %v3924 = vunpack.c.l.b16 %v3904
      %v3925 = vunpack.c.l.b16 %v3905
      %v3926 = vunpack.c.l.b16 %v3906
      %v3927 = vunpack.c.l.b16 %v3907
      %v3928 = vunpack.c.l.b16 %v3908
      %v3929 = vpack.c.b16 %v3922, %v3921
      %v3930 = vpack.c.b16 %v3924, %v3923
      %v3931 = vpack.c.b16 %v3926, %v3925
      %v3932 = vpack.c.b16 %v3928, %v3927
      %v3938 = vsel %vm3568, %v3893, 0
      %v3941 = vsel %vm3568, %v3894, 0
      %v3944 = vsel %vm3568, %v3895, 0
      %v3947 = vsel %vm3568, %v3896, 0
      %v3950 = vsel %vm3568, %v3897, 0
      %v3953 = vsel %vm3568, %v3898, 0
      %v3956 = vsel %vm3568, %v3899, 0
      %v3959 = vsel %vm3568, %v3900, 0
      %3961 = vmatpush.bf16.msra.mxu0 0
      %3962 = vmatpush.bf16.msra.mxu0 0
      %3963 = vmatpush.bf16.msra.mxu0 0
      %3964 = vmatpush.bf16.msra.mxu0 0
      %3965 = vmatpush.bf16.msra.mxu0 %v3932
      %3966 = vmatpush.bf16.msra.mxu0 %v3931
      %3967 = vmatpush.bf16.msra.mxu0 %v3930
      %3968 = vmatpush.bf16.msra.mxu0 %v3929
      %3969 = vmatmul.bf16.gmra.mxu0 %v3938
      %v3970 = vpop.f32.mrf.mxu0
      %v3971 = vadd.f32 %v3911, %v3970
      %v3972 = vpop.f32.mrf.mxu0
      %v3973 = vadd.f32 %v3911, %v3972
      %3974 = vmatmul.bf16.gmra.mxu0 %v3941
      %v3975 = vpop.f32.mrf.mxu0
      %v3976 = vadd.f32 %v3911, %v3975
      %v3977 = vpop.f32.mrf.mxu0
      %v3978 = vadd.f32 %v3911, %v3977
      %3979 = vmatmul.bf16.gmra.mxu0 %v3944
      %v3980 = vpop.f32.mrf.mxu0
      %v3981 = vadd.f32 %v3911, %v3980
      %v3982 = vpop.f32.mrf.mxu0
      %v3983 = vadd.f32 %v3911, %v3982
      %3984 = vmatmul.bf16.gmra.mxu0 %v3947
      %v3985 = vpop.f32.mrf.mxu0
      %v3986 = vadd.f32 %v3911, %v3985
      %v3987 = vpop.f32.mrf.mxu0
      %v3988 = vadd.f32 %v3911, %v3987
      %3989 = vmatmul.bf16.gmra.mxu0 %v3950
      %v3990 = vpop.f32.mrf.mxu0
      %v3991 = vadd.f32 %v3911, %v3990
      %v3992 = vpop.f32.mrf.mxu0
      %v3993 = vadd.f32 %v3911, %v3992
      %3994 = vmatmul.bf16.gmra.mxu0 %v3953
      %v3995 = vpop.f32.mrf.mxu0
      %v3996 = vadd.f32 %v3911, %v3995
      %v3997 = vpop.f32.mrf.mxu0
      %v3998 = vadd.f32 %v3911, %v3997
      %3999 = vmatmul.bf16.gmra.mxu0 %v3956
      %v4000 = vpop.f32.mrf.mxu0
      %v4001 = vadd.f32 %v3911, %v4000
      %v4002 = vpop.f32.mrf.mxu0
      %v4003 = vadd.f32 %v3911, %v4002
      %4004 = vmatmul.bf16.gmra.mxu0 %v3959
      %v4005 = vpop.f32.mrf.mxu0
      %v4006 = vadd.f32 %v3911, %v4005
      %v4007 = vpop.f32.mrf.mxu0
      %v4008 = vadd.f32 %v3911, %v4007
      %4009 = vdwg.mxu0
      %v4010 = vmax.f32 %v3971, 0.0
      %v4011 = vmax.f32 %v3973, 0.0
      %v4012 = vmax.f32 %v3976, 0.0
      %v4013 = vmax.f32 %v3978, 0.0
      %v4014 = vmax.f32 %v3981, 0.0
      %v4015 = vmax.f32 %v3983, 0.0
      %v4016 = vmax.f32 %v3986, 0.0
      %v4017 = vmax.f32 %v3988, 0.0
      %v4018 = vmax.f32 %v3991, 0.0
      %v4019 = vmax.f32 %v3993, 0.0
      %v4020 = vmax.f32 %v3996, 0.0
      %v4021 = vmax.f32 %v3998, 0.0
      %v4022 = vmax.f32 %v4001, 0.0
      %v4023 = vmax.f32 %v4003, 0.0
      %v4024 = vmax.f32 %v4006, 0.0
      %v4025 = vmax.f32 %v4008, 0.0
      %v4026 = vpack.c.bf16 %v4011, %v4010
      %v4027 = vpack.c.bf16 %v4013, %v4012
      %v4028 = vpack.c.bf16 %v4015, %v4014
      %v4029 = vpack.c.bf16 %v4017, %v4016
      %v4030 = vpack.c.bf16 %v4019, %v4018
      %v4031 = vpack.c.bf16 %v4021, %v4020
      %v4032 = vpack.c.bf16 %v4023, %v4022
      %v4033 = vpack.c.bf16 %v4025, %v4024
      %v4034 = vld [vmem:[%s12] sm:$0xff]
      %v4035 = vld [vmem:[%s12 + $0x8] sm:$0xff]
      %v4036 = vld [vmem:[%s12 + $0x10] sm:$0xff]
      %v4037 = vld [vmem:[%s12 + $0x18] sm:$0xf]
      %v4038 = vld [vmem:[%s12 + $0x1c] sm:$0xff]
      %v4039 = vld [vmem:[%s12 + $0x24] sm:$0xff]
      %v4040 = vld [vmem:[%s12 + $0x2c] sm:$0xff]
      %v4041 = vld [vmem:[%s12 + $0x34] sm:$0xf]
      %v4042 = vld [vmem:[%s12 + $0x38] sm:$0xff]
      %v4043 = vld [vmem:[%s12 + $0x40] sm:$0xff]
      %v4044 = vld [vmem:[%s12 + $0x48] sm:$0xff]
      %v4045 = vld [vmem:[%s12 + $0x50] sm:$0xf]
      %v4046 = vld [vmem:[%s12 + $0x54] sm:$0xff]
      %v4047 = vld [vmem:[%s12 + $0x5c] sm:$0xff]
      %v4048 = vld [vmem:[%s12 + $0x64] sm:$0xff]
      %v4049 = vld [vmem:[%s12 + $0x6c] sm:$0xf]
      %v4050 = vld [vmem:[%s12 + $0x70] sm:$0xff]
      %v4051 = vld [vmem:[%s12 + $0x78] sm:$0xff]
      %v4052 = vld [vmem:[%s12 + $0x80] sm:$0xff]
      %v4053 = vld [vmem:[%s12 + $0x88] sm:$0xf]
      %v4054 = vld [vmem:[%s12 + $0x8c] sm:$0xff]
      %v4055 = vld [vmem:[%s12 + $0x94] sm:$0xff]
      %v4056 = vld [vmem:[%s12 + $0x9c] sm:$0xff]
      %v4057 = vld [vmem:[%s12 + $0xa4] sm:$0xf]
      %v4058 = vld [vmem:[%s12 + $0xa8] sm:$0xff]
      %v4059 = vld [vmem:[%s12 + $0xb0] sm:$0xff]
      %v4060 = vld [vmem:[%s12 + $0xb8] sm:$0xff]
      %v4061 = vld [vmem:[%s12 + $0xc0] sm:$0xf]
      %v4062 = vld [vmem:[%s12 + $0xc4] sm:$0xff]
      %v4063 = vld [vmem:[%s12 + $0xcc] sm:$0xff]
      %v4064 = vld [vmem:[%s12 + $0xd4] sm:$0xff]
      %v4065 = vld [vmem:[%s12 + $0xdc] sm:$0xf]
      %v4066 = vld [vmem:[%s12 + $0xe0] sm:$0xff]
      %v4067 = vld [vmem:[%s12 + $0xe8] sm:$0xff]
      %v4068 = vld [vmem:[%s12 + $0xf0] sm:$0xff]
      %v4069 = vld [vmem:[%s12 + $0xf8] sm:$0xf]
      %v4070 = vld [vmem:[%s12 + $0xfc] sm:$0xff]
      %v4071 = vld [vmem:[%s12 + $0x104] sm:$0xff]
      %v4072 = vld [vmem:[%s12 + $0x10c] sm:$0xff]
      %v4073 = vld [vmem:[%s12 + $0x114] sm:$0xf]
      %v4074 = vld [vmem:[%s12 + $0x118] sm:$0xff]
      %v4075 = vld [vmem:[%s12 + $0x120] sm:$0xff]
      %v4076 = vld [vmem:[%s12 + $0x128] sm:$0xff]
      %v4077 = vld [vmem:[%s12 + $0x130] sm:$0xf]
      %v4078 = vld [vmem:[%s12 + $0x134] sm:$0xff]
      %v4079 = vld [vmem:[%s12 + $0x13c] sm:$0xff]
      %v4080 = vld [vmem:[%s12 + $0x144] sm:$0xff]
      %v4081 = vld [vmem:[%s12 + $0x14c] sm:$0xf]
      %v4082 = vld [vmem:[%s12 + $0x150] sm:$0xff]
      %v4083 = vld [vmem:[%s12 + $0x158] sm:$0xff]
      %v4084 = vld [vmem:[%s12 + $0x160] sm:$0xff]
      %v4085 = vld [vmem:[%s12 + $0x168] sm:$0xf]
      %v4086 = vld [vmem:[%s12 + $0x16c] sm:$0xff]
      %v4087 = vld [vmem:[%s12 + $0x174] sm:$0xff]
      %v4088 = vld [vmem:[%s12 + $0x17c] sm:$0xff]
      %v4089 = vld [vmem:[%s12 + $0x184] sm:$0xf]
      %v4090 = vld [vmem:[%s12 + $0x188] sm:$0xff]
      %v4091 = vld [vmem:[%s12 + $0x190] sm:$0xff]
      %v4092 = vld [vmem:[%s12 + $0x198] sm:$0xff]
      %v4093 = vld [vmem:[%s12 + $0x1a0] sm:$0xf]
      %v4094 = vld [vmem:[%s12 + $0x1a4] sm:$0xff]
      %v4095 = vld [vmem:[%s12 + $0x1ac] sm:$0xff]
      %v4096 = vld [vmem:[%s12 + $0x1b4] sm:$0xff]
      %v4097 = vld [vmem:[%s12 + $0x1bc] sm:$0xf]
      %v4098 = vld [vmem:[%s13] sm:$0xff]
      %v4100 = vperm.slane %v4098, 0
      %v4101 = vperm.slane %v4098, 1
      %v4102 = vperm.slane %v4098, 2
      %v4103 = vperm.slane %v4098, 3
      %v4104 = vperm.slane %v4098, 4
      %v4105 = vperm.slane %v4098, 5
      %v4106 = vperm.slane %v4098, 6
      %v4178 = vunpack.c.l.b16 %v4034
      %v4179 = vunpack.c.h.b16 %v4034
      %v4180 = vunpack.c.l.b16 %v4035
      %v4181 = vunpack.c.h.b16 %v4035
      %v4182 = vunpack.c.l.b16 %v4036
      %v4183 = vunpack.c.h.b16 %v4036
      %v4184 = vunpack.c.l.b16 %v4037
      %v4185 = vunpack.c.l.b16 %v4038
      %v4186 = vunpack.c.h.b16 %v4038
      %v4187 = vunpack.c.l.b16 %v4039
      %v4188 = vunpack.c.h.b16 %v4039
      %v4189 = vunpack.c.l.b16 %v4040
      %v4190 = vunpack.c.h.b16 %v4040
      %v4191 = vunpack.c.l.b16 %v4041
      %v4192 = vunpack.c.l.b16 %v4042
      %v4193 = vunpack.c.h.b16 %v4042
      %v4194 = vunpack.c.l.b16 %v4043
      %v4195 = vunpack.c.h.b16 %v4043
      %v4196 = vunpack.c.l.b16 %v4044
      %v4197 = vunpack.c.h.b16 %v4044
      %v4198 = vunpack.c.l.b16 %v4045
      %v4199 = vunpack.c.l.b16 %v4046
      %v4200 = vunpack.c.h.b16 %v4046
      %v4201 = vunpack.c.l.b16 %v4047
      %v4202 = vunpack.c.h.b16 %v4047
      %v4203 = vunpack.c.l.b16 %v4048
      %v4204 = vunpack.c.h.b16 %v4048
      %v4205 = vunpack.c.l.b16 %v4049
      %v4206 = vunpack.c.l.b16 %v4050
      %v4207 = vunpack.c.h.b16 %v4050
      %v4208 = vunpack.c.l.b16 %v4051
      %v4209 = vunpack.c.h.b16 %v4051
      %v4210 = vunpack.c.l.b16 %v4052
      %v4211 = vunpack.c.h.b16 %v4052
      %v4212 = vunpack.c.l.b16 %v4053
      %v4213 = vunpack.c.l.b16 %v4054
      %v4214 = vunpack.c.h.b16 %v4054
      %v4215 = vunpack.c.l.b16 %v4055
      %v4216 = vunpack.c.h.b16 %v4055
      %v4217 = vunpack.c.l.b16 %v4056
      %v4218 = vunpack.c.h.b16 %v4056
      %v4219 = vunpack.c.l.b16 %v4057
      %v4220 = vunpack.c.l.b16 %v4058
      %v4221 = vunpack.c.h.b16 %v4058
      %v4222 = vunpack.c.l.b16 %v4059
      %v4223 = vunpack.c.h.b16 %v4059
      %v4224 = vunpack.c.l.b16 %v4060
      %v4225 = vunpack.c.h.b16 %v4060
      %v4226 = vunpack.c.l.b16 %v4061
      %v4227 = vunpack.c.l.b16 %v4062
      %v4228 = vunpack.c.h.b16 %v4062
      %v4229 = vunpack.c.l.b16 %v4063
      %v4230 = vunpack.c.h.b16 %v4063
      %v4231 = vunpack.c.l.b16 %v4064
      %v4232 = vunpack.c.h.b16 %v4064
      %v4233 = vunpack.c.l.b16 %v4065
      %v4234 = vunpack.c.l.b16 %v4066
      %v4235 = vunpack.c.h.b16 %v4066
      %v4236 = vunpack.c.l.b16 %v4067
      %v4237 = vunpack.c.h.b16 %v4067
      %v4238 = vunpack.c.l.b16 %v4068
      %v4239 = vunpack.c.h.b16 %v4068
      %v4240 = vunpack.c.l.b16 %v4069
      %v4241 = vunpack.c.l.b16 %v4070
      %v4242 = vunpack.c.h.b16 %v4070
      %v4243 = vunpack.c.l.b16 %v4071
      %v4244 = vunpack.c.h.b16 %v4071
      %v4245 = vunpack.c.l.b16 %v4072
      %v4246 = vunpack.c.h.b16 %v4072
      %v4247 = vunpack.c.l.b16 %v4073
      %v4248 = vunpack.c.l.b16 %v4074
      %v4249 = vunpack.c.h.b16 %v4074
      %v4250 = vunpack.c.l.b16 %v4075
      %v4251 = vunpack.c.h.b16 %v4075
      %v4252 = vunpack.c.l.b16 %v4076
      %v4253 = vunpack.c.h.b16 %v4076
      %v4254 = vunpack.c.l.b16 %v4077
      %v4255 = vunpack.c.l.b16 %v4078
      %v4256 = vunpack.c.h.b16 %v4078
      %v4257 = vunpack.c.l.b16 %v4079
      %v4258 = vunpack.c.h.b16 %v4079
      %v4259 = vunpack.c.l.b16 %v4080
      %v4260 = vunpack.c.h.b16 %v4080
      %v4261 = vunpack.c.l.b16 %v4081
      %v4262 = vunpack.c.l.b16 %v4082
      %v4263 = vunpack.c.h.b16 %v4082
      %v4264 = vunpack.c.l.b16 %v4083
      %v4265 = vunpack.c.h.b16 %v4083
      %v4266 = vunpack.c.l.b16 %v4084
      %v4267 = vunpack.c.h.b16 %v4084
      %v4268 = vunpack.c.l.b16 %v4085
      %v4269 = vunpack.c.l.b16 %v4086
      %v4270 = vunpack.c.h.b16 %v4086
      %v4271 = vunpack.c.l.b16 %v4087
      %v4272 = vunpack.c.h.b16 %v4087
      %v4273 = vunpack.c.l.b16 %v4088
      %v4274 = vunpack.c.h.b16 %v4088
      %v4275 = vunpack.c.l.b16 %v4089
      %v4276 = vunpack.c.l.b16 %v4090
      %v4277 = vunpack.c.h.b16 %v4090
      %v4278 = vunpack.c.l.b16 %v4091
      %v4279 = vunpack.c.h.b16 %v4091
      %v4280 = vunpack.c.l.b16 %v4092
      %v4281 = vunpack.c.h.b16 %v4092
      %v4282 = vunpack.c.l.b16 %v4093
      %v4283 = vunpack.c.l.b16 %v4094
      %v4284 = vunpack.c.h.b16 %v4094
      %v4285 = vunpack.c.l.b16 %v4095
      %v4286 = vunpack.c.h.b16 %v4095
      %v4287 = vunpack.c.l.b16 %v4096
      %v4288 = vunpack.c.h.b16 %v4096
      %v4289 = vunpack.c.l.b16 %v4097
      %v4290 = vpack.c.b16 %v4185, %v4178
      %v4291 = vpack.c.b16 %v4186, %v4179
      %v4292 = vpack.c.b16 %v4187, %v4180
      %v4293 = vpack.c.b16 %v4188, %v4181
      %v4294 = vpack.c.b16 %v4189, %v4182
      %v4295 = vpack.c.b16 %v4190, %v4183
      %v4296 = vpack.c.b16 %v4191, %v4184
      %v4297 = vpack.c.b16 %v4199, %v4192
      %v4298 = vpack.c.b16 %v4200, %v4193
      %v4299 = vpack.c.b16 %v4201, %v4194
      %v4300 = vpack.c.b16 %v4202, %v4195
      %v4301 = vpack.c.b16 %v4203, %v4196
      %v4302 = vpack.c.b16 %v4204, %v4197
      %v4303 = vpack.c.b16 %v4205, %v4198
      %v4304 = vpack.c.b16 %v4213, %v4206
      %v4305 = vpack.c.b16 %v4214, %v4207
      %v4306 = vpack.c.b16 %v4215, %v4208
      %v4307 = vpack.c.b16 %v4216, %v4209
      %v4308 = vpack.c.b16 %v4217, %v4210
      %v4309 = vpack.c.b16 %v4218, %v4211
      %v4310 = vpack.c.b16 %v4219, %v4212
      %v4311 = vpack.c.b16 %v4227, %v4220
      %v4312 = vpack.c.b16 %v4228, %v4221
      %v4313 = vpack.c.b16 %v4229, %v4222
      %v4314 = vpack.c.b16 %v4230, %v4223
      %v4315 = vpack.c.b16 %v4231, %v4224
      %v4316 = vpack.c.b16 %v4232, %v4225
      %v4317 = vpack.c.b16 %v4233, %v4226
      %v4318 = vpack.c.b16 %v4241, %v4234
      %v4319 = vpack.c.b16 %v4242, %v4235
      %v4320 = vpack.c.b16 %v4243, %v4236
      %v4321 = vpack.c.b16 %v4244, %v4237
      %v4322 = vpack.c.b16 %v4245, %v4238
      %v4323 = vpack.c.b16 %v4246, %v4239
      %v4324 = vpack.c.b16 %v4247, %v4240
      %v4325 = vpack.c.b16 %v4255, %v4248
      %v4326 = vpack.c.b16 %v4256, %v4249
      %v4327 = vpack.c.b16 %v4257, %v4250
      %v4328 = vpack.c.b16 %v4258, %v4251
      %v4329 = vpack.c.b16 %v4259, %v4252
      %v4330 = vpack.c.b16 %v4260, %v4253
      %v4331 = vpack.c.b16 %v4261, %v4254
      %v4332 = vpack.c.b16 %v4269, %v4262
      %v4333 = vpack.c.b16 %v4270, %v4263
      %v4334 = vpack.c.b16 %v4271, %v4264
      %v4335 = vpack.c.b16 %v4272, %v4265
      %v4336 = vpack.c.b16 %v4273, %v4266
      %v4337 = vpack.c.b16 %v4274, %v4267
      %v4338 = vpack.c.b16 %v4275, %v4268
      %v4339 = vpack.c.b16 %v4283, %v4276
      %v4340 = vpack.c.b16 %v4284, %v4277
      %v4341 = vpack.c.b16 %v4285, %v4278
      %v4342 = vpack.c.b16 %v4286, %v4279
      %v4343 = vpack.c.b16 %v4287, %v4280
      %v4344 = vpack.c.b16 %v4288, %v4281
      %v4345 = vpack.c.b16 %v4289, %v4282
      %4402 = vmatpush.bf16.msra.mxu0 %v4339
      %4403 = vmatpush.bf16.msra.mxu0 %v4332
      %4404 = vmatpush.bf16.msra.mxu0 %v4325
      %4405 = vmatpush.bf16.msra.mxu0 %v4318
      %4406 = vmatpush.bf16.msra.mxu0 %v4311
      %4407 = vmatpush.bf16.msra.mxu0 %v4304
      %4408 = vmatpush.bf16.msra.mxu0 %v4297
      %4409 = vmatpush.bf16.msra.mxu0 %v4290
      %4410 = vmatmul.bf16.gmra.mxu0 %v4026
      %v4411 = vpop.f32.mrf.mxu0
      %v4412 = vadd.f32 %v4100, %v4411
      %v4413 = vpop.f32.mrf.mxu0
      %v4414 = vadd.f32 %v4100, %v4413
      %4415 = vmatmul.bf16.gmra.mxu0 %v4027
      %v4416 = vpop.f32.mrf.mxu0
      %v4417 = vadd.f32 %v4100, %v4416
      %v4418 = vpop.f32.mrf.mxu0
      %v4419 = vadd.f32 %v4100, %v4418
      %4420 = vmatmul.bf16.gmra.mxu0 %v4028
      %v4421 = vpop.f32.mrf.mxu0
      %v4422 = vadd.f32 %v4100, %v4421
      %v4423 = vpop.f32.mrf.mxu0
      %v4424 = vadd.f32 %v4100, %v4423
      %4425 = vmatmul.bf16.gmra.mxu0 %v4029
      %v4426 = vpop.f32.mrf.mxu0
      %v4427 = vadd.f32 %v4100, %v4426
      %v4428 = vpop.f32.mrf.mxu0
      %v4429 = vadd.f32 %v4100, %v4428
      %4430 = vmatmul.bf16.gmra.mxu0 %v4030
      %v4431 = vpop.f32.mrf.mxu0
      %v4432 = vadd.f32 %v4100, %v4431
      %v4433 = vpop.f32.mrf.mxu0
      %v4434 = vadd.f32 %v4100, %v4433
      %4435 = vmatmul.bf16.gmra.mxu0 %v4031
      %v4436 = vpop.f32.mrf.mxu0
      %v4437 = vadd.f32 %v4100, %v4436
      %v4438 = vpop.f32.mrf.mxu0
      %v4439 = vadd.f32 %v4100, %v4438
      %4440 = vmatmul.bf16.gmra.mxu0 %v4032
      %v4441 = vpop.f32.mrf.mxu0
      %v4442 = vadd.f32 %v4100, %v4441
      %v4443 = vpop.f32.mrf.mxu0
      %v4444 = vadd.f32 %v4100, %v4443
      %4445 = vmatmul.bf16.gmra.mxu0 %v4033
      %v4446 = vpop.f32.mrf.mxu0
      %v4447 = vadd.f32 %v4100, %v4446
      %v4448 = vpop.f32.mrf.mxu0
      %v4449 = vadd.f32 %v4100, %v4448
      %4450 = vdwg.mxu0
      %4451 = vmatpush.bf16.msra.mxu0 %v4340
      %4452 = vmatpush.bf16.msra.mxu0 %v4333
      %4453 = vmatpush.bf16.msra.mxu0 %v4326
      %4454 = vmatpush.bf16.msra.mxu0 %v4319
      %4455 = vmatpush.bf16.msra.mxu0 %v4312
      %4456 = vmatpush.bf16.msra.mxu0 %v4305
      %4457 = vmatpush.bf16.msra.mxu0 %v4298
      %4458 = vmatpush.bf16.msra.mxu0 %v4291
      %4459 = vmatmul.bf16.gmra.mxu0 %v4026
      %v4460 = vpop.f32.mrf.mxu0
      %v4461 = vadd.f32 %v4101, %v4460
      %v4462 = vpop.f32.mrf.mxu0
      %v4463 = vadd.f32 %v4101, %v4462
      %4464 = vmatmul.bf16.gmra.mxu0 %v4027
      %v4465 = vpop.f32.mrf.mxu0
      %v4466 = vadd.f32 %v4101, %v4465
      %v4467 = vpop.f32.mrf.mxu0
      %v4468 = vadd.f32 %v4101, %v4467
      %4469 = vmatmul.bf16.gmra.mxu0 %v4028
      %v4470 = vpop.f32.mrf.mxu0
      %v4471 = vadd.f32 %v4101, %v4470
      %v4472 = vpop.f32.mrf.mxu0
      %v4473 = vadd.f32 %v4101, %v4472
      %4474 = vmatmul.bf16.gmra.mxu0 %v4029
      %v4475 = vpop.f32.mrf.mxu0
      %v4476 = vadd.f32 %v4101, %v4475
      %v4477 = vpop.f32.mrf.mxu0
      %v4478 = vadd.f32 %v4101, %v4477
      %4479 = vmatmul.bf16.gmra.mxu0 %v4030
      %v4480 = vpop.f32.mrf.mxu0
      %v4481 = vadd.f32 %v4101, %v4480
      %v4482 = vpop.f32.mrf.mxu0
      %v4483 = vadd.f32 %v4101, %v4482
      %4484 = vmatmul.bf16.gmra.mxu0 %v4031
      %v4485 = vpop.f32.mrf.mxu0
      %v4486 = vadd.f32 %v4101, %v4485
      %v4487 = vpop.f32.mrf.mxu0
      %v4488 = vadd.f32 %v4101, %v4487
      %4489 = vmatmul.bf16.gmra.mxu0 %v4032
      %v4490 = vpop.f32.mrf.mxu0
      %v4491 = vadd.f32 %v4101, %v4490
      %v4492 = vpop.f32.mrf.mxu0
      %v4493 = vadd.f32 %v4101, %v4492
      %4494 = vmatmul.bf16.gmra.mxu0 %v4033
      %v4495 = vpop.f32.mrf.mxu0
      %v4496 = vadd.f32 %v4101, %v4495
      %v4497 = vpop.f32.mrf.mxu0
      %v4498 = vadd.f32 %v4101, %v4497
      %4499 = vdwg.mxu0
      %4500 = vmatpush.bf16.msra.mxu0 %v4341
      %4501 = vmatpush.bf16.msra.mxu0 %v4334
      %4502 = vmatpush.bf16.msra.mxu0 %v4327
      %4503 = vmatpush.bf16.msra.mxu0 %v4320
      %4504 = vmatpush.bf16.msra.mxu0 %v4313
      %4505 = vmatpush.bf16.msra.mxu0 %v4306
      %4506 = vmatpush.bf16.msra.mxu0 %v4299
      %4507 = vmatpush.bf16.msra.mxu0 %v4292
      %4508 = vmatmul.bf16.gmra.mxu0 %v4026
      %v4509 = vpop.f32.mrf.mxu0
      %v4510 = vadd.f32 %v4102, %v4509
      %v4511 = vpop.f32.mrf.mxu0
      %v4512 = vadd.f32 %v4102, %v4511
      %4513 = vmatmul.bf16.gmra.mxu0 %v4027
      %v4514 = vpop.f32.mrf.mxu0
      %v4515 = vadd.f32 %v4102, %v4514
      %v4516 = vpop.f32.mrf.mxu0
      %v4517 = vadd.f32 %v4102, %v4516
      %4518 = vmatmul.bf16.gmra.mxu0 %v4028
      %v4519 = vpop.f32.mrf.mxu0
      %v4520 = vadd.f32 %v4102, %v4519
      %v4521 = vpop.f32.mrf.mxu0
      %v4522 = vadd.f32 %v4102, %v4521
      %4523 = vmatmul.bf16.gmra.mxu0 %v4029
      %v4524 = vpop.f32.mrf.mxu0
      %v4525 = vadd.f32 %v4102, %v4524
      %v4526 = vpop.f32.mrf.mxu0
      %v4527 = vadd.f32 %v4102, %v4526
      %4528 = vmatmul.bf16.gmra.mxu0 %v4030
      %v4529 = vpop.f32.mrf.mxu0
      %v4530 = vadd.f32 %v4102, %v4529
      %v4531 = vpop.f32.mrf.mxu0
      %v4532 = vadd.f32 %v4102, %v4531
      %4533 = vmatmul.bf16.gmra.mxu0 %v4031
      %v4534 = vpop.f32.mrf.mxu0
      %v4535 = vadd.f32 %v4102, %v4534
      %v4536 = vpop.f32.mrf.mxu0
      %v4537 = vadd.f32 %v4102, %v4536
      %4538 = vmatmul.bf16.gmra.mxu0 %v4032
      %v4539 = vpop.f32.mrf.mxu0
      %v4540 = vadd.f32 %v4102, %v4539
      %v4541 = vpop.f32.mrf.mxu0
      %v4542 = vadd.f32 %v4102, %v4541
      %4543 = vmatmul.bf16.gmra.mxu0 %v4033
      %v4544 = vpop.f32.mrf.mxu0
      %v4545 = vadd.f32 %v4102, %v4544
      %v4546 = vpop.f32.mrf.mxu0
      %v4547 = vadd.f32 %v4102, %v4546
      %4548 = vdwg.mxu0
      %4549 = vmatpush.bf16.msra.mxu0 %v4342
      %4550 = vmatpush.bf16.msra.mxu0 %v4335
      %4551 = vmatpush.bf16.msra.mxu0 %v4328
      %4552 = vmatpush.bf16.msra.mxu0 %v4321
      %4553 = vmatpush.bf16.msra.mxu0 %v4314
      %4554 = vmatpush.bf16.msra.mxu0 %v4307
      %4555 = vmatpush.bf16.msra.mxu0 %v4300
      %4556 = vmatpush.bf16.msra.mxu0 %v4293
      %4557 = vmatmul.bf16.gmra.mxu0 %v4026
      %v4558 = vpop.f32.mrf.mxu0
      %v4559 = vadd.f32 %v4103, %v4558
      %v4560 = vpop.f32.mrf.mxu0
      %v4561 = vadd.f32 %v4103, %v4560
      %4562 = vmatmul.bf16.gmra.mxu0 %v4027
      %v4563 = vpop.f32.mrf.mxu0
      %v4564 = vadd.f32 %v4103, %v4563
      %v4565 = vpop.f32.mrf.mxu0
      %v4566 = vadd.f32 %v4103, %v4565
      %4567 = vmatmul.bf16.gmra.mxu0 %v4028
      %v4568 = vpop.f32.mrf.mxu0
      %v4569 = vadd.f32 %v4103, %v4568
      %v4570 = vpop.f32.mrf.mxu0
      %v4571 = vadd.f32 %v4103, %v4570
      %4572 = vmatmul.bf16.gmra.mxu0 %v4029
      %v4573 = vpop.f32.mrf.mxu0
      %v4574 = vadd.f32 %v4103, %v4573
      %v4575 = vpop.f32.mrf.mxu0
      %v4576 = vadd.f32 %v4103, %v4575
      %4577 = vmatmul.bf16.gmra.mxu0 %v4030
      %v4578 = vpop.f32.mrf.mxu0
      %v4579 = vadd.f32 %v4103, %v4578
      %v4580 = vpop.f32.mrf.mxu0
      %v4581 = vadd.f32 %v4103, %v4580
      %4582 = vmatmul.bf16.gmra.mxu0 %v4031
      %v4583 = vpop.f32.mrf.mxu0
      %v4584 = vadd.f32 %v4103, %v4583
      %v4585 = vpop.f32.mrf.mxu0
      %v4586 = vadd.f32 %v4103, %v4585
      %4587 = vmatmul.bf16.gmra.mxu0 %v4032
      %v4588 = vpop.f32.mrf.mxu0
      %v4589 = vadd.f32 %v4103, %v4588
      %v4590 = vpop.f32.mrf.mxu0
      %v4591 = vadd.f32 %v4103, %v4590
      %4592 = vmatmul.bf16.gmra.mxu0 %v4033
      %v4593 = vpop.f32.mrf.mxu0
      %v4594 = vadd.f32 %v4103, %v4593
      %v4595 = vpop.f32.mrf.mxu0
      %v4596 = vadd.f32 %v4103, %v4595
      %4597 = vdwg.mxu0
      %4598 = vmatpush.bf16.msra.mxu0 %v4343
      %4599 = vmatpush.bf16.msra.mxu0 %v4336
      %4600 = vmatpush.bf16.msra.mxu0 %v4329
      %4601 = vmatpush.bf16.msra.mxu0 %v4322
      %4602 = vmatpush.bf16.msra.mxu0 %v4315
      %4603 = vmatpush.bf16.msra.mxu0 %v4308
      %4604 = vmatpush.bf16.msra.mxu0 %v4301
      %4605 = vmatpush.bf16.msra.mxu0 %v4294
      %4606 = vmatmul.bf16.gmra.mxu0 %v4026
      %v4607 = vpop.f32.mrf.mxu0
      %v4608 = vadd.f32 %v4104, %v4607
      %v4609 = vpop.f32.mrf.mxu0
      %v4610 = vadd.f32 %v4104, %v4609
      %4611 = vmatmul.bf16.gmra.mxu0 %v4027
      %v4612 = vpop.f32.mrf.mxu0
      %v4613 = vadd.f32 %v4104, %v4612
      %v4614 = vpop.f32.mrf.mxu0
      %v4615 = vadd.f32 %v4104, %v4614
      %4616 = vmatmul.bf16.gmra.mxu0 %v4028
      %v4617 = vpop.f32.mrf.mxu0
      %v4618 = vadd.f32 %v4104, %v4617
      %v4619 = vpop.f32.mrf.mxu0
      %v4620 = vadd.f32 %v4104, %v4619
      %4621 = vmatmul.bf16.gmra.mxu0 %v4029
      %v4622 = vpop.f32.mrf.mxu0
      %v4623 = vadd.f32 %v4104, %v4622
      %v4624 = vpop.f32.mrf.mxu0
      %v4625 = vadd.f32 %v4104, %v4624
      %4626 = vmatmul.bf16.gmra.mxu0 %v4030
      %v4627 = vpop.f32.mrf.mxu0
      %v4628 = vadd.f32 %v4104, %v4627
      %v4629 = vpop.f32.mrf.mxu0
      %v4630 = vadd.f32 %v4104, %v4629
      %4631 = vmatmul.bf16.gmra.mxu0 %v4031
      %v4632 = vpop.f32.mrf.mxu0
      %v4633 = vadd.f32 %v4104, %v4632
      %v4634 = vpop.f32.mrf.mxu0
      %v4635 = vadd.f32 %v4104, %v4634
      %4636 = vmatmul.bf16.gmra.mxu0 %v4032
      %v4637 = vpop.f32.mrf.mxu0
      %v4638 = vadd.f32 %v4104, %v4637
      %v4639 = vpop.f32.mrf.mxu0
      %v4640 = vadd.f32 %v4104, %v4639
      %4641 = vmatmul.bf16.gmra.mxu0 %v4033
      %v4642 = vpop.f32.mrf.mxu0
      %v4643 = vadd.f32 %v4104, %v4642
      %v4644 = vpop.f32.mrf.mxu0
      %v4645 = vadd.f32 %v4104, %v4644
      %4646 = vdwg.mxu0
      %4647 = vmatpush.bf16.msra.mxu0 %v4344
      %4648 = vmatpush.bf16.msra.mxu0 %v4337
      %4649 = vmatpush.bf16.msra.mxu0 %v4330
      %4650 = vmatpush.bf16.msra.mxu0 %v4323
      %4651 = vmatpush.bf16.msra.mxu0 %v4316
      %4652 = vmatpush.bf16.msra.mxu0 %v4309
      %4653 = vmatpush.bf16.msra.mxu0 %v4302
      %4654 = vmatpush.bf16.msra.mxu0 %v4295
      %4655 = vmatmul.bf16.gmra.mxu0 %v4026
      %v4656 = vpop.f32.mrf.mxu0
      %v4657 = vadd.f32 %v4105, %v4656
      %v4658 = vpop.f32.mrf.mxu0
      %v4659 = vadd.f32 %v4105, %v4658
      %4660 = vmatmul.bf16.gmra.mxu0 %v4027
      %v4661 = vpop.f32.mrf.mxu0
      %v4662 = vadd.f32 %v4105, %v4661
      %v4663 = vpop.f32.mrf.mxu0
      %v4664 = vadd.f32 %v4105, %v4663
      %4665 = vmatmul.bf16.gmra.mxu0 %v4028
      %v4666 = vpop.f32.mrf.mxu0
      %v4667 = vadd.f32 %v4105, %v4666
      %v4668 = vpop.f32.mrf.mxu0
      %v4669 = vadd.f32 %v4105, %v4668
      %4670 = vmatmul.bf16.gmra.mxu0 %v4029
      %v4671 = vpop.f32.mrf.mxu0
      %v4672 = vadd.f32 %v4105, %v4671
      %v4673 = vpop.f32.mrf.mxu0
      %v4674 = vadd.f32 %v4105, %v4673
      %4675 = vmatmul.bf16.gmra.mxu0 %v4030
      %v4676 = vpop.f32.mrf.mxu0
      %v4677 = vadd.f32 %v4105, %v4676
      %v4678 = vpop.f32.mrf.mxu0
      %v4679 = vadd.f32 %v4105, %v4678
      %4680 = vmatmul.bf16.gmra.mxu0 %v4031
      %v4681 = vpop.f32.mrf.mxu0
      %v4682 = vadd.f32 %v4105, %v4681
      %v4683 = vpop.f32.mrf.mxu0
      %v4684 = vadd.f32 %v4105, %v4683
      %4685 = vmatmul.bf16.gmra.mxu0 %v4032
      %v4686 = vpop.f32.mrf.mxu0
      %v4687 = vadd.f32 %v4105, %v4686
      %v4688 = vpop.f32.mrf.mxu0
      %v4689 = vadd.f32 %v4105, %v4688
      %4690 = vmatmul.bf16.gmra.mxu0 %v4033
      %v4691 = vpop.f32.mrf.mxu0
      %v4692 = vadd.f32 %v4105, %v4691
      %v4693 = vpop.f32.mrf.mxu0
      %v4694 = vadd.f32 %v4105, %v4693
      %4695 = vdwg.mxu0
      %4696 = vmatpush.bf16.msra.mxu0 %v4345
      %4697 = vmatpush.bf16.msra.mxu0 %v4338
      %4698 = vmatpush.bf16.msra.mxu0 %v4331
      %4699 = vmatpush.bf16.msra.mxu0 %v4324
      %4700 = vmatpush.bf16.msra.mxu0 %v4317
      %4701 = vmatpush.bf16.msra.mxu0 %v4310
      %4702 = vmatpush.bf16.msra.mxu0 %v4303
      %4703 = vmatpush.bf16.msra.mxu0 %v4296
      %4704 = vmatmul.bf16.gmra.mxu0 %v4026
      %v4705 = vpop.f32.mrf.mxu0
      %v4706 = vadd.f32 %v4106, %v4705
      %v4707 = vpop.f32.mrf.mxu0
      %v4708 = vadd.f32 %v4106, %v4707
      %4709 = vmatmul.bf16.gmra.mxu0 %v4027
      %v4710 = vpop.f32.mrf.mxu0
      %v4711 = vadd.f32 %v4106, %v4710
      %v4712 = vpop.f32.mrf.mxu0
      %v4713 = vadd.f32 %v4106, %v4712
      %4714 = vmatmul.bf16.gmra.mxu0 %v4028
      %v4715 = vpop.f32.mrf.mxu0
      %v4716 = vadd.f32 %v4106, %v4715
      %v4717 = vpop.f32.mrf.mxu0
      %v4718 = vadd.f32 %v4106, %v4717
      %4719 = vmatmul.bf16.gmra.mxu0 %v4029
      %v4720 = vpop.f32.mrf.mxu0
      %v4721 = vadd.f32 %v4106, %v4720
      %v4722 = vpop.f32.mrf.mxu0
      %v4723 = vadd.f32 %v4106, %v4722
      %4724 = vmatmul.bf16.gmra.mxu0 %v4030
      %v4725 = vpop.f32.mrf.mxu0
      %v4726 = vadd.f32 %v4106, %v4725
      %v4727 = vpop.f32.mrf.mxu0
      %v4728 = vadd.f32 %v4106, %v4727
      %4729 = vmatmul.bf16.gmra.mxu0 %v4031
      %v4730 = vpop.f32.mrf.mxu0
      %v4731 = vadd.f32 %v4106, %v4730
      %v4732 = vpop.f32.mrf.mxu0
      %v4733 = vadd.f32 %v4106, %v4732
      %4734 = vmatmul.bf16.gmra.mxu0 %v4032
      %v4735 = vpop.f32.mrf.mxu0
      %v4736 = vadd.f32 %v4106, %v4735
      %v4737 = vpop.f32.mrf.mxu0
      %v4738 = vadd.f32 %v4106, %v4737
      %4739 = vmatmul.bf16.gmra.mxu0 %v4033
      %v4740 = vpop.f32.mrf.mxu0
      %v4741 = vadd.f32 %v4106, %v4740
      %v4742 = vpop.f32.mrf.mxu0
      %v4743 = vadd.f32 %v4106, %v4742
      %4744 = vdwg.mxu0
      %v4745 = vmul.f32 %v4412, 0.5
      %v4746 = vmul.f32 %v4461, 0.5
      %v4747 = vmul.f32 %v4510, 0.5
      %v4748 = vmul.f32 %v4559, 0.5
      %v4749 = vmul.f32 %v4608, 0.5
      %v4750 = vmul.f32 %v4657, 0.5
      %v4751 = vmul.f32 %v4706, 0.5
      %v4752 = vmul.f32 %v4414, 0.5
      %v4753 = vmul.f32 %v4463, 0.5
      %v4754 = vmul.f32 %v4512, 0.5
      %v4755 = vmul.f32 %v4561, 0.5
      %v4756 = vmul.f32 %v4610, 0.5
      %v4757 = vmul.f32 %v4659, 0.5
      %v4758 = vmul.f32 %v4708, 0.5
      %v4759 = vmul.f32 %v4417, 0.5
      %v4760 = vmul.f32 %v4466, 0.5
      %v4761 = vmul.f32 %v4515, 0.5
      %v4762 = vmul.f32 %v4564, 0.5
      %v4763 = vmul.f32 %v4613, 0.5
      %v4764 = vmul.f32 %v4662, 0.5
      %v4765 = vmul.f32 %v4711, 0.5
      %v4766 = vmul.f32 %v4419, 0.5
      %v4767 = vmul.f32 %v4468, 0.5
      %v4768 = vmul.f32 %v4517, 0.5
      %v4769 = vmul.f32 %v4566, 0.5
      %v4770 = vmul.f32 %v4615, 0.5
      %v4771 = vmul.f32 %v4664, 0.5
      %v4772 = vmul.f32 %v4713, 0.5
      %v4773 = vmul.f32 %v4422, 0.5
      %v4774 = vmul.f32 %v4471, 0.5
      %v4775 = vmul.f32 %v4520, 0.5
      %v4776 = vmul.f32 %v4569, 0.5
      %v4777 = vmul.f32 %v4618, 0.5
      %v4778 = vmul.f32 %v4667, 0.5
      %v4779 = vmul.f32 %v4716, 0.5
      %v4780 = vmul.f32 %v4424, 0.5
      %v4781 = vmul.f32 %v4473, 0.5
      %v4782 = vmul.f32 %v4522, 0.5
      %v4783 = vmul.f32 %v4571, 0.5
      %v4784 = vmul.f32 %v4620, 0.5
      %v4785 = vmul.f32 %v4669, 0.5
      %v4786 = vmul.f32 %v4718, 0.5
      %v4787 = vmul.f32 %v4427, 0.5
      %v4788 = vmul.f32 %v4476, 0.5
      %v4789 = vmul.f32 %v4525, 0.5
      %v4790 = vmul.f32 %v4574, 0.5
      %v4791 = vmul.f32 %v4623, 0.5
      %v4792 = vmul.f32 %v4672, 0.5
      %v4793 = vmul.f32 %v4721, 0.5
      %v4794 = vmul.f32 %v4429, 0.5
      %v4795 = vmul.f32 %v4478, 0.5
      %v4796 = vmul.f32 %v4527, 0.5
      %v4797 = vmul.f32 %v4576, 0.5
      %v4798 = vmul.f32 %v4625, 0.5
      %v4799 = vmul.f32 %v4674, 0.5
      %v4800 = vmul.f32 %v4723, 0.5
      %v4801 = vmul.f32 %v4432, 0.5
      %v4802 = vmul.f32 %v4481, 0.5
      %v4803 = vmul.f32 %v4530, 0.5
      %v4804 = vmul.f32 %v4579, 0.5
      %v4805 = vmul.f32 %v4628, 0.5
      %v4806 = vmul.f32 %v4677, 0.5
      %v4807 = vmul.f32 %v4726, 0.5
      %v4808 = vmul.f32 %v4434, 0.5
      %v4809 = vmul.f32 %v4483, 0.5
      %v4810 = vmul.f32 %v4532, 0.5
      %v4811 = vmul.f32 %v4581, 0.5
      %v4812 = vmul.f32 %v4630, 0.5
      %v4813 = vmul.f32 %v4679, 0.5
      %v4814 = vmul.f32 %v4728, 0.5
      %v4815 = vmul.f32 %v4437, 0.5
      %v4816 = vmul.f32 %v4486, 0.5
      %v4817 = vmul.f32 %v4535, 0.5
      %v4818 = vmul.f32 %v4584, 0.5
      %v4819 = vmul.f32 %v4633, 0.5
      %v4820 = vmul.f32 %v4682, 0.5
      %v4821 = vmul.f32 %v4731, 0.5
      %v4822 = vmul.f32 %v4439, 0.5
      %v4823 = vmul.f32 %v4488, 0.5
      %v4824 = vmul.f32 %v4537, 0.5
      %v4825 = vmul.f32 %v4586, 0.5
      %v4826 = vmul.f32 %v4635, 0.5
      %v4827 = vmul.f32 %v4684, 0.5
      %v4828 = vmul.f32 %v4733, 0.5
      %v4829 = vmul.f32 %v4442, 0.5
      %v4830 = vmul.f32 %v4491, 0.5
      %v4831 = vmul.f32 %v4540, 0.5
      %v4832 = vmul.f32 %v4589, 0.5
      %v4833 = vmul.f32 %v4638, 0.5
      %v4834 = vmul.f32 %v4687, 0.5
      %v4835 = vmul.f32 %v4736, 0.5
      %v4836 = vmul.f32 %v4444, 0.5
      %v4837 = vmul.f32 %v4493, 0.5
      %v4838 = vmul.f32 %v4542, 0.5
      %v4839 = vmul.f32 %v4591, 0.5
      %v4840 = vmul.f32 %v4640, 0.5
      %v4841 = vmul.f32 %v4689, 0.5
      %v4842 = vmul.f32 %v4738, 0.5
      %v4843 = vmul.f32 %v4447, 0.5
      %v4844 = vmul.f32 %v4496, 0.5
      %v4845 = vmul.f32 %v4545, 0.5
      %v4846 = vmul.f32 %v4594, 0.5
      %v4847 = vmul.f32 %v4643, 0.5
      %v4848 = vmul.f32 %v4692, 0.5
      %v4849 = vmul.f32 %v4741, 0.5
      %v4850 = vmul.f32 %v4449, 0.5
      %v4851 = vmul.f32 %v4498, 0.5
      %v4852 = vmul.f32 %v4547, 0.5
      %v4853 = vmul.f32 %v4596, 0.5
      %v4854 = vmul.f32 %v4645, 0.5
      %v4855 = vmul.f32 %v4694, 0.5
      %v4856 = vmul.f32 %v4743, 0.5
      %v4857 = vtanh.pop %v4745
      %v4858 = vtanh.pop %v4746
      %v4859 = vtanh.pop %v4747
      %v4860 = vtanh.pop %v4748
      %v4861 = vtanh.pop %v4749
      %v4862 = vtanh.pop %v4750
      %v4863 = vtanh.pop %v4751
      %v4864 = vtanh.pop %v4752
      %v4865 = vtanh.pop %v4753
      %v4866 = vtanh.pop %v4754
      %v4867 = vtanh.pop %v4755
      %v4868 = vtanh.pop %v4756
      %v4869 = vtanh.pop %v4757
      %v4870 = vtanh.pop %v4758
      %v4871 = vtanh.pop %v4759
      %v4872 = vtanh.pop %v4760
      %v4873 = vtanh.pop %v4761
      %v4874 = vtanh.pop %v4762
      %v4875 = vtanh.pop %v4763
      %v4876 = vtanh.pop %v4764
      %v4877 = vtanh.pop %v4765
      %v4878 = vtanh.pop %v4766
      %v4879 = vtanh.pop %v4767
      %v4880 = vtanh.pop %v4768
      %v4881 = vtanh.pop %v4769
      %v4882 = vtanh.pop %v4770
      %v4883 = vtanh.pop %v4771
      %v4884 = vtanh.pop %v4772
      %v4885 = vtanh.pop %v4773
      %v4886 = vtanh.pop %v4774
      %v4887 = vtanh.pop %v4775
      %v4888 = vtanh.pop %v4776
      %v4889 = vtanh.pop %v4777
      %v4890 = vtanh.pop %v4778
      %v4891 = vtanh.pop %v4779
      %v4892 = vtanh.pop %v4780
      %v4893 = vtanh.pop %v4781
      %v4894 = vtanh.pop %v4782
      %v4895 = vtanh.pop %v4783
      %v4896 = vtanh.pop %v4784
      %v4897 = vtanh.pop %v4785
      %v4898 = vtanh.pop %v4786
      %v4899 = vtanh.pop %v4787
      %v4900 = vtanh.pop %v4788
      %v4901 = vtanh.pop %v4789
      %v4902 = vtanh.pop %v4790
      %v4903 = vtanh.pop %v4791
      %v4904 = vtanh.pop %v4792
      %v4905 = vtanh.pop %v4793
      %v4906 = vtanh.pop %v4794
      %v4907 = vtanh.pop %v4795
      %v4908 = vtanh.pop %v4796
      %v4909 = vtanh.pop %v4797
      %v4910 = vtanh.pop %v4798
      %v4911 = vtanh.pop %v4799
      %v4912 = vtanh.pop %v4800
      %v4913 = vtanh.pop %v4801
      %v4914 = vtanh.pop %v4802
      %v4915 = vtanh.pop %v4803
      %v4916 = vtanh.pop %v4804
      %v4917 = vtanh.pop %v4805
      %v4918 = vtanh.pop %v4806
      %v4919 = vtanh.pop %v4807
      %v4920 = vtanh.pop %v4808
      %v4921 = vtanh.pop %v4809
      %v4922 = vtanh.pop %v4810
      %v4923 = vtanh.pop %v4811
      %v4924 = vtanh.pop %v4812
      %v4925 = vtanh.pop %v4813
      %v4926 = vtanh.pop %v4814
      %v4927 = vtanh.pop %v4815
      %v4928 = vtanh.pop %v4816
      %v4929 = vtanh.pop %v4817
      %v4930 = vtanh.pop %v4818
      %v4931 = vtanh.pop %v4819
      %v4932 = vtanh.pop %v4820
      %v4933 = vtanh.pop %v4821
      %v4934 = vtanh.pop %v4822
      %v4935 = vtanh.pop %v4823
      %v4936 = vtanh.pop %v4824
      %v4937 = vtanh.pop %v4825
      %v4938 = vtanh.pop %v4826
      %v4939 = vtanh.pop %v4827
      %v4940 = vtanh.pop %v4828
      %v4941 = vtanh.pop %v4829
      %v4942 = vtanh.pop %v4830
      %v4943 = vtanh.pop %v4831
      %v4944 = vtanh.pop %v4832
      %v4945 = vtanh.pop %v4833
      %v4946 = vtanh.pop %v4834
      %v4947 = vtanh.pop %v4835
      %v4948 = vtanh.pop %v4836
      %v4949 = vtanh.pop %v4837
      %v4950 = vtanh.pop %v4838
      %v4951 = vtanh.pop %v4839
      %v4952 = vtanh.pop %v4840
      %v4953 = vtanh.pop %v4841
      %v4954 = vtanh.pop %v4842
      %v4955 = vtanh.pop %v4843
      %v4956 = vtanh.pop %v4844
      %v4957 = vtanh.pop %v4845
      %v4958 = vtanh.pop %v4846
      %v4959 = vtanh.pop %v4847
      %v4960 = vtanh.pop %v4848
      %v4961 = vtanh.pop %v4849
      %v4962 = vtanh.pop %v4850
      %v4963 = vtanh.pop %v4851
      %v4964 = vtanh.pop %v4852
      %v4965 = vtanh.pop %v4853
      %v4966 = vtanh.pop %v4854
      %v4967 = vtanh.pop %v4855
      %v4968 = vtanh.pop %v4856
      %v4969 = vmul.f32 %v4857, 0.5
      %v4970 = vmul.f32 %v4858, 0.5
      %v4971 = vmul.f32 %v4859, 0.5
      %v4972 = vmul.f32 %v4860, 0.5
      %v4973 = vmul.f32 %v4861, 0.5
      %v4974 = vmul.f32 %v4862, 0.5
      %v4975 = vmul.f32 %v4863, 0.5
      %v4976 = vmul.f32 %v4864, 0.5
      %v4977 = vmul.f32 %v4865, 0.5
      %v4978 = vmul.f32 %v4866, 0.5
      %v4979 = vmul.f32 %v4867, 0.5
      %v4980 = vmul.f32 %v4868, 0.5
      %v4981 = vmul.f32 %v4869, 0.5
      %v4982 = vmul.f32 %v4870, 0.5
      %v4983 = vmul.f32 %v4871, 0.5
      %v4984 = vmul.f32 %v4872, 0.5
      %v4985 = vmul.f32 %v4873, 0.5
      %v4986 = vmul.f32 %v4874, 0.5
      %v4987 = vmul.f32 %v4875, 0.5
      %v4988 = vmul.f32 %v4876, 0.5
      %v4989 = vmul.f32 %v4877, 0.5
      %v4990 = vmul.f32 %v4878, 0.5
      %v4991 = vmul.f32 %v4879, 0.5
      %v4992 = vmul.f32 %v4880, 0.5
      %v4993 = vmul.f32 %v4881, 0.5
      %v4994 = vmul.f32 %v4882, 0.5
      %v4995 = vmul.f32 %v4883, 0.5
      %v4996 = vmul.f32 %v4884, 0.5
      %v4997 = vmul.f32 %v4885, 0.5
      %v4998 = vmul.f32 %v4886, 0.5
      %v4999 = vmul.f32 %v4887, 0.5
      %v5000 = vmul.f32 %v4888, 0.5
      %v5001 = vmul.f32 %v4889, 0.5
      %v5002 = vmul.f32 %v4890, 0.5
      %v5003 = vmul.f32 %v4891, 0.5
      %v5004 = vmul.f32 %v4892, 0.5
      %v5005 = vmul.f32 %v4893, 0.5
      %v5006 = vmul.f32 %v4894, 0.5
      %v5007 = vmul.f32 %v4895, 0.5
      %v5008 = vmul.f32 %v4896, 0.5
      %v5009 = vmul.f32 %v4897, 0.5
      %v5010 = vmul.f32 %v4898, 0.5
      %v5011 = vmul.f32 %v4899, 0.5
      %v5012 = vmul.f32 %v4900, 0.5
      %v5013 = vmul.f32 %v4901, 0.5
      %v5014 = vmul.f32 %v4902, 0.5
      %v5015 = vmul.f32 %v4903, 0.5
      %v5016 = vmul.f32 %v4904, 0.5
      %v5017 = vmul.f32 %v4905, 0.5
      %v5018 = vmul.f32 %v4906, 0.5
      %v5019 = vmul.f32 %v4907, 0.5
      %v5020 = vmul.f32 %v4908, 0.5
      %v5021 = vmul.f32 %v4909, 0.5
      %v5022 = vmul.f32 %v4910, 0.5
      %v5023 = vmul.f32 %v4911, 0.5
      %v5024 = vmul.f32 %v4912, 0.5
      %v5025 = vmul.f32 %v4913, 0.5
      %v5026 = vmul.f32 %v4914, 0.5
      %v5027 = vmul.f32 %v4915, 0.5
      %v5028 = vmul.f32 %v4916, 0.5
      %v5029 = vmul.f32 %v4917, 0.5
      %v5030 = vmul.f32 %v4918, 0.5
      %v5031 = vmul.f32 %v4919, 0.5
      %v5032 = vmul.f32 %v4920, 0.5
      %v5033 = vmul.f32 %v4921, 0.5
      %v5034 = vmul.f32 %v4922, 0.5
      %v5035 = vmul.f32 %v4923, 0.5
      %v5036 = vmul.f32 %v4924, 0.5
      %v5037 = vmul.f32 %v4925, 0.5
      %v5038 = vmul.f32 %v4926, 0.5
      %v5039 = vmul.f32 %v4927, 0.5
      %v5040 = vmul.f32 %v4928, 0.5
      %v5041 = vmul.f32 %v4929, 0.5
      %v5042 = vmul.f32 %v4930, 0.5
      %v5043 = vmul.f32 %v4931, 0.5
      %v5044 = vmul.f32 %v4932, 0.5
      %v5045 = vmul.f32 %v4933, 0.5
      %v5046 = vmul.f32 %v4934, 0.5
      %v5047 = vmul.f32 %v4935, 0.5
      %v5048 = vmul.f32 %v4936, 0.5
      %v5049 = vmul.f32 %v4937, 0.5
      %v5050 = vmul.f32 %v4938, 0.5
      %v5051 = vmul.f32 %v4939, 0.5
      %v5052 = vmul.f32 %v4940, 0.5
      %v5053 = vmul.f32 %v4941, 0.5
      %v5054 = vmul.f32 %v4942, 0.5
      %v5055 = vmul.f32 %v4943, 0.5
      %v5056 = vmul.f32 %v4944, 0.5
      %v5057 = vmul.f32 %v4945, 0.5
      %v5058 = vmul.f32 %v4946, 0.5
      %v5059 = vmul.f32 %v4947, 0.5
      %v5060 = vmul.f32 %v4948, 0.5
      %v5061 = vmul.f32 %v4949, 0.5
      %v5062 = vmul.f32 %v4950, 0.5
      %v5063 = vmul.f32 %v4951, 0.5
      %v5064 = vmul.f32 %v4952, 0.5
      %v5065 = vmul.f32 %v4953, 0.5
      %v5066 = vmul.f32 %v4954, 0.5
      %v5067 = vmul.f32 %v4955, 0.5
      %v5068 = vmul.f32 %v4956, 0.5
      %v5069 = vmul.f32 %v4957, 0.5
      %v5070 = vmul.f32 %v4958, 0.5
      %v5071 = vmul.f32 %v4959, 0.5
      %v5072 = vmul.f32 %v4960, 0.5
      %v5073 = vmul.f32 %v4961, 0.5
      %v5074 = vmul.f32 %v4962, 0.5
      %v5075 = vmul.f32 %v4963, 0.5
      %v5076 = vmul.f32 %v4964, 0.5
      %v5077 = vmul.f32 %v4965, 0.5
      %v5078 = vmul.f32 %v4966, 0.5
      %v5079 = vmul.f32 %v4967, 0.5
      %v5080 = vmul.f32 %v4968, 0.5
      %v5081 = vadd.f32 %v4969, 0.5
      %v5082 = vadd.f32 %v4970, 0.5
      %v5083 = vadd.f32 %v4971, 0.5
      %v5084 = vadd.f32 %v4972, 0.5
      %v5085 = vadd.f32 %v4973, 0.5
      %v5086 = vadd.f32 %v4974, 0.5
      %v5087 = vadd.f32 %v4975, 0.5
      %v5088 = vadd.f32 %v4976, 0.5
      %v5089 = vadd.f32 %v4977, 0.5
      %v5090 = vadd.f32 %v4978, 0.5
      %v5091 = vadd.f32 %v4979, 0.5
      %v5092 = vadd.f32 %v4980, 0.5
      %v5093 = vadd.f32 %v4981, 0.5
      %v5094 = vadd.f32 %v4982, 0.5
      %v5095 = vadd.f32 %v4983, 0.5
      %v5096 = vadd.f32 %v4984, 0.5
      %v5097 = vadd.f32 %v4985, 0.5
      %v5098 = vadd.f32 %v4986, 0.5
      %v5099 = vadd.f32 %v4987, 0.5
      %v5100 = vadd.f32 %v4988, 0.5
      %v5101 = vadd.f32 %v4989, 0.5
      %v5102 = vadd.f32 %v4990, 0.5
      %v5103 = vadd.f32 %v4991, 0.5
      %v5104 = vadd.f32 %v4992, 0.5
      %v5105 = vadd.f32 %v4993, 0.5
      %v5106 = vadd.f32 %v4994, 0.5
      %v5107 = vadd.f32 %v4995, 0.5
      %v5108 = vadd.f32 %v4996, 0.5
      %v5109 = vadd.f32 %v4997, 0.5
      %v5110 = vadd.f32 %v4998, 0.5
      %v5111 = vadd.f32 %v4999, 0.5
      %v5112 = vadd.f32 %v5000, 0.5
      %v5113 = vadd.f32 %v5001, 0.5
      %v5114 = vadd.f32 %v5002, 0.5
      %v5115 = vadd.f32 %v5003, 0.5
      %v5116 = vadd.f32 %v5004, 0.5
      %v5117 = vadd.f32 %v5005, 0.5
      %v5118 = vadd.f32 %v5006, 0.5
      %v5119 = vadd.f32 %v5007, 0.5
      %v5120 = vadd.f32 %v5008, 0.5
      %v5121 = vadd.f32 %v5009, 0.5
      %v5122 = vadd.f32 %v5010, 0.5
      %v5123 = vadd.f32 %v5011, 0.5
      %v5124 = vadd.f32 %v5012, 0.5
      %v5125 = vadd.f32 %v5013, 0.5
      %v5126 = vadd.f32 %v5014, 0.5
      %v5127 = vadd.f32 %v5015, 0.5
      %v5128 = vadd.f32 %v5016, 0.5
      %v5129 = vadd.f32 %v5017, 0.5
      %v5130 = vadd.f32 %v5018, 0.5
      %v5131 = vadd.f32 %v5019, 0.5
      %v5132 = vadd.f32 %v5020, 0.5
      %v5133 = vadd.f32 %v5021, 0.5
      %v5134 = vadd.f32 %v5022, 0.5
      %v5135 = vadd.f32 %v5023, 0.5
      %v5136 = vadd.f32 %v5024, 0.5
      %v5137 = vadd.f32 %v5025, 0.5
      %v5138 = vadd.f32 %v5026, 0.5
      %v5139 = vadd.f32 %v5027, 0.5
      %v5140 = vadd.f32 %v5028, 0.5
      %v5141 = vadd.f32 %v5029, 0.5
      %v5142 = vadd.f32 %v5030, 0.5
      %v5143 = vadd.f32 %v5031, 0.5
      %v5144 = vadd.f32 %v5032, 0.5
      %v5145 = vadd.f32 %v5033, 0.5
      %v5146 = vadd.f32 %v5034, 0.5
      %v5147 = vadd.f32 %v5035, 0.5
      %v5148 = vadd.f32 %v5036, 0.5
      %v5149 = vadd.f32 %v5037, 0.5
      %v5150 = vadd.f32 %v5038, 0.5
      %v5151 = vadd.f32 %v5039, 0.5
      %v5152 = vadd.f32 %v5040, 0.5
      %v5153 = vadd.f32 %v5041, 0.5
      %v5154 = vadd.f32 %v5042, 0.5
      %v5155 = vadd.f32 %v5043, 0.5
      %v5156 = vadd.f32 %v5044, 0.5
      %v5157 = vadd.f32 %v5045, 0.5
      %v5158 = vadd.f32 %v5046, 0.5
      %v5159 = vadd.f32 %v5047, 0.5
      %v5160 = vadd.f32 %v5048, 0.5
      %v5161 = vadd.f32 %v5049, 0.5
      %v5162 = vadd.f32 %v5050, 0.5
      %v5163 = vadd.f32 %v5051, 0.5
      %v5164 = vadd.f32 %v5052, 0.5
      %v5165 = vadd.f32 %v5053, 0.5
      %v5166 = vadd.f32 %v5054, 0.5
      %v5167 = vadd.f32 %v5055, 0.5
      %v5168 = vadd.f32 %v5056, 0.5
      %v5169 = vadd.f32 %v5057, 0.5
      %v5170 = vadd.f32 %v5058, 0.5
      %v5171 = vadd.f32 %v5059, 0.5
      %v5172 = vadd.f32 %v5060, 0.5
      %v5173 = vadd.f32 %v5061, 0.5
      %v5174 = vadd.f32 %v5062, 0.5
      %v5175 = vadd.f32 %v5063, 0.5
      %v5176 = vadd.f32 %v5064, 0.5
      %v5177 = vadd.f32 %v5065, 0.5
      %v5178 = vadd.f32 %v5066, 0.5
      %v5179 = vadd.f32 %v5067, 0.5
      %v5180 = vadd.f32 %v5068, 0.5
      %v5181 = vadd.f32 %v5069, 0.5
      %v5182 = vadd.f32 %v5070, 0.5
      %v5183 = vadd.f32 %v5071, 0.5
      %v5184 = vadd.f32 %v5072, 0.5
      %v5185 = vadd.f32 %v5073, 0.5
      %v5186 = vadd.f32 %v5074, 0.5
      %v5187 = vadd.f32 %v5075, 0.5
      %v5188 = vadd.f32 %v5076, 0.5
      %v5189 = vadd.f32 %v5077, 0.5
      %v5190 = vadd.f32 %v5078, 0.5
      %v5191 = vadd.f32 %v5079, 0.5
      %v5192 = vadd.f32 %v5080, 0.5
      %v5193 = vpack.c.bf16 %v5082, %v5081
      %v5194 = vpack.c.bf16 %v5084, %v5083
      %v5195 = vpack.c.bf16 %v5086, %v5085
      %v5196 = vpack.c.bf16 %v5087, %v5087
      %v5197 = vpack.c.bf16 %v5089, %v5088
      %v5198 = vpack.c.bf16 %v5091, %v5090
      %v5199 = vpack.c.bf16 %v5093, %v5092
      %v5200 = vpack.c.bf16 %v5094, %v5094
      %v5201 = vpack.c.bf16 %v5096, %v5095
      %v5202 = vpack.c.bf16 %v5098, %v5097
      %v5203 = vpack.c.bf16 %v5100, %v5099
      %v5204 = vpack.c.bf16 %v5101, %v5101
      %v5205 = vpack.c.bf16 %v5103, %v5102
      %v5206 = vpack.c.bf16 %v5105, %v5104
      %v5207 = vpack.c.bf16 %v5107, %v5106
      %v5208 = vpack.c.bf16 %v5108, %v5108
      %v5209 = vpack.c.bf16 %v5110, %v5109
      %v5210 = vpack.c.bf16 %v5112, %v5111
      %v5211 = vpack.c.bf16 %v5114, %v5113
      %v5212 = vpack.c.bf16 %v5115, %v5115
      %v5213 = vpack.c.bf16 %v5117, %v5116
      %v5214 = vpack.c.bf16 %v5119, %v5118
      %v5215 = vpack.c.bf16 %v5121, %v5120
      %v5216 = vpack.c.bf16 %v5122, %v5122
      %v5217 = vpack.c.bf16 %v5124, %v5123
      %v5218 = vpack.c.bf16 %v5126, %v5125
      %v5219 = vpack.c.bf16 %v5128, %v5127
      %v5220 = vpack.c.bf16 %v5129, %v5129
      %v5221 = vpack.c.bf16 %v5131, %v5130
      %v5222 = vpack.c.bf16 %v5133, %v5132
      %v5223 = vpack.c.bf16 %v5135, %v5134
      %v5224 = vpack.c.bf16 %v5136, %v5136
      %v5225 = vpack.c.bf16 %v5138, %v5137
      %v5226 = vpack.c.bf16 %v5140, %v5139
      %v5227 = vpack.c.bf16 %v5142, %v5141
      %v5228 = vpack.c.bf16 %v5143, %v5143
      %v5229 = vpack.c.bf16 %v5145, %v5144
      %v5230 = vpack.c.bf16 %v5147, %v5146
      %v5231 = vpack.c.bf16 %v5149, %v5148
      %v5232 = vpack.c.bf16 %v5150, %v5150
      %v5233 = vpack.c.bf16 %v5152, %v5151
      %v5234 = vpack.c.bf16 %v5154, %v5153
      %v5235 = vpack.c.bf16 %v5156, %v5155
      %v5236 = vpack.c.bf16 %v5157, %v5157
      %v5237 = vpack.c.bf16 %v5159, %v5158
      %v5238 = vpack.c.bf16 %v5161, %v5160
      %v5239 = vpack.c.bf16 %v5163, %v5162
      %v5240 = vpack.c.bf16 %v5164, %v5164
      %v5241 = vpack.c.bf16 %v5166, %v5165
      %v5242 = vpack.c.bf16 %v5168, %v5167
      %v5243 = vpack.c.bf16 %v5170, %v5169
      %v5244 = vpack.c.bf16 %v5171, %v5171
      %v5245 = vpack.c.bf16 %v5173, %v5172
      %v5246 = vpack.c.bf16 %v5175, %v5174
      %v5247 = vpack.c.bf16 %v5177, %v5176
      %v5248 = vpack.c.bf16 %v5178, %v5178
      %v5249 = vpack.c.bf16 %v5180, %v5179
      %v5250 = vpack.c.bf16 %v5182, %v5181
      %v5251 = vpack.c.bf16 %v5184, %v5183
      %v5252 = vpack.c.bf16 %v5185, %v5185
      %v5253 = vpack.c.bf16 %v5187, %v5186
      %v5254 = vpack.c.bf16 %v5189, %v5188
      %v5255 = vpack.c.bf16 %v5191, %v5190
      %v5256 = vpack.c.bf16 %v5192, %v5192
      %5257 = vst [vmem:[%s507] sm:$0xff] %v5193
      %5258 = vst [vmem:[%s507 + $0x8] sm:$0xff] %v5194
      %5259 = vst [vmem:[%s507 + $0x10] sm:$0xff] %v5195
      %5260 = vst [vmem:[%s507 + $0x18] sm:$0xf] %v5196
      %5261 = vst [vmem:[%s507 + $0x1c] sm:$0xff] %v5197
      %5262 = vst [vmem:[%s507 + $0x24] sm:$0xff] %v5198
      %5263 = vst [vmem:[%s507 + $0x2c] sm:$0xff] %v5199
      %5264 = vst [vmem:[%s507 + $0x34] sm:$0xf] %v5200
      %5265 = vst [vmem:[%s507 + $0x38] sm:$0xff] %v5201
      %5266 = vst [vmem:[%s507 + $0x40] sm:$0xff] %v5202
      %5267 = vst [vmem:[%s507 + $0x48] sm:$0xff] %v5203
      %5268 = vst [vmem:[%s507 + $0x50] sm:$0xf] %v5204
      %5269 = vst [vmem:[%s507 + $0x54] sm:$0xff] %v5205
      %5270 = vst [vmem:[%s507 + $0x5c] sm:$0xff] %v5206
      %5271 = vst [vmem:[%s507 + $0x64] sm:$0xff] %v5207
      %5272 = vst [vmem:[%s507 + $0x6c] sm:$0xf] %v5208
      %5273 = vst [vmem:[%s507 + $0x70] sm:$0xff] %v5209
      %5274 = vst [vmem:[%s507 + $0x78] sm:$0xff] %v5210
      %5275 = vst [vmem:[%s507 + $0x80] sm:$0xff] %v5211
      %5276 = vst [vmem:[%s507 + $0x88] sm:$0xf] %v5212
      %5277 = vst [vmem:[%s507 + $0x8c] sm:$0xff] %v5213
      %5278 = vst [vmem:[%s507 + $0x94] sm:$0xff] %v5214
      %5279 = vst [vmem:[%s507 + $0x9c] sm:$0xff] %v5215
      %5280 = vst [vmem:[%s507 + $0xa4] sm:$0xf] %v5216
      %5281 = vst [vmem:[%s507 + $0xa8] sm:$0xff] %v5217
      %5282 = vst [vmem:[%s507 + $0xb0] sm:$0xff] %v5218
      %5283 = vst [vmem:[%s507 + $0xb8] sm:$0xff] %v5219
      %5284 = vst [vmem:[%s507 + $0xc0] sm:$0xf] %v5220
      %5285 = vst [vmem:[%s507 + $0xc4] sm:$0xff] %v5221
      %5286 = vst [vmem:[%s507 + $0xcc] sm:$0xff] %v5222
      %5287 = vst [vmem:[%s507 + $0xd4] sm:$0xff] %v5223
      %5288 = vst [vmem:[%s507 + $0xdc] sm:$0xf] %v5224
      %5289 = vst [vmem:[%s507 + $0xe0] sm:$0xff] %v5225
      %5290 = vst [vmem:[%s507 + $0xe8] sm:$0xff] %v5226
      %5291 = vst [vmem:[%s507 + $0xf0] sm:$0xff] %v5227
      %5292 = vst [vmem:[%s507 + $0xf8] sm:$0xf] %v5228
      %5293 = vst [vmem:[%s507 + $0xfc] sm:$0xff] %v5229
      %5294 = vst [vmem:[%s507 + $0x104] sm:$0xff] %v5230
      %5295 = vst [vmem:[%s507 + $0x10c] sm:$0xff] %v5231
      %5296 = vst [vmem:[%s507 + $0x114] sm:$0xf] %v5232
      %5297 = vst [vmem:[%s507 + $0x118] sm:$0xff] %v5233
      %5298 = vst [vmem:[%s507 + $0x120] sm:$0xff] %v5234
      %5299 = vst [vmem:[%s507 + $0x128] sm:$0xff] %v5235
      %5300 = vst [vmem:[%s507 + $0x130] sm:$0xf] %v5236
      %5301 = vst [vmem:[%s507 + $0x134] sm:$0xff] %v5237
      %5302 = vst [vmem:[%s507 + $0x13c] sm:$0xff] %v5238
      %5303 = vst [vmem:[%s507 + $0x144] sm:$0xff] %v5239
      %5304 = vst [vmem:[%s507 + $0x14c] sm:$0xf] %v5240
      %5305 = vst [vmem:[%s507 + $0x150] sm:$0xff] %v5241
      %5306 = vst [vmem:[%s507 + $0x158] sm:$0xff] %v5242
      %5307 = vst [vmem:[%s507 + $0x160] sm:$0xff] %v5243
      %5308 = vst [vmem:[%s507 + $0x168] sm:$0xf] %v5244
      %5309 = vst [vmem:[%s507 + $0x16c] sm:$0xff] %v5245
      %5310 = vst [vmem:[%s507 + $0x174] sm:$0xff] %v5246
      %5311 = vst [vmem:[%s507 + $0x17c] sm:$0xff] %v5247
      %5312 = vst [vmem:[%s507 + $0x184] sm:$0xf] %v5248
      %5313 = vst [vmem:[%s507 + $0x188] sm:$0xff] %v5249
      %5314 = vst [vmem:[%s507 + $0x190] sm:$0xff] %v5250
      %5315 = vst [vmem:[%s507 + $0x198] sm:$0xff] %v5251
      %5316 = vst [vmem:[%s507 + $0x1a0] sm:$0xf] %v5252
      %5317 = vst [vmem:[%s507 + $0x1a4] sm:$0xff] %v5253
      %5318 = vst [vmem:[%s507 + $0x1ac] sm:$0xff] %v5254
      %5319 = vst [vmem:[%s507 + $0x1b4] sm:$0xff] %v5255
      %5320 = vst [vmem:[%s507 + $0x1bc] sm:$0xf] %v5256
      %s5321 = smul.u32 16, %s32
      %p5322 = scmp.lt.s32.totalorder %s5321, 31
      %s5323 = scalar_select %p5322, %s5321, 31
      %s5324 = smul.addr %s5323, 7
      %s5325 = smul.addr %s5324, 4
      %s5326 = scalar_lea.vmem %s16, %s5325
      // Predicated region
      $region81: #{autoencoder_forward.2} parent=79 // pred_check
        %p5327 = pneg %p370
      $region82: #{autoencoder_forward.2} parent=79 // pred_check_branch
        %5329 = sbr.rel (%p5327) target = $region84
      $region83: #{autoencoder_forward.2} parent=79 // pred_region
        %s5330 = smul.u32 16, %s32
      $region84: #{autoencoder_forward.2} parent=79 // pred_fallthru
        _
    $region80: #{autoencoder_forward.2} parent=5 // pred_fallthru
      _
    %p5331 = scmp.le.s32.totalorder 2, %s27
    // Predicated region
    $region85: #{autoencoder_forward.2} parent=5 // pred_check
      %p5332 = pneg %p5331
    $region86: #{autoencoder_forward.2} parent=5 // pred_check_branch
      %5334 = sbr.rel (%p5332) target = $region88
    $region87: #{autoencoder_forward.2} parent=5 // pred_region
      %s5335 = ssub.s32 %s27, 2
      // Predicated region
      $region89: #{autoencoder_forward.2} parent=87 // pred_check
        %p5336 = pneg %p376
      $region90: #{autoencoder_forward.2} parent=87 // pred_check_branch
        %5338 = sbr.rel (%p5336) target = $region92
      $region91: #{autoencoder_forward.2} parent=87 // pred_region
        %s5339 = smul.u32 16, %s33
        %p5340 = scmp.lt.s32.totalorder %s5339, 31
        %s5341 = scalar_select %p5340, %s5339, 31
        %s5342 = smul.addr %s5341, 7
        %s5343 = smul.addr %s5342, 4
        %s5344 = scalar_lea.vmem %s16, %s5343
      $region92: #{autoencoder_forward.2} parent=87 // pred_fallthru
        _
    $region88: #{autoencoder_forward.2} parent=5 // pred_fallthru
      _
  $region6: #{autoencoder_forward.2} parent=0 // loop_footer
    %s31 = sadd.s32 1, %s27
  $region7: #{autoencoder_forward.2} parent=0 // loop_footer_branch
    %26 = sbr.rel target = $region3
  $region8: #{autoencoder_forward.2} parent=0 // loop_exit
    _

</llo_original>
